<compile_context>
chip_gen: v6e
topology: v6e:2x2x1
jax: 0.10.0
libtpu: 0.0.40
codegen_flags: <defaults>
</compile_context>

<pallas_src>
import functools
import numpy as np

import jax
import jax.numpy as jnp
from jax.experimental import pallas as pl

K = 64       # RWPE dimension (same constant as the reference script)
FP = 128     # lane-padded feature width (one full vreg lane dim)
NEG_BIG = -1e9


# ---------------------------------------------------------------------------
# Kernel builder
# ---------------------------------------------------------------------------
def _make_fused_kernel(layout, *, num_heads, head_dim, hidden, compute_dtype):
    """Whole-model forward (all layers + fc + log_softmax) in one kernel."""
    scale = 1.0 / float(head_dim) ** 0.5
    inv_heads = 1.0 / float(num_heads)
    f_valid = float(hidden)
    cdt = compute_dtype

    def kernel(x_ref, adj_ref, wqkv_ref, wbig_ref, small_ref, out_ref):
        x = x_ref[...]                       # (N, FP) f32, padded lanes are 0
        small = small_ref[...]               # (Rs, FP) f32 packed small params

        # Hoisted once: adjacency mask (shared by every layer and every head)
        # and the valid-lane mask used by the masked LayerNorm.
        no_edge = adj_ref[...].astype(jnp.float32) == 0.0       # (N, N) bool
        lane = jax.lax.broadcasted_iota(jnp.int32, (1, FP), 1)
        valid = (lane < hidden).astype(jnp.float32)             # (1, FP)

        def row(i):                          # full (1, FP) slab row
            return small[i:i + 1]

        def row_h(i):                        # (1, hidden) slice of a slab row
            return small[i:i + 1, :hidden]

        def layer_norm(v, g_row, b_row):
            # Two-pass LayerNorm over the `hidden` valid lanes of a padded
            # (N, FP) block; masking keeps padded lanes exactly 0.
            vm = v * valid
            mean = jnp.sum(vm, axis=-1, keepdims=True) / f_valid
            xc = (vm - mean) * valid
            var = jnp.sum(xc * xc, axis=-1, keepdims=True) / f_valid
            return xc * jax.lax.rsqrt(var + 1e-5) * g_row + b_row

        def mm(a, b):                        # bf16/f32 matmul, f32 accumulate
            return jnp.dot(a.astype(cdt), b.astype(cdt),
                           preferred_element_type=jnp.float32)

        for lay in layout['layers']:
            r = lay['rows']

            # ---- optional input projection --------------------------------
            if lay['has_proj']:
                wp = wbig_ref[lay['wp'][0]:lay['wp'][1], :]
                x = mm(x, wp) + row(r['bp'])

            # ---- fused QKV: ONE lane-dense (FP, 3*hidden) matmul -----------
            wqkv = wqkv_ref[lay['wqkv'][0]:lay['wqkv'][1], :]
            qkv = mm(x, wqkv)                                   # (N, 3*hidden)
            q = qkv[:, 0 * hidden:1 * hidden] + row_h(r['bq'])
            k = qkv[:, 1 * hidden:2 * hidden] + row_h(r['bk'])
            v = qkv[:, 2 * hidden:3 * hidden] + row_h(r['bv'])

            # ---- per-head scores stacked -> ONE softmax over the head axis -
            s = jnp.stack(
                [jnp.einsum(
                    'nd,md->nm',
                    q[:, h * head_dim:(h + 1) * head_dim].astype(cdt),
                    k[:, h * head_dim:(h + 1) * head_dim].astype(cdt),
                    preferred_element_type=jnp.float32)
                 for h in range(num_heads)], axis=0) * scale     # (H, N, N)
            m = jnp.max(s, axis=0, keepdims=True)
            e = jnp.exp(s - m)
            w = e / jnp.sum(e, axis=0, keepdims=True)
            # masked_fill(-1e9) on ALL heads followed by the head-softmax is
            # exactly uniform 1/H for non-edges -> blend after the softmax.
            # (Only valid because the mask is shared across heads.)
            w = jnp.where(no_edge[None, :, :], inv_heads, w)

            # ---- attention values + ONE dense (hidden, FP) output proj -----
            z = jnp.concatenate(
                [mm(w[h], v[:, h * head_dim:(h + 1) * head_dim])
                 for h in range(num_heads)], axis=1)             # (N, hidden)
            wo = wbig_ref[lay['wo'][0]:lay['wo'][1], :]
            attn = mm(z, wo) + row(r['bo'])
            x = layer_norm(x + attn, row(r['g1']), row(r['be1']))

            # ---- FFN --------------------------------------------------------
            w1 = wbig_ref[lay['w1'][0]:lay['w1'][1], :]
            w2 = wbig_ref[lay['w2'][0]:lay['w2'][1], :]
            h1 = jnp.maximum(mm(x, w1) + row(r['b1']), 0.0)
            ff = mm(h1, w2) + row(r['b2'])
            x = layer_norm(x + ff, row(r['g2']), row(r['be2']))

        # ---- final fc + log_softmax (padded class cols carry a -1e9 bias) --
        fcw = wbig_ref[layout['fc_w'][0]:layout['fc_w'][1], :]
        logits = mm(x, fcw) + row(layout['fc_b'])
        mx = jnp.max(logits, axis=-1, keepdims=True)
        zc = logits - mx
        lse = jnp.log(jnp.sum(jnp.exp(zc), axis=-1, keepdims=True))
        out_ref[...] = zc - lse              # lane-dense (N, FP) store

    return kernel


# ---------------------------------------------------------------------------
# Host-side glue: weight packing into slabs + the single pallas_call
# ---------------------------------------------------------------------------
def _pad2(a, rows, cols, value=0.0):
    return jnp.pad(a, ((0, rows - a.shape[0]), (0, cols - a.shape[1])),
                   constant_values=value)


def _pack_params(params, *, hidden, compute_dtype):
    """Pack all parameters into three slabs (and return the static layout):
         wqkv_all : (L*FP, 3*hidden)   fused Q|K|V weights, one block per layer
         wbig     : (Rb, FP)           wp / wo / w1 / w2 / fc_w, row-stacked
         small    : (Rs, FP)  f32      every bias / gamma / beta / fc_b row
    """
    big_blocks, wqkv_blocks, small_rows = [], [], []
    layout = {'layers': []}

    def add_big(w, rows):
        start = sum(b.shape[0] for b in big_blocks)
        big_blocks.append(_pad2(w, rows, FP).astype(compute_dtype))
        return (start, start + rows)

    def add_small(b, pad_value=0.0):
        idx = len(small_rows)
        small_rows.append(
            _pad2(jnp.asarray(b, jnp.float32).reshape(1, -1), 1, FP,
                  value=pad_value))
        return idx

    for lp in params['layers']:
        lay = {'has_proj': 'wp' in lp, 'rows': {}}
        r = lay['rows']
        if lay['has_proj']:
            lay['wp'] = add_big(lp['wp'], FP)
            r['bp'] = add_small(lp['bp'])
        # fused QKV weight block for this layer: (FP, 3*hidden), zero rows pad
        wqkv = jnp.concatenate([lp['wq'], lp['wk'], lp['wv']], axis=1)
        start = sum(b.shape[0] for b in wqkv_blocks)
        wqkv_blocks.append(
            jnp.pad(wqkv, ((0, FP - wqkv.shape[0]), (0, 0))).astype(compute_dtype))
        lay['wqkv'] = (start, start + FP)
        r['bq'] = add_small(lp['bq'])
        r['bk'] = add_small(lp['bk'])
        r['bv'] = add_small(lp['bv'])
        lay['wo'] = add_big(lp['wo'], hidden)      # (hidden, FP)
        r['bo'] = add_small(lp['bo'])
        lay['w1'] = add_big(lp['w1'], FP)          # (FP, FP)
        r['b1'] = add_small(lp['b1'])
        lay['w2'] = add_big(lp['w2'], FP)          # (FP, FP)
        r['b2'] = add_small(lp['b2'])
        r['g1'] = add_small(lp['g1'])
        r['be1'] = add_small(lp['be1'])
        r['g2'] = add_small(lp['g2'])
        r['be2'] = add_small(lp['be2'])
        layout['layers'].append(lay)

    layout['fc_w'] = add_big(params['fc_w'], FP)
    layout['fc_b'] = add_small(params['fc_b'], pad_value=NEG_BIG)

    wqkv_all = jnp.concatenate(wqkv_blocks, axis=0)
    wbig = jnp.concatenate(big_blocks, axis=0)
    small = jnp.concatenate(small_rows, axis=0)
    return layout, wqkv_all, wbig, small


def graph_transformer_forward(params, x, pe, adj, *, num_heads, hidden,
                              num_classes, compute_dtype='float32'):
    """Whole GraphTransformer forward as one fused pallas_call (5 inputs)."""
    n = x.shape[0]
    head_dim = hidden // num_heads
    ffn = 2 * hidden
    assert num_heads * head_dim == hidden
    assert hidden <= FP and ffn <= FP and num_classes <= FP
    cdt = jnp.bfloat16 if compute_dtype == 'bfloat16' else jnp.float32

    # node features ‖ RWPE, zero-padded to a lane-dense (N, 128) block
    h0 = jnp.concatenate([x, pe], axis=1)
    assert h0.shape[1] <= FP
    h0 = jnp.pad(h0, ((0, 0), (0, FP - h0.shape[1])))

    layout, wqkv_all, wbig, small = _pack_params(params, hidden=hidden,
                                                 compute_dtype=cdt)
    kernel = _make_fused_kernel(layout, num_heads=num_heads,
                                head_dim=head_dim, hidden=hidden,
                                compute_dtype=cdt)

    # Single invocation, no grid: each operand is one whole-array VMEM block,
    # so weights are resident exactly once (no double-buffering) and the
    # launch consists of 5 DMAs total.
    out = pl.pallas_call(
        kernel,
        out_shape=jax.ShapeDtypeStruct((n, FP), jnp.float32),
    )(h0, adj.astype(jnp.int8), wqkv_all, wbig, small)
    return out[:, :num_classes]


@functools.partial(jax.jit, static_argnames=('num_heads', 'hidden',
                                              'num_classes', 'compute_dtype'))
def forward(params, x, pe, adj, *, num_heads, hidden, num_classes,
            compute_dtype='float32'):
    return graph_transformer_forward(params, x, pe, adj, num_heads=num_heads,
                                     hidden=hidden, num_classes=num_classes,
                                     compute_dtype=compute_dtype)


# ---------------------------------------------------------------------------
# Parameter init (deterministic, synthetic) -- logical (unpadded) layout
# ---------------------------------------------------------------------------
def _linear(key, fin, fout):
    kw, kb = jax.random.split(key)
    w = jax.random.normal(kw, (fin, fout), jnp.float32) / np.sqrt(fin)
    b = jax.random.normal(kb, (1, fout), jnp.float32) * 0.1
    return w, b


def init_layer_params(key, fin, fout):
    keys = jax.random.split(key, 7)
    p = {}
    if fin != fout:
        p['wp'], p['bp'] = _linear(keys[0], fin, fout)
    p['wq'], p['bq'] = _linear(keys[1], fout, fout)
    p['wk'], p['bk'] = _linear(keys[2], fout, fout)
    p['wv'], p['bv'] = _linear(keys[3], fout, fout)
    p['wo'], p['bo'] = _linear(keys[4], fout, fout)
    p['w1'], p['b1'] = _linear(keys[5], fout, fout * 2)
    p['w2'], p['b2'] = _linear(keys[6], fout * 2, fout)
    p['g1'] = jnp.ones((1, fout), jnp.float32)
    p['be1'] = jnp.zeros((1, fout), jnp.float32)
    p['g2'] = jnp.ones((1, fout), jnp.float32)
    p['be2'] = jnp.zeros((1, fout), jnp.float32)
    return p


# ---------------------------------------------------------------------------
# Pure-JAX reference (mirrors PyTorch semantics exactly) for validation
# ---------------------------------------------------------------------------
def _ref_layer_norm(x, gamma, beta, eps=1e-5):
    mean = jnp.mean(x, axis=-1, keepdims=True)
    var = jnp.mean((x - mean) ** 2, axis=-1, keepdims=True)
    return (x - mean) * jax.lax.rsqrt(var + eps) * gamma + beta


def ref_layer(x, adj, p, num_heads):
    if 'wp' in p:
        x = x @ p['wp'] + p['bp']
    n, f = x.shape
    dh = f // num_heads
    q = (x @ p['wq'] + p['bq']).reshape(n, num_heads, dh)
    k = (x @ p['wk'] + p['bk']).reshape(n, num_heads, dh)
    v = (x @ p['wv'] + p['bv']).reshape(n, num_heads, dh)
    scores = jnp.einsum('nhd,mhd->nhm', q, k) / dh ** 0.5
    scores = jnp.where(adj[:, None, :] == 0.0, -1000000000.0, scores)
    w = jax.nn.softmax(scores, axis=1)        # softmax over heads, as in torch
    attn = jnp.einsum('nhm,mhd->nhd', w, v).reshape(n, f)
    attn = attn @ p['wo'] + p['bo']
    x = _ref_layer_norm(x + attn, p['g1'], p['be1'])
    ff = jnp.maximum(x @ p['w1'] + p['b1'], 0.0) @ p['w2'] + p['b2']
    x = _ref_layer_norm(x + ff, p['g2'], p['be2'])
    return x


def ref_model(x, pe, adj, layers, fc_w, fc_b, num_heads):
    h = jnp.concatenate([x, pe], axis=1)
    for p in layers:
        h = ref_layer(h, adj, p, num_heads)
    logits = h @ fc_w + fc_b
    return jax.nn.log_softmax(logits, axis=1)


# ---------------------------------------------------------------------------
# Main
# ---------------------------------------------------------------------------
if __name__ == "__main__":
    N = 32            # nodes
    E = 96            # edges
    in_features = 16
    hidden = 64
    num_classes = 8
    num_heads = 4
    num_layers = 2

    key = jax.random.PRNGKey(0)
    k_x, k_pe, k_src, k_dst, k_par = jax.random.split(key, 5)

    x = jax.random.normal(k_x, (N, in_features), jnp.float32)
    pe = jax.random.normal(k_pe, (N, K), jnp.float32)
    src = jax.random.randint(k_src, (E,), 0, N)
    dst = jax.random.randint(k_dst, (E,), 0, N)

    # Dense adjacency (plain-JAX scatter glue, same as torch's adj[...] = 1);
    # int8 for the kernel, f32 only for the pure-JAX reference.
    adj_i8 = jnp.zeros((N, N), jnp.int8).at[src, dst].set(1)
    adj_f32 = adj_i8.astype(jnp.float32)

    # Parameters (logical / unpadded)
    layer_keys = jax.random.split(k_par, num_layers + 1)
    layers = []
    for i in range(num_layers):
        fin = in_features + K if i == 0 else hidden
        layers.append(init_layer_params(layer_keys[i], fin, hidden))
    fc_w, fc_b = _linear(layer_keys[-1], hidden, num_classes)
    params = {'layers': layers, 'fc_w': fc_w, 'fc_b': fc_b}

    # Pure-JAX reference
    ref = jax.block_until_ready(
        ref_model(x, pe, adj_f32, layers, fc_w, fc_b, num_heads))

    # Fused Pallas forward, f32 matmuls -- validated strictly
    out_f32 = jax.block_until_ready(
        forward(params, x, pe, adj_i8, num_heads=num_heads, hidden=hidden,
                num_classes=num_classes, compute_dtype='float32'))
    np.testing.assert_allclose(np.asarray(out_f32), np.asarray(ref),
                               rtol=1e-2, atol=1e-2)

    # bf16-matmul path (MXU-native on v6e/v7x, halved weight DMA); LayerNorm /
    # softmax stay f32, so only matmul operands are quantized.
    out_bf16 = jax.block_until_ready(
        forward(params, x, pe, adj_i8, num_heads=num_heads, hidden=hidden,
                num_classes=num_classes, compute_dtype='bfloat16'))
    np.testing.assert_allclose(np.asarray(out_bf16), np.asarray(ref),
                               rtol=5e-2, atol=5e-2)

    print("KERNEL_OK")
</pallas_src>

<mosaic_0001>
module attributes {stable_mosaic.version = 11 : i64} {
  func.func @kernel(%arg0: memref<32x128xf32, #tpu.memory_space<vmem>>, %arg1: memref<32x32xi8, #tpu.memory_space<vmem>>, %arg2: memref<256x192xf32, #tpu.memory_space<vmem>>, %arg3: memref<896x128xf32, #tpu.memory_space<vmem>>, %arg4: memref<22x128xf32, #tpu.memory_space<vmem>>, %arg5: memref<32x128xf32, #tpu.memory_space<vmem>>) attributes {dimension_semantics = [], scalar_prefetch = 0 : i64, scratch_operands = 0 : i64, tpu.core_type = #tpu.core_type<tc>} {
    %c0 = arith.constant 0 : index
    %c0_0 = arith.constant 0 : index
    %0 = vector.load %arg0[%c0, %c0_0] : memref<32x128xf32, #tpu.memory_space<vmem>>, vector<32x128xf32>
    %c0_1 = arith.constant 0 : index
    %c0_2 = arith.constant 0 : index
    %1 = vector.load %arg4[%c0_1, %c0_2] : memref<22x128xf32, #tpu.memory_space<vmem>>, vector<22x128xf32>
    %c0_3 = arith.constant 0 : index
    %c0_4 = arith.constant 0 : index
    %2 = vector.load %arg1[%c0_3, %c0_4] : memref<32x32xi8, #tpu.memory_space<vmem>>, vector<32x32xi8>
    %3 = arith.sitofp %2 : vector<32x32xi8> to vector<32x32xf32>
    %cst = arith.constant 0.000000e+00 : f32
    %4 = vector.broadcast %cst : f32 to vector<32x32xf32>
    %5 = arith.cmpf oeq, %3, %4 : vector<32x32xf32>
    %6 = tpu.iota {dimensions = array<i32: 1>} : vector<1x128xi32>
    %c64_i32 = arith.constant 64 : i32
    %7 = vector.broadcast %c64_i32 : i32 to vector<1x128xi32>
    %8 = arith.cmpi slt, %6, %7 : vector<1x128xi32>
    %9 = arith.extui %8 : vector<1x128xi1> to vector<1x128xi32>
    %10 = arith.sitofp %9 : vector<1x128xi32> to vector<1x128xf32>
    %c0_5 = arith.constant 0 : index
    %c0_6 = arith.constant 0 : index
    %11 = vector.load %arg3[%c0_5, %c0_6] : memref<896x128xf32, #tpu.memory_space<vmem>>, vector<128x128xf32>
    %cst_7 = arith.constant dense<0.000000e+00> : vector<32x128xf32>
    %12 = tpu.matmul %0, %11, %cst_7 {dimension_numbers = #tpu.dot_dimension_numbers<[1], [0], [0], [1], [0, 0, 1, 1], [], []>} : vector<32x128xf32>, vector<128x128xf32>, vector<32x128xf32> -> vector<32x128xf32>
    %13 = vector.extract_strided_slice %1 {offsets = [0, 0], sizes = [1, 128], strides = [1, 1]} : vector<22x128xf32> to vector<1x128xf32>
    %14 = vector.broadcast %13 : vector<1x128xf32> to vector<32x128xf32>
    %15 = arith.addf %12, %14 : vector<32x128xf32>
    %c0_8 = arith.constant 0 : index
    %c0_9 = arith.constant 0 : index
    %16 = vector.load %arg2[%c0_8, %c0_9] : memref<256x192xf32, #tpu.memory_space<vmem>>, vector<128x192xf32>
    %cst_10 = arith.constant dense<0.000000e+00> : vector<32x192xf32>
    %17 = tpu.matmul %15, %16, %cst_10 {dimension_numbers = #tpu.dot_dimension_numbers<[1], [0], [0], [1], [0, 0, 1, 1], [], []>} : vector<32x128xf32>, vector<128x192xf32>, vector<32x192xf32> -> vector<32x192xf32>
    %18 = vector.extract_strided_slice %17 {offsets = [0, 0], sizes = [32, 64], strides = [1, 1]} : vector<32x192xf32> to vector<32x64xf32>
    %19 = vector.extract_strided_slice %1 {offsets = [1, 0], sizes = [1, 64], strides = [1, 1]} : vector<22x128xf32> to vector<1x64xf32>
    %20 = vector.broadcast %19 : vector<1x64xf32> to vector<32x64xf32>
    %21 = arith.addf %18, %20 : vector<32x64xf32>
    %22 = vector.extract_strided_slice %17 {offsets = [0, 64], sizes = [32, 64], strides = [1, 1]} : vector<32x192xf32> to vector<32x64xf32>
    %23 = vector.extract_strided_slice %1 {offsets = [2, 0], sizes = [1, 64], strides = [1, 1]} : vector<22x128xf32> to vector<1x64xf32>
    %24 = vector.broadcast %23 : vector<1x64xf32> to vector<32x64xf32>
    %25 = arith.addf %22, %24 : vector<32x64xf32>
    %26 = vector.extract_strided_slice %17 {offsets = [0, 128], sizes = [32, 64], strides = [1, 1]} : vector<32x192xf32> to vector<32x64xf32>
    %27 = vector.extract_strided_slice %1 {offsets = [3, 0], sizes = [1, 64], strides = [1, 1]} : vector<22x128xf32> to vector<1x64xf32>
    %28 = vector.broadcast %27 : vector<1x64xf32> to vector<32x64xf32>
    %29 = arith.addf %26, %28 : vector<32x64xf32>
    %30 = vector.extract_strided_slice %21 {offsets = [0, 0], sizes = [32, 16], strides = [1, 1]} : vector<32x64xf32> to vector<32x16xf32>
    %31 = vector.extract_strided_slice %25 {offsets = [0, 0], sizes = [32, 16], strides = [1, 1]} : vector<32x64xf32> to vector<32x16xf32>
    "tpu.trace_start"() <{level = 10 : i32, message = "nd,md->nm"}> : () -> ()
    %cst_11 = arith.constant dense<0.000000e+00> : vector<32x32xf32>
    %32 = tpu.matmul %30, %31, %cst_11 {dimension_numbers = #tpu.dot_dimension_numbers<[1], [1], [0], [0], [0, 0, 1, 0], [], []>} : vector<32x16xf32>, vector<32x16xf32>, vector<32x32xf32> -> vector<32x32xf32>
    "tpu.trace_stop"() : () -> ()
    %33 = vector.extract_strided_slice %21 {offsets = [0, 16], sizes = [32, 16], strides = [1, 1]} : vector<32x64xf32> to vector<32x16xf32>
    %34 = vector.extract_strided_slice %25 {offsets = [0, 16], sizes = [32, 16], strides = [1, 1]} : vector<32x64xf32> to vector<32x16xf32>
    "tpu.trace_start"() <{level = 10 : i32, message = "nd,md->nm"}> : () -> ()
    %cst_12 = arith.constant dense<0.000000e+00> : vector<32x32xf32>
    %35 = tpu.matmul %33, %34, %cst_12 {dimension_numbers = #tpu.dot_dimension_numbers<[1], [1], [0], [0], [0, 0, 1, 0], [], []>} : vector<32x16xf32>, vector<32x16xf32>, vector<32x32xf32> -> vector<32x32xf32>
    "tpu.trace_stop"() : () -> ()
    %36 = vector.extract_strided_slice %21 {offsets = [0, 32], sizes = [32, 16], strides = [1, 1]} : vector<32x64xf32> to vector<32x16xf32>
    %37 = vector.extract_strided_slice %25 {offsets = [0, 32], sizes = [32, 16], strides = [1, 1]} : vector<32x64xf32> to vector<32x16xf32>
    "tpu.trace_start"() <{level = 10 : i32, message = "nd,md->nm"}> : () -> ()
    %cst_13 = arith.constant dense<0.000000e+00> : vector<32x32xf32>
    %38 = tpu.matmul %36, %37, %cst_13 {dimension_numbers = #tpu.dot_dimension_numbers<[1], [1], [0], [0], [0, 0, 1, 0], [], []>} : vector<32x16xf32>, vector<32x16xf32>, vector<32x32xf32> -> vector<32x32xf32>
    "tpu.trace_stop"() : () -> ()
    %39 = vector.extract_strided_slice %21 {offsets = [0, 48], sizes = [32, 16], strides = [1, 1]} : vector<32x64xf32> to vector<32x16xf32>
    %40 = vector.extract_strided_slice %25 {offsets = [0, 48], sizes = [32, 16], strides = [1, 1]} : vector<32x64xf32> to vector<32x16xf32>
    "tpu.trace_start"() <{level = 10 : i32, message = "nd,md->nm"}> : () -> ()
    %cst_14 = arith.constant dense<0.000000e+00> : vector<32x32xf32>
    %41 = tpu.matmul %39, %40, %cst_14 {dimension_numbers = #tpu.dot_dimension_numbers<[1], [1], [0], [0], [0, 0, 1, 0], [], []>} : vector<32x16xf32>, vector<32x16xf32>, vector<32x32xf32> -> vector<32x32xf32>
    "tpu.trace_stop"() : () -> ()
    %42 = vector.shape_cast %32 : vector<32x32xf32> to vector<1x32x32xf32>
    %43 = vector.shape_cast %35 : vector<32x32xf32> to vector<1x32x32xf32>
    %44 = vector.shape_cast %38 : vector<32x32xf32> to vector<1x32x32xf32>
    %45 = vector.shape_cast %41 : vector<32x32xf32> to vector<1x32x32xf32>
    %46 = tpu.concatenate %42, %43, %44, %45 in 0 : vector<1x32x32xf32>, vector<1x32x32xf32>, vector<1x32x32xf32>, vector<1x32x32xf32> -> vector<4x32x32xf32>
    %cst_15 = arith.constant 2.500000e-01 : f32
    %47 = vector.broadcast %cst_15 : f32 to vector<4x32x32xf32>
    %48 = arith.mulf %46, %47 : vector<4x32x32xf32>
    %cst_16 = arith.constant dense<0xFF800000> : vector<32x32xf32>
    %49 = vector.multi_reduction <maximumf>, %48, %cst_16 [0] : vector<4x32x32xf32> to vector<32x32xf32>
    %50 = vector.shape_cast %49 : vector<32x32xf32> to vector<1x32x32xf32>
    %51 = vector.broadcast %50 : vector<1x32x32xf32> to vector<4x32x32xf32>
    %52 = arith.subf %48, %51 : vector<4x32x32xf32>
    %53 = math.exp %52 : vector<4x32x32xf32>
    %cst_17 = arith.constant dense<0.000000e+00> : vector<32x32xf32>
    %54 = vector.multi_reduction <add>, %53, %cst_17 [0] : vector<4x32x32xf32> to vector<32x32xf32>
    %55 = vector.shape_cast %54 : vector<32x32xf32> to vector<1x32x32xf32>
    %56 = vector.broadcast %55 : vector<1x32x32xf32> to vector<4x32x32xf32>
    %57 = arith.divf %53, %56 : vector<4x32x32xf32>
    %58 = vector.shape_cast %5 : vector<32x32xi1> to vector<1x32x32xi1>
    %cst_18 = arith.constant 2.500000e-01 : f32
    %59 = vector.shape_cast %58 : vector<1x32x32xi1> to vector<1x32x32xi1>
    %60 = vector.broadcast %59 : vector<1x32x32xi1> to vector<4x32x32xi1>
    %61 = vector.broadcast %cst_18 : f32 to vector<4x32x32xf32>
    %62 = arith.select %60, %61, %57 : vector<4x32x32xi1>, vector<4x32x32xf32>
    %63 = vector.extract_strided_slice %62 {offsets = [0, 0, 0], sizes = [1, 32, 32], strides = [1, 1, 1]} : vector<4x32x32xf32> to vector<1x32x32xf32>
    %64 = vector.shape_cast %63 : vector<1x32x32xf32> to vector<32x32xf32>
    %65 = vector.extract_strided_slice %29 {offsets = [0, 0], sizes = [32, 16], strides = [1, 1]} : vector<32x64xf32> to vector<32x16xf32>
    %cst_19 = arith.constant dense<0.000000e+00> : vector<32x16xf32>
    %66 = tpu.matmul %64, %65, %cst_19 {dimension_numbers = #tpu.dot_dimension_numbers<[1], [0], [0], [1], [0, 0, 1, 1], [], []>} : vector<32x32xf32>, vector<32x16xf32>, vector<32x16xf32> -> vector<32x16xf32>
    %67 = vector.extract_strided_slice %62 {offsets = [1, 0, 0], sizes = [1, 32, 32], strides = [1, 1, 1]} : vector<4x32x32xf32> to vector<1x32x32xf32>
    %68 = vector.shape_cast %67 : vector<1x32x32xf32> to vector<32x32xf32>
    %69 = vector.extract_strided_slice %29 {offsets = [0, 16], sizes = [32, 16], strides = [1, 1]} : vector<32x64xf32> to vector<32x16xf32>
    %cst_20 = arith.constant dense<0.000000e+00> : vector<32x16xf32>
    %70 = tpu.matmul %68, %69, %cst_20 {dimension_numbers = #tpu.dot_dimension_numbers<[1], [0], [0], [1], [0, 0, 1, 1], [], []>} : vector<32x32xf32>, vector<32x16xf32>, vector<32x16xf32> -> vector<32x16xf32>
    %71 = vector.extract_strided_slice %62 {offsets = [2, 0, 0], sizes = [1, 32, 32], strides = [1, 1, 1]} : vector<4x32x32xf32> to vector<1x32x32xf32>
    %72 = vector.shape_cast %71 : vector<1x32x32xf32> to vector<32x32xf32>
    %73 = vector.extract_strided_slice %29 {offsets = [0, 32], sizes = [32, 16], strides = [1, 1]} : vector<32x64xf32> to vector<32x16xf32>
    %cst_21 = arith.constant dense<0.000000e+00> : vector<32x16xf32>
    %74 = tpu.matmul %72, %73, %cst_21 {dimension_numbers = #tpu.dot_dimension_numbers<[1], [0], [0], [1], [0, 0, 1, 1], [], []>} : vector<32x32xf32>, vector<32x16xf32>, vector<32x16xf32> -> vector<32x16xf32>
    %75 = vector.extract_strided_slice %62 {offsets = [3, 0, 0], sizes = [1, 32, 32], strides = [1, 1, 1]} : vector<4x32x32xf32> to vector<1x32x32xf32>
    %76 = vector.shape_cast %75 : vector<1x32x32xf32> to vector<32x32xf32>
    %77 = vector.extract_strided_slice %29 {offsets = [0, 48], sizes = [32, 16], strides = [1, 1]} : vector<32x64xf32> to vector<32x16xf32>
    %cst_22 = arith.constant dense<0.000000e+00> : vector<32x16xf32>
    %78 = tpu.matmul %76, %77, %cst_22 {dimension_numbers = #tpu.dot_dimension_numbers<[1], [0], [0], [1], [0, 0, 1, 1], [], []>} : vector<32x32xf32>, vector<32x16xf32>, vector<32x16xf32> -> vector<32x16xf32>
    %79 = tpu.concatenate %66, %70, %74, %78 in 1 : vector<32x16xf32>, vector<32x16xf32>, vector<32x16xf32>, vector<32x16xf32> -> vector<32x64xf32>
    %c128 = arith.constant 128 : index
    %c0_23 = arith.constant 0 : index
    %80 = vector.load %arg3[%c128, %c0_23] : memref<896x128xf32, #tpu.memory_space<vmem>>, vector<64x128xf32>
    %cst_24 = arith.constant dense<0.000000e+00> : vector<32x128xf32>
    %81 = tpu.matmul %79, %80, %cst_24 {dimension_numbers = #tpu.dot_dimension_numbers<[1], [0], [0], [1], [0, 0, 1, 1], [], []>} : vector<32x64xf32>, vector<64x128xf32>, vector<32x128xf32> -> vector<32x128xf32>
    %82 = vector.extract_strided_slice %1 {offsets = [4, 0], sizes = [1, 128], strides = [1, 1]} : vector<22x128xf32> to vector<1x128xf32>
    %83 = vector.broadcast %82 : vector<1x128xf32> to vector<32x128xf32>
    %84 = arith.addf %81, %83 : vector<32x128xf32>
    %85 = arith.addf %15, %84 : vector<32x128xf32>
    %86 = vector.extract_strided_slice %1 {offsets = [7, 0], sizes = [1, 128], strides = [1, 1]} : vector<22x128xf32> to vector<1x128xf32>
    %87 = vector.extract_strided_slice %1 {offsets = [8, 0], sizes = [1, 128], strides = [1, 1]} : vector<22x128xf32> to vector<1x128xf32>
    %88 = vector.broadcast %10 : vector<1x128xf32> to vector<32x128xf32>
    %89 = arith.mulf %85, %88 : vector<32x128xf32>
    %cst_25 = arith.constant dense<0.000000e+00> : vector<32xf32>
    %90 = vector.multi_reduction <add>, %89, %cst_25 [1] : vector<32x128xf32> to vector<32xf32>
    %91 = vector.shape_cast %90 : vector<32xf32> to vector<32x1xf32>
    %cst_26 = arith.constant 6.400000e+01 : f32
    %92 = vector.broadcast %cst_26 : f32 to vector<32x1xf32>
    %93 = arith.divf %91, %92 : vector<32x1xf32>
    %94 = vector.broadcast %93 : vector<32x1xf32> to vector<32x128xf32>
    %95 = arith.subf %89, %94 : vector<32x128xf32>
    %96 = vector.broadcast %10 : vector<1x128xf32> to vector<32x128xf32>
    %97 = arith.mulf %95, %96 : vector<32x128xf32>
    %98 = arith.mulf %97, %97 : vector<32x128xf32>
    %cst_27 = arith.constant dense<0.000000e+00> : vector<32xf32>
    %99 = vector.multi_reduction <add>, %98, %cst_27 [1] : vector<32x128xf32> to vector<32xf32>
    %100 = vector.shape_cast %99 : vector<32xf32> to vector<32x1xf32>
    %cst_28 = arith.constant 6.400000e+01 : f32
    %101 = vector.broadcast %cst_28 : f32 to vector<32x1xf32>
    %102 = arith.divf %100, %101 : vector<32x1xf32>
    %cst_29 = arith.constant 9.99999974E-6 : f32
    %103 = vector.broadcast %cst_29 : f32 to vector<32x1xf32>
    %104 = arith.addf %102, %103 : vector<32x1xf32>
    %105 = math.rsqrt %104 : vector<32x1xf32>
    %106 = vector.broadcast %105 : vector<32x1xf32> to vector<32x128xf32>
    %107 = arith.mulf %97, %106 : vector<32x128xf32>
    %108 = vector.broadcast %86 : vector<1x128xf32> to vector<32x128xf32>
    %109 = arith.mulf %107, %108 : vector<32x128xf32>
    %110 = vector.broadcast %87 : vector<1x128xf32> to vector<32x128xf32>
    %111 = arith.addf %109, %110 : vector<32x128xf32>
    %c192 = arith.constant 192 : index
    %c0_30 = arith.constant 0 : index
    %112 = vector.load %arg3[%c192, %c0_30] : memref<896x128xf32, #tpu.memory_space<vmem>>, vector<128x128xf32>
    %c320 = arith.constant 320 : index
    %c0_31 = arith.constant 0 : index
    %113 = vector.load %arg3[%c320, %c0_31] : memref<896x128xf32, #tpu.memory_space<vmem>>, vector<128x128xf32>
    %cst_32 = arith.constant dense<0.000000e+00> : vector<32x128xf32>
    %114 = tpu.matmul %111, %112, %cst_32 {dimension_numbers = #tpu.dot_dimension_numbers<[1], [0], [0], [1], [0, 0, 1, 1], [], []>} : vector<32x128xf32>, vector<128x128xf32>, vector<32x128xf32> -> vector<32x128xf32>
    %115 = vector.extract_strided_slice %1 {offsets = [5, 0], sizes = [1, 128], strides = [1, 1]} : vector<22x128xf32> to vector<1x128xf32>
    %116 = vector.broadcast %115 : vector<1x128xf32> to vector<32x128xf32>
    %117 = arith.addf %114, %116 : vector<32x128xf32>
    %cst_33 = arith.constant 0.000000e+00 : f32
    %118 = vector.broadcast %cst_33 : f32 to vector<32x128xf32>
    %119 = arith.maximumf %117, %118 : vector<32x128xf32>
    %cst_34 = arith.constant dense<0.000000e+00> : vector<32x128xf32>
    %120 = tpu.matmul %119, %113, %cst_34 {dimension_numbers = #tpu.dot_dimension_numbers<[1], [0], [0], [1], [0, 0, 1, 1], [], []>} : vector<32x128xf32>, vector<128x128xf32>, vector<32x128xf32> -> vector<32x128xf32>
    %121 = vector.extract_strided_slice %1 {offsets = [6, 0], sizes = [1, 128], strides = [1, 1]} : vector<22x128xf32> to vector<1x128xf32>
    %122 = vector.broadcast %121 : vector<1x128xf32> to vector<32x128xf32>
    %123 = arith.addf %120, %122 : vector<32x128xf32>
    %124 = arith.addf %111, %123 : vector<32x128xf32>
    %125 = vector.extract_strided_slice %1 {offsets = [9, 0], sizes = [1, 128], strides = [1, 1]} : vector<22x128xf32> to vector<1x128xf32>
    %126 = vector.extract_strided_slice %1 {offsets = [10, 0], sizes = [1, 128], strides = [1, 1]} : vector<22x128xf32> to vector<1x128xf32>
    %127 = vector.broadcast %10 : vector<1x128xf32> to vector<32x128xf32>
    %128 = arith.mulf %124, %127 : vector<32x128xf32>
    %cst_35 = arith.constant dense<0.000000e+00> : vector<32xf32>
    %129 = vector.multi_reduction <add>, %128, %cst_35 [1] : vector<32x128xf32> to vector<32xf32>
    %130 = vector.shape_cast %129 : vector<32xf32> to vector<32x1xf32>
    %cst_36 = arith.constant 6.400000e+01 : f32
    %131 = vector.broadcast %cst_36 : f32 to vector<32x1xf32>
    %132 = arith.divf %130, %131 : vector<32x1xf32>
    %133 = vector.broadcast %132 : vector<32x1xf32> to vector<32x128xf32>
    %134 = arith.subf %128, %133 : vector<32x128xf32>
    %135 = vector.broadcast %10 : vector<1x128xf32> to vector<32x128xf32>
    %136 = arith.mulf %134, %135 : vector<32x128xf32>
    %137 = arith.mulf %136, %136 : vector<32x128xf32>
    %cst_37 = arith.constant dense<0.000000e+00> : vector<32xf32>
    %138 = vector.multi_reduction <add>, %137, %cst_37 [1] : vector<32x128xf32> to vector<32xf32>
    %139 = vector.shape_cast %138 : vector<32xf32> to vector<32x1xf32>
    %cst_38 = arith.constant 6.400000e+01 : f32
    %140 = vector.broadcast %cst_38 : f32 to vector<32x1xf32>
    %141 = arith.divf %139, %140 : vector<32x1xf32>
    %cst_39 = arith.constant 9.99999974E-6 : f32
    %142 = vector.broadcast %cst_39 : f32 to vector<32x1xf32>
    %143 = arith.addf %141, %142 : vector<32x1xf32>
    %144 = math.rsqrt %143 : vector<32x1xf32>
    %145 = vector.broadcast %144 : vector<32x1xf32> to vector<32x128xf32>
    %146 = arith.mulf %136, %145 : vector<32x128xf32>
    %147 = vector.broadcast %125 : vector<1x128xf32> to vector<32x128xf32>
    %148 = arith.mulf %146, %147 : vector<32x128xf32>
    %149 = vector.broadcast %126 : vector<1x128xf32> to vector<32x128xf32>
    %150 = arith.addf %148, %149 : vector<32x128xf32>
    %c128_40 = arith.constant 128 : index
    %c0_41 = arith.constant 0 : index
    %151 = vector.load %arg2[%c128_40, %c0_41] : memref<256x192xf32, #tpu.memory_space<vmem>>, vector<128x192xf32>
    %cst_42 = arith.constant dense<0.000000e+00> : vector<32x192xf32>
    %152 = tpu.matmul %150, %151, %cst_42 {dimension_numbers = #tpu.dot_dimension_numbers<[1], [0], [0], [1], [0, 0, 1, 1], [], []>} : vector<32x128xf32>, vector<128x192xf32>, vector<32x192xf32> -> vector<32x192xf32>
    %153 = vector.extract_strided_slice %152 {offsets = [0, 0], sizes = [32, 64], strides = [1, 1]} : vector<32x192xf32> to vector<32x64xf32>
    %154 = vector.extract_strided_slice %1 {offsets = [11, 0], sizes = [1, 64], strides = [1, 1]} : vector<22x128xf32> to vector<1x64xf32>
    %155 = vector.broadcast %154 : vector<1x64xf32> to vector<32x64xf32>
    %156 = arith.addf %153, %155 : vector<32x64xf32>
    %157 = vector.extract_strided_slice %152 {offsets = [0, 64], sizes = [32, 64], strides = [1, 1]} : vector<32x192xf32> to vector<32x64xf32>
    %158 = vector.extract_strided_slice %1 {offsets = [12, 0], sizes = [1, 64], strides = [1, 1]} : vector<22x128xf32> to vector<1x64xf32>
    %159 = vector.broadcast %158 : vector<1x64xf32> to vector<32x64xf32>
    %160 = arith.addf %157, %159 : vector<32x64xf32>
    %161 = vector.extract_strided_slice %152 {offsets = [0, 128], sizes = [32, 64], strides = [1, 1]} : vector<32x192xf32> to vector<32x64xf32>
    %162 = vector.extract_strided_slice %1 {offsets = [13, 0], sizes = [1, 64], strides = [1, 1]} : vector<22x128xf32> to vector<1x64xf32>
    %163 = vector.broadcast %162 : vector<1x64xf32> to vector<32x64xf32>
    %164 = arith.addf %161, %163 : vector<32x64xf32>
    %165 = vector.extract_strided_slice %156 {offsets = [0, 0], sizes = [32, 16], strides = [1, 1]} : vector<32x64xf32> to vector<32x16xf32>
    %166 = vector.extract_strided_slice %160 {offsets = [0, 0], sizes = [32, 16], strides = [1, 1]} : vector<32x64xf32> to vector<32x16xf32>
    "tpu.trace_start"() <{level = 10 : i32, message = "nd,md->nm"}> : () -> ()
    %cst_43 = arith.constant dense<0.000000e+00> : vector<32x32xf32>
    %167 = tpu.matmul %165, %166, %cst_43 {dimension_numbers = #tpu.dot_dimension_numbers<[1], [1], [0], [0], [0, 0, 1, 0], [], []>} : vector<32x16xf32>, vector<32x16xf32>, vector<32x32xf32> -> vector<32x32xf32>
    "tpu.trace_stop"() : () -> ()
    %168 = vector.extract_strided_slice %156 {offsets = [0, 16], sizes = [32, 16], strides = [1, 1]} : vector<32x64xf32> to vector<32x16xf32>
    %169 = vector.extract_strided_slice %160 {offsets = [0, 16], sizes = [32, 16], strides = [1, 1]} : vector<32x64xf32> to vector<32x16xf32>
    "tpu.trace_start"() <{level = 10 : i32, message = "nd,md->nm"}> : () -> ()
    %cst_44 = arith.constant dense<0.000000e+00> : vector<32x32xf32>
    %170 = tpu.matmul %168, %169, %cst_44 {dimension_numbers = #tpu.dot_dimension_numbers<[1], [1], [0], [0], [0, 0, 1, 0], [], []>} : vector<32x16xf32>, vector<32x16xf32>, vector<32x32xf32> -> vector<32x32xf32>
    "tpu.trace_stop"() : () -> ()
    %171 = vector.extract_strided_slice %156 {offsets = [0, 32], sizes = [32, 16], strides = [1, 1]} : vector<32x64xf32> to vector<32x16xf32>
    %172 = vector.extract_strided_slice %160 {offsets = [0, 32], sizes = [32, 16], strides = [1, 1]} : vector<32x64xf32> to vector<32x16xf32>
    "tpu.trace_start"() <{level = 10 : i32, message = "nd,md->nm"}> : () -> ()
    %cst_45 = arith.constant dense<0.000000e+00> : vector<32x32xf32>
    %173 = tpu.matmul %171, %172, %cst_45 {dimension_numbers = #tpu.dot_dimension_numbers<[1], [1], [0], [0], [0, 0, 1, 0], [], []>} : vector<32x16xf32>, vector<32x16xf32>, vector<32x32xf32> -> vector<32x32xf32>
    "tpu.trace_stop"() : () -> ()
    %174 = vector.extract_strided_slice %156 {offsets = [0, 48], sizes = [32, 16], strides = [1, 1]} : vector<32x64xf32> to vector<32x16xf32>
    %175 = vector.extract_strided_slice %160 {offsets = [0, 48], sizes = [32, 16], strides = [1, 1]} : vector<32x64xf32> to vector<32x16xf32>
    "tpu.trace_start"() <{level = 10 : i32, message = "nd,md->nm"}> : () -> ()
    %cst_46 = arith.constant dense<0.000000e+00> : vector<32x32xf32>
    %176 = tpu.matmul %174, %175, %cst_46 {dimension_numbers = #tpu.dot_dimension_numbers<[1], [1], [0], [0], [0, 0, 1, 0], [], []>} : vector<32x16xf32>, vector<32x16xf32>, vector<32x32xf32> -> vector<32x32xf32>
    "tpu.trace_stop"() : () -> ()
    %177 = vector.shape_cast %167 : vector<32x32xf32> to vector<1x32x32xf32>
    %178 = vector.shape_cast %170 : vector<32x32xf32> to vector<1x32x32xf32>
    %179 = vector.shape_cast %173 : vector<32x32xf32> to vector<1x32x32xf32>
    %180 = vector.shape_cast %176 : vector<32x32xf32> to vector<1x32x32xf32>
    %181 = tpu.concatenate %177, %178, %179, %180 in 0 : vector<1x32x32xf32>, vector<1x32x32xf32>, vector<1x32x32xf32>, vector<1x32x32xf32> -> vector<4x32x32xf32>
    %cst_47 = arith.constant 2.500000e-01 : f32
    %182 = vector.broadcast %cst_47 : f32 to vector<4x32x32xf32>
    %183 = arith.mulf %181, %182 : vector<4x32x32xf32>
    %cst_48 = arith.constant dense<0xFF800000> : vector<32x32xf32>
    %184 = vector.multi_reduction <maximumf>, %183, %cst_48 [0] : vector<4x32x32xf32> to vector<32x32xf32>
    %185 = vector.shape_cast %184 : vector<32x32xf32> to vector<1x32x32xf32>
    %186 = vector.broadcast %185 : vector<1x32x32xf32> to vector<4x32x32xf32>
    %187 = arith.subf %183, %186 : vector<4x32x32xf32>
    %188 = math.exp %187 : vector<4x32x32xf32>
    %cst_49 = arith.constant dense<0.000000e+00> : vector<32x32xf32>
    %189 = vector.multi_reduction <add>, %188, %cst_49 [0] : vector<4x32x32xf32> to vector<32x32xf32>
    %190 = vector.shape_cast %189 : vector<32x32xf32> to vector<1x32x32xf32>
    %191 = vector.broadcast %190 : vector<1x32x32xf32> to vector<4x32x32xf32>
    %192 = arith.divf %188, %191 : vector<4x32x32xf32>
    %193 = vector.shape_cast %5 : vector<32x32xi1> to vector<1x32x32xi1>
    %cst_50 = arith.constant 2.500000e-01 : f32
    %194 = vector.shape_cast %193 : vector<1x32x32xi1> to vector<1x32x32xi1>
    %195 = vector.broadcast %194 : vector<1x32x32xi1> to vector<4x32x32xi1>
    %196 = vector.broadcast %cst_50 : f32 to vector<4x32x32xf32>
    %197 = arith.select %195, %196, %192 : vector<4x32x32xi1>, vector<4x32x32xf32>
    %198 = vector.extract_strided_slice %197 {offsets = [0, 0, 0], sizes = [1, 32, 32], strides = [1, 1, 1]} : vector<4x32x32xf32> to vector<1x32x32xf32>
    %199 = vector.shape_cast %198 : vector<1x32x32xf32> to vector<32x32xf32>
    %200 = vector.extract_strided_slice %164 {offsets = [0, 0], sizes = [32, 16], strides = [1, 1]} : vector<32x64xf32> to vector<32x16xf32>
    %cst_51 = arith.constant dense<0.000000e+00> : vector<32x16xf32>
    %201 = tpu.matmul %199, %200, %cst_51 {dimension_numbers = #tpu.dot_dimension_numbers<[1], [0], [0], [1], [0, 0, 1, 1], [], []>} : vector<32x32xf32>, vector<32x16xf32>, vector<32x16xf32> -> vector<32x16xf32>
    %202 = vector.extract_strided_slice %197 {offsets = [1, 0, 0], sizes = [1, 32, 32], strides = [1, 1, 1]} : vector<4x32x32xf32> to vector<1x32x32xf32>
    %203 = vector.shape_cast %202 : vector<1x32x32xf32> to vector<32x32xf32>
    %204 = vector.extract_strided_slice %164 {offsets = [0, 16], sizes = [32, 16], strides = [1, 1]} : vector<32x64xf32> to vector<32x16xf32>
    %cst_52 = arith.constant dense<0.000000e+00> : vector<32x16xf32>
    %205 = tpu.matmul %203, %204, %cst_52 {dimension_numbers = #tpu.dot_dimension_numbers<[1], [0], [0], [1], [0, 0, 1, 1], [], []>} : vector<32x32xf32>, vector<32x16xf32>, vector<32x16xf32> -> vector<32x16xf32>
    %206 = vector.extract_strided_slice %197 {offsets = [2, 0, 0], sizes = [1, 32, 32], strides = [1, 1, 1]} : vector<4x32x32xf32> to vector<1x32x32xf32>
    %207 = vector.shape_cast %206 : vector<1x32x32xf32> to vector<32x32xf32>
    %208 = vector.extract_strided_slice %164 {offsets = [0, 32], sizes = [32, 16], strides = [1, 1]} : vector<32x64xf32> to vector<32x16xf32>
    %cst_53 = arith.constant dense<0.000000e+00> : vector<32x16xf32>
    %209 = tpu.matmul %207, %208, %cst_53 {dimension_numbers = #tpu.dot_dimension_numbers<[1], [0], [0], [1], [0, 0, 1, 1], [], []>} : vector<32x32xf32>, vector<32x16xf32>, vector<32x16xf32> -> vector<32x16xf32>
    %210 = vector.extract_strided_slice %197 {offsets = [3, 0, 0], sizes = [1, 32, 32], strides = [1, 1, 1]} : vector<4x32x32xf32> to vector<1x32x32xf32>
    %211 = vector.shape_cast %210 : vector<1x32x32xf32> to vector<32x32xf32>
    %212 = vector.extract_strided_slice %164 {offsets = [0, 48], sizes = [32, 16], strides = [1, 1]} : vector<32x64xf32> to vector<32x16xf32>
    %cst_54 = arith.constant dense<0.000000e+00> : vector<32x16xf32>
    %213 = tpu.matmul %211, %212, %cst_54 {dimension_numbers = #tpu.dot_dimension_numbers<[1], [0], [0], [1], [0, 0, 1, 1], [], []>} : vector<32x32xf32>, vector<32x16xf32>, vector<32x16xf32> -> vector<32x16xf32>
    %214 = tpu.concatenate %201, %205, %209, %213 in 1 : vector<32x16xf32>, vector<32x16xf32>, vector<32x16xf32>, vector<32x16xf32> -> vector<32x64xf32>
    %c448 = arith.constant 448 : index
    %c0_55 = arith.constant 0 : index
    %215 = vector.load %arg3[%c448, %c0_55] : memref<896x128xf32, #tpu.memory_space<vmem>>, vector<64x128xf32>
    %cst_56 = arith.constant dense<0.000000e+00> : vector<32x128xf32>
    %216 = tpu.matmul %214, %215, %cst_56 {dimension_numbers = #tpu.dot_dimension_numbers<[1], [0], [0], [1], [0, 0, 1, 1], [], []>} : vector<32x64xf32>, vector<64x128xf32>, vector<32x128xf32> -> vector<32x128xf32>
    %217 = vector.extract_strided_slice %1 {offsets = [14, 0], sizes = [1, 128], strides = [1, 1]} : vector<22x128xf32> to vector<1x128xf32>
    %218 = vector.broadcast %217 : vector<1x128xf32> to vector<32x128xf32>
    %219 = arith.addf %216, %218 : vector<32x128xf32>
    %220 = arith.addf %150, %219 : vector<32x128xf32>
    %221 = vector.extract_strided_slice %1 {offsets = [17, 0], sizes = [1, 128], strides = [1, 1]} : vector<22x128xf32> to vector<1x128xf32>
    %222 = vector.extract_strided_slice %1 {offsets = [18, 0], sizes = [1, 128], strides = [1, 1]} : vector<22x128xf32> to vector<1x128xf32>
    %223 = vector.broadcast %10 : vector<1x128xf32> to vector<32x128xf32>
    %224 = arith.mulf %220, %223 : vector<32x128xf32>
    %cst_57 = arith.constant dense<0.000000e+00> : vector<32xf32>
    %225 = vector.multi_reduction <add>, %224, %cst_57 [1] : vector<32x128xf32> to vector<32xf32>
    %226 = vector.shape_cast %225 : vector<32xf32> to vector<32x1xf32>
    %cst_58 = arith.constant 6.400000e+01 : f32
    %227 = vector.broadcast %cst_58 : f32 to vector<32x1xf32>
    %228 = arith.divf %226, %227 : vector<32x1xf32>
    %229 = vector.broadcast %228 : vector<32x1xf32> to vector<32x128xf32>
    %230 = arith.subf %224, %229 : vector<32x128xf32>
    %231 = vector.broadcast %10 : vector<1x128xf32> to vector<32x128xf32>
    %232 = arith.mulf %230, %231 : vector<32x128xf32>
    %233 = arith.mulf %232, %232 : vector<32x128xf32>
    %cst_59 = arith.constant dense<0.000000e+00> : vector<32xf32>
    %234 = vector.multi_reduction <add>, %233, %cst_59 [1] : vector<32x128xf32> to vector<32xf32>
    %235 = vector.shape_cast %234 : vector<32xf32> to vector<32x1xf32>
    %cst_60 = arith.constant 6.400000e+01 : f32
    %236 = vector.broadcast %cst_60 : f32 to vector<32x1xf32>
    %237 = arith.divf %235, %236 : vector<32x1xf32>
    %cst_61 = arith.constant 9.99999974E-6 : f32
    %238 = vector.broadcast %cst_61 : f32 to vector<32x1xf32>
    %239 = arith.addf %237, %238 : vector<32x1xf32>
    %240 = math.rsqrt %239 : vector<32x1xf32>
    %241 = vector.broadcast %240 : vector<32x1xf32> to vector<32x128xf32>
    %242 = arith.mulf %232, %241 : vector<32x128xf32>
    %243 = vector.broadcast %221 : vector<1x128xf32> to vector<32x128xf32>
    %244 = arith.mulf %242, %243 : vector<32x128xf32>
    %245 = vector.broadcast %222 : vector<1x128xf32> to vector<32x128xf32>
    %246 = arith.addf %244, %245 : vector<32x128xf32>
    %c512 = arith.constant 512 : index
    %c0_62 = arith.constant 0 : index
    %247 = vector.load %arg3[%c512, %c0_62] : memref<896x128xf32, #tpu.memory_space<vmem>>, vector<128x128xf32>
    %c640 = arith.constant 640 : index
    %c0_63 = arith.constant 0 : index
    %248 = vector.load %arg3[%c640, %c0_63] : memref<896x128xf32, #tpu.memory_space<vmem>>, vector<128x128xf32>
    %cst_64 = arith.constant dense<0.000000e+00> : vector<32x128xf32>
    %249 = tpu.matmul %246, %247, %cst_64 {dimension_numbers = #tpu.dot_dimension_numbers<[1], [0], [0], [1], [0, 0, 1, 1], [], []>} : vector<32x128xf32>, vector<128x128xf32>, vector<32x128xf32> -> vector<32x128xf32>
    %250 = vector.extract_strided_slice %1 {offsets = [15, 0], sizes = [1, 128], strides = [1, 1]} : vector<22x128xf32> to vector<1x128xf32>
    %251 = vector.broadcast %250 : vector<1x128xf32> to vector<32x128xf32>
    %252 = arith.addf %249, %251 : vector<32x128xf32>
    %cst_65 = arith.constant 0.000000e+00 : f32
    %253 = vector.broadcast %cst_65 : f32 to vector<32x128xf32>
    %254 = arith.maximumf %252, %253 : vector<32x128xf32>
    %cst_66 = arith.constant dense<0.000000e+00> : vector<32x128xf32>
    %255 = tpu.matmul %254, %248, %cst_66 {dimension_numbers = #tpu.dot_dimension_numbers<[1], [0], [0], [1], [0, 0, 1, 1], [], []>} : vector<32x128xf32>, vector<128x128xf32>, vector<32x128xf32> -> vector<32x128xf32>
    %256 = vector.extract_strided_slice %1 {offsets = [16, 0], sizes = [1, 128], strides = [1, 1]} : vector<22x128xf32> to vector<1x128xf32>
    %257 = vector.broadcast %256 : vector<1x128xf32> to vector<32x128xf32>
    %258 = arith.addf %255, %257 : vector<32x128xf32>
    %259 = arith.addf %246, %258 : vector<32x128xf32>
    %260 = vector.extract_strided_slice %1 {offsets = [19, 0], sizes = [1, 128], strides = [1, 1]} : vector<22x128xf32> to vector<1x128xf32>
    %261 = vector.extract_strided_slice %1 {offsets = [20, 0], sizes = [1, 128], strides = [1, 1]} : vector<22x128xf32> to vector<1x128xf32>
    %262 = vector.broadcast %10 : vector<1x128xf32> to vector<32x128xf32>
    %263 = arith.mulf %259, %262 : vector<32x128xf32>
    %cst_67 = arith.constant dense<0.000000e+00> : vector<32xf32>
    %264 = vector.multi_reduction <add>, %263, %cst_67 [1] : vector<32x128xf32> to vector<32xf32>
    %265 = vector.shape_cast %264 : vector<32xf32> to vector<32x1xf32>
    %cst_68 = arith.constant 6.400000e+01 : f32
    %266 = vector.broadcast %cst_68 : f32 to vector<32x1xf32>
    %267 = arith.divf %265, %266 : vector<32x1xf32>
    %268 = vector.broadcast %267 : vector<32x1xf32> to vector<32x128xf32>
    %269 = arith.subf %263, %268 : vector<32x128xf32>
    %270 = vector.broadcast %10 : vector<1x128xf32> to vector<32x128xf32>
    %271 = arith.mulf %269, %270 : vector<32x128xf32>
    %272 = arith.mulf %271, %271 : vector<32x128xf32>
    %cst_69 = arith.constant dense<0.000000e+00> : vector<32xf32>
    %273 = vector.multi_reduction <add>, %272, %cst_69 [1] : vector<32x128xf32> to vector<32xf32>
    %274 = vector.shape_cast %273 : vector<32xf32> to vector<32x1xf32>
    %cst_70 = arith.constant 6.400000e+01 : f32
    %275 = vector.broadcast %cst_70 : f32 to vector<32x1xf32>
    %276 = arith.divf %274, %275 : vector<32x1xf32>
    %cst_71 = arith.constant 9.99999974E-6 : f32
    %277 = vector.broadcast %cst_71 : f32 to vector<32x1xf32>
    %278 = arith.addf %276, %277 : vector<32x1xf32>
    %279 = math.rsqrt %278 : vector<32x1xf32>
    %280 = vector.broadcast %279 : vector<32x1xf32> to vector<32x128xf32>
    %281 = arith.mulf %271, %280 : vector<32x128xf32>
    %282 = vector.broadcast %260 : vector<1x128xf32> to vector<32x128xf32>
    %283 = arith.mulf %281, %282 : vector<32x128xf32>
    %284 = vector.broadcast %261 : vector<1x128xf32> to vector<32x128xf32>
    %285 = arith.addf %283, %284 : vector<32x128xf32>
    %c768 = arith.constant 768 : index
    %c0_72 = arith.constant 0 : index
    %286 = vector.load %arg3[%c768, %c0_72] : memref<896x128xf32, #tpu.memory_space<vmem>>, vector<128x128xf32>
    %cst_73 = arith.constant dense<0.000000e+00> : vector<32x128xf32>
    %287 = tpu.matmul %285, %286, %cst_73 {dimension_numbers = #tpu.dot_dimension_numbers<[1], [0], [0], [1], [0, 0, 1, 1], [], []>} : vector<32x128xf32>, vector<128x128xf32>, vector<32x128xf32> -> vector<32x128xf32>
    %288 = vector.extract_strided_slice %1 {offsets = [21, 0], sizes = [1, 128], strides = [1, 1]} : vector<22x128xf32> to vector<1x128xf32>
    %289 = vector.broadcast %288 : vector<1x128xf32> to vector<32x128xf32>
    %290 = arith.addf %287, %289 : vector<32x128xf32>
    %cst_74 = arith.constant dense<0xFF800000> : vector<32xf32>
    %291 = vector.multi_reduction <maximumf>, %290, %cst_74 [1] : vector<32x128xf32> to vector<32xf32>
    %292 = vector.shape_cast %291 : vector<32xf32> to vector<32x1xf32>
    %293 = vector.broadcast %292 : vector<32x1xf32> to vector<32x128xf32>
    %294 = arith.subf %290, %293 : vector<32x128xf32>
    %295 = math.exp %294 : vector<32x128xf32>
    %cst_75 = arith.constant dense<0.000000e+00> : vector<32xf32>
    %296 = vector.multi_reduction <add>, %295, %cst_75 [1] : vector<32x128xf32> to vector<32xf32>
    %297 = vector.shape_cast %296 : vector<32xf32> to vector<32x1xf32>
    %298 = math.log %297 : vector<32x1xf32>
    %299 = vector.broadcast %298 : vector<32x1xf32> to vector<32x128xf32>
    %300 = arith.subf %294, %299 : vector<32x128xf32>
    %c0_76 = arith.constant 0 : index
    %c0_77 = arith.constant 0 : index
    %301 = vector.load %arg5[%c0_76, %c0_77] : memref<32x128xf32, #tpu.memory_space<vmem>>, vector<32x128xf32>
    tpu.vector_store %arg5[%c0_76, %c0_77], %300 {strides = array<i32>} : memref<32x128xf32, #tpu.memory_space<vmem>>, vector<32x128xf32>,
    return
  }
}

</mosaic_0001>

<llo_original>
// kernel: forward.1
$region0: #{forward.1}
  #allocation0 [shape = 'u32[]', space=smem, size = 0x4, offset = 0x4, fixed_abs, tag = 'smem constant byte address 0x4 - core index']
  #allocation1 [shape = 'u32[144,128]{1,0:T(1,128)}', space=vmem, size = 0x12000, scoped, tag = 'internal scratch']
  %s0 = inlined_call_operand.vmem [shape: f32[32,128], index: 0, kind: input, shape index: {}]
  %s1 = inlined_call_operand.vmem [shape: s8[32,32], index: 1, kind: input, shape index: {}]
  %s2 = inlined_call_operand.vmem [shape: f32[256,192], index: 2, kind: input, shape index: {}]
  %s3 = inlined_call_operand.vmem [shape: f32[896,128], index: 3, kind: input, shape index: {}]
  %s4 = inlined_call_operand.vmem [shape: f32[22,128], index: 4, kind: input, shape index: {}]
  %s5 = inlined_call_operand.vmem [shape: f32[32,128], index: 5, kind: output, shape index: {}]
  %s6 = sld [smem:[#allocation0]]
  $region30: #{forward.1} parent=0
    _
  %s8 = ssub.s32 1, %s6
  %s9 = scalar_select 0, %s8, %s6
  // Predicated region
  $region2: #{forward.1} parent=0 // pred_check
    _
  $region3: #{forward.1} parent=0 // pred_check_branch
    %11 = sbr.rel (0) target = $region5
  $region4: #{forward.1} parent=0 // pred_region
    _
  $region5: #{forward.1} parent=0 // pred_fallthru
    _
  // Predicated region
  $region6: #{forward.1} parent=0 // pred_check
    _
  $region7: #{forward.1} parent=0 // pred_check_branch
    %13 = sbr.rel (0) target = $region9
  $region8: #{forward.1} parent=0 // pred_region
    _
  $region9: #{forward.1} parent=0 // pred_fallthru
    _
  // Predicated region
  $region10: #{forward.1} parent=0 // pred_check
    _
  $region11: #{forward.1} parent=0 // pred_check_branch
    %15 = sbr.rel (0) target = $region13
  $region12: #{forward.1} parent=0 // pred_region
    _
  $region13: #{forward.1} parent=0 // pred_fallthru
    _
  // Predicated region
  $region14: #{forward.1} parent=0 // pred_check
    _
  $region15: #{forward.1} parent=0 // pred_check_branch
    %17 = sbr.rel (0) target = $region17
  $region16: #{forward.1} parent=0 // pred_region
    _
  $region17: #{forward.1} parent=0 // pred_fallthru
    _
  // Predicated region
  $region18: #{forward.1} parent=0 // pred_check
    _
  $region19: #{forward.1} parent=0 // pred_check_branch
    %19 = sbr.rel (0) target = $region21
  $region20: #{forward.1} parent=0 // pred_region
    _
  $region21: #{forward.1} parent=0 // pred_fallthru
    _
  %v20 = vld [vmem:[%s0] sm:$0xff]
  %v21 = vld [vmem:[%s0 + $0x8] sm:$0xff]
  %v22 = vld [vmem:[%s0 + $0x10] sm:$0xff]
  %v23 = vld [vmem:[%s0 + $0x18] sm:$0xff]
  %v24 = vld [vmem:[%s4] sm:$0xff]
  %v25 = vld [vmem:[%s4 + $0x8] sm:$0xff]
  %v26 = vld [vmem:[%s4 + $0x10] sm:$0x3f]
  %v27 = vld [vmem:[%s1] sm:$0xff]
  %v28 = vunpack.c.0.s8 %v27
  %v29 = vunpack.c.1.s8 %v27
  %v30 = vunpack.c.2.s8 %v27
  %v31 = vunpack.c.3.s8 %v27
  %v32 = vcvt.s32.f32 %v28
  %v33 = vcvt.s32.f32 %v29
  %v34 = vcvt.s32.f32 %v30
  %v35 = vcvt.s32.f32 %v31
  %vm36 = vcmp.eq.f32.partialorder %v32, 0.0
  %vm37 = vcmp.eq.f32.partialorder %v33, 0.0
  %vm38 = vcmp.eq.f32.partialorder %v34, 0.0
  %vm39 = vcmp.eq.f32.partialorder %v35, 0.0
  %v40 = vlaneseq
  %v41 = vand.u32 %v40, 127
  %vm42 = vcmp.lt.s32.totalorder %v41, 64
  %v43 = vsel %vm42, 1, 0
  %v44 = vcvt.s32.f32 %v43
  %v45 = vld [vmem:[%s3] sm:$0xff]
  %v46 = vld [vmem:[%s3 + $0x8] sm:$0xff]
  %v47 = vld [vmem:[%s3 + $0x10] sm:$0xff]
  %v48 = vld [vmem:[%s3 + $0x18] sm:$0xff]
  %v49 = vld [vmem:[%s3 + $0x20] sm:$0xff]
  %v50 = vld [vmem:[%s3 + $0x28] sm:$0xff]
  %v51 = vld [vmem:[%s3 + $0x30] sm:$0xff]
  %v52 = vld [vmem:[%s3 + $0x38] sm:$0xff]
  %v53 = vld [vmem:[%s3 + $0x40] sm:$0xff]
  %v54 = vld [vmem:[%s3 + $0x48] sm:$0xff]
  %v55 = vld [vmem:[%s3 + $0x50] sm:$0xff]
  %v56 = vld [vmem:[%s3 + $0x58] sm:$0xff]
  %v57 = vld [vmem:[%s3 + $0x60] sm:$0xff]
  %v58 = vld [vmem:[%s3 + $0x68] sm:$0xff]
  %v59 = vld [vmem:[%s3 + $0x70] sm:$0xff]
  %v60 = vld [vmem:[%s3 + $0x78] sm:$0xff]
  %v61 = vlaneseq
  %v62 = vshrl.u32 %v61, 7
  %v63 = vsub.s32 0, %v62
  %v64 = vrot.slane %v24, %v63
  %65 = vmatprep.subr.mxu0 0.0
  %66 = vmatpush1.msra.mxu0 %v60
  %67 = vmatprep.subr.mxu0 0.0
  %68 = vmatpush1.msra.mxu0 %v59
  %69 = vmatprep.subr.mxu0 0.0
  %70 = vmatpush1.msra.mxu0 %v58
  %71 = vmatprep.subr.mxu0 0.0
  %72 = vmatpush1.msra.mxu0 %v57
  %73 = vmatprep.subr.mxu0 0.0
  %74 = vmatpush1.msra.mxu0 %v56
  %75 = vmatprep.subr.mxu0 0.0
  %76 = vmatpush1.msra.mxu0 %v55
  %77 = vmatprep.subr.mxu0 0.0
  %78 = vmatpush1.msra.mxu0 %v54
  %79 = vmatprep.subr.mxu0 0.0
  %80 = vmatpush1.msra.mxu0 %v53
  %81 = vmatprep.subr.mxu0 0.0
  %82 = vmatpush1.msra.mxu0 %v52
  %83 = vmatprep.subr.mxu0 0.0
  %84 = vmatpush1.msra.mxu0 %v51
  %85 = vmatprep.subr.mxu0 0.0
  %86 = vmatpush1.msra.mxu0 %v50
  %87 = vmatprep.subr.mxu0 0.0
  %88 = vmatpush1.msra.mxu0 %v49
  %89 = vmatprep.subr.mxu0 0.0
  %90 = vmatpush1.msra.mxu0 %v48
  %91 = vmatprep.subr.mxu0 0.0
  %92 = vmatpush1.msra.mxu0 %v47
  %93 = vmatprep.subr.mxu0 0.0
  %94 = vmatpush1.msra.mxu0 %v46
  %95 = vmatprep.subr.mxu0 0.0
  %96 = vmatpush1.msra.mxu0 %v45
  %97 = vmatprep.subr.mxu0 0.0
  %98 = vmatpush2.msra.mxu0 0.0
  %99 = vmatprep.subr.mxu0 0.0
  %100 = vmatpush2.msra.mxu0 0.0
  %101 = vmatprep.subr.mxu0 0.0
  %102 = vmatpush2.msra.mxu0 0.0
  %103 = vmatprep.subr.mxu0 0.0
  %104 = vmatpush2.msra.mxu0 0.0
  %105 = vmatprep.subr.mxu0 0.0
  %106 = vmatpush2.msra.mxu0 0.0
  %107 = vmatprep.subr.mxu0 0.0
  %108 = vmatpush2.msra.mxu0 0.0
  %109 = vmatprep.subr.mxu0 0.0
  %110 = vmatpush2.msra.mxu0 0.0
  %111 = vmatprep.subr.mxu0 0.0
  %112 = vmatpush2.msra.mxu0 0.0
  %113 = vmatprep.subr.mxu0 0.0
  %114 = vmatpush2.msra.mxu0 0.0
  %115 = vmatprep.subr.mxu0 0.0
  %116 = vmatpush2.msra.mxu0 0.0
  %117 = vmatprep.subr.mxu0 0.0
  %118 = vmatpush2.msra.mxu0 0.0
  %119 = vmatprep.subr.mxu0 0.0
  %120 = vmatpush2.msra.mxu0 0.0
  %121 = vmatprep.subr.mxu0 0.0
  %122 = vmatpush2.msra.mxu0 0.0
  %123 = vmatprep.subr.mxu0 0.0
  %124 = vmatpush2.msra.mxu0 0.0
  %125 = vmatprep.subr.mxu0 0.0
  %126 = vmatpush2.msra.mxu0 0.0
  %127 = vmatprep.subr.mxu0 0.0
  %128 = vmatpush2.msra.mxu0 0.0
  %129 = vmatprep.mubr.f32.mxu0 0.0
  %130 = vmatmul.mubr.f32.gmra.mxu0 %v20
  %v131 = vpop.f32.mrf.mxu0
  %v132 = vadd.f32 %v64, %v131
  %v133 = vpop.f32.mrf.mxu0
  %134 = vmatprep.mubr.f32.mxu0 0.0
  %135 = vmatmul.mubr.f32.gmra.mxu0 %v21
  %v136 = vpop.f32.mrf.mxu0
  %v137 = vadd.f32 %v64, %v136
  %v138 = vpop.f32.mrf.mxu0
  %139 = vmatprep.mubr.f32.mxu0 0.0
  %140 = vmatmul.mubr.f32.gmra.mxu0 %v22
  %v141 = vpop.f32.mrf.mxu0
  %v142 = vadd.f32 %v64, %v141
  %v143 = vpop.f32.mrf.mxu0
  %144 = vmatprep.mubr.f32.mxu0 0.0
  %145 = vmatmul.mubr.f32.gmra.mxu0 %v23
  %v146 = vpop.f32.mrf.mxu0
  %v147 = vadd.f32 %v64, %v146
  %v148 = vpop.f32.mrf.mxu0
  %149 = vdwg.mxu0
  %v150 = vld [vmem:[%s2] sm:$0xff]
  %v151 = vld [vmem:[%s2 + $0x8] sm:$0xff]
  %v152 = vld [vmem:[%s2 + $0x10] sm:$0xff]
  %v153 = vld [vmem:[%s2 + $0x18] sm:$0xff]
  %v154 = vld [vmem:[%s2 + $0x20] sm:$0xff]
  %v155 = vld [vmem:[%s2 + $0x28] sm:$0xff]
  %v156 = vld [vmem:[%s2 + $0x30] sm:$0xff]
  %v157 = vld [vmem:[%s2 + $0x38] sm:$0xff]
  %v158 = vld [vmem:[%s2 + $0x40] sm:$0xff]
  %v159 = vld [vmem:[%s2 + $0x48] sm:$0xff]
  %v160 = vld [vmem:[%s2 + $0x50] sm:$0xff]
  %v161 = vld [vmem:[%s2 + $0x58] sm:$0xff]
  %v162 = vld [vmem:[%s2 + $0x60] sm:$0xff]
  %v163 = vld [vmem:[%s2 + $0x68] sm:$0xff]
  %v164 = vld [vmem:[%s2 + $0x70] sm:$0xff]
  %v165 = vld [vmem:[%s2 + $0x78] sm:$0xff]
  %v166 = vld [vmem:[%s2 + $0x80] sm:$0xff]
  %v167 = vld [vmem:[%s2 + $0x88] sm:$0xff]
  %v168 = vld [vmem:[%s2 + $0x90] sm:$0xff]
  %v169 = vld [vmem:[%s2 + $0x98] sm:$0xff]
  %v170 = vld [vmem:[%s2 + $0xa0] sm:$0xff]
  %v171 = vld [vmem:[%s2 + $0xa8] sm:$0xff]
  %v172 = vld [vmem:[%s2 + $0xb0] sm:$0xff]
  %v173 = vld [vmem:[%s2 + $0xb8] sm:$0xff]
  %v174 = vld [vmem:[%s2 + $0xc0] sm:$0xff]
  %v175 = vld [vmem:[%s2 + $0xc8] sm:$0xff]
  %v176 = vld [vmem:[%s2 + $0xd0] sm:$0xff]
  %v177 = vld [vmem:[%s2 + $0xd8] sm:$0xff]
  %v178 = vld [vmem:[%s2 + $0xe0] sm:$0xff]
  %v179 = vld [vmem:[%s2 + $0xe8] sm:$0xff]
  %v180 = vld [vmem:[%s2 + $0xf0] sm:$0xff]
  %v181 = vld [vmem:[%s2 + $0xf8] sm:$0xff]
  %182 = vmatprep.subr.mxu0 %v181
  %183 = vmatpush1.msra.mxu0 %v180
  %184 = vmatprep.subr.mxu0 %v179
  %185 = vmatpush1.msra.mxu0 %v178
  %186 = vmatprep.subr.mxu0 %v177
  %187 = vmatpush1.msra.mxu0 %v176
  %188 = vmatprep.subr.mxu0 %v175
  %189 = vmatpush1.msra.mxu0 %v174
  %190 = vmatprep.subr.mxu0 %v173
  %191 = vmatpush1.msra.mxu0 %v172
  %192 = vmatprep.subr.mxu0 %v171
  %193 = vmatpush1.msra.mxu0 %v170
  %194 = vmatprep.subr.mxu0 %v169
  %195 = vmatpush1.msra.mxu0 %v168
  %196 = vmatprep.subr.mxu0 %v167
  %197 = vmatpush1.msra.mxu0 %v166
  %198 = vmatprep.subr.mxu0 %v165
  %199 = vmatpush1.msra.mxu0 %v164
  %200 = vmatprep.subr.mxu0 %v163
  %201 = vmatpush1.msra.mxu0 %v162
  %202 = vmatprep.subr.mxu0 %v161
  %203 = vmatpush1.msra.mxu0 %v160
  %204 = vmatprep.subr.mxu0 %v159
  %205 = vmatpush1.msra.mxu0 %v158
  %206 = vmatprep.subr.mxu0 %v157
  %207 = vmatpush1.msra.mxu0 %v156
  %208 = vmatprep.subr.mxu0 %v155
  %209 = vmatpush1.msra.mxu0 %v154
  %210 = vmatprep.subr.mxu0 %v153
  %211 = vmatpush1.msra.mxu0 %v152
  %212 = vmatprep.subr.mxu0 %v151
  %213 = vmatpush1.msra.mxu0 %v150
  %214 = vmatprep.subr.mxu0 0.0
  %215 = vmatpush2.msra.mxu0 0.0
  %216 = vmatprep.subr.mxu0 0.0
  %217 = vmatpush2.msra.mxu0 0.0
  %218 = vmatprep.subr.mxu0 0.0
  %219 = vmatpush2.msra.mxu0 0.0
  %220 = vmatprep.subr.mxu0 0.0
  %221 = vmatpush2.msra.mxu0 0.0
  %222 = vmatprep.subr.mxu0 0.0
  %223 = vmatpush2.msra.mxu0 0.0
  %224 = vmatprep.subr.mxu0 0.0
  %225 = vmatpush2.msra.mxu0 0.0
  %226 = vmatprep.subr.mxu0 0.0
  %227 = vmatpush2.msra.mxu0 0.0
  %228 = vmatprep.subr.mxu0 0.0
  %229 = vmatpush2.msra.mxu0 0.0
  %230 = vmatprep.subr.mxu0 0.0
  %231 = vmatpush2.msra.mxu0 0.0
  %232 = vmatprep.subr.mxu0 0.0
  %233 = vmatpush2.msra.mxu0 0.0
  %234 = vmatprep.subr.mxu0 0.0
  %235 = vmatpush2.msra.mxu0 0.0
  %236 = vmatprep.subr.mxu0 0.0
  %237 = vmatpush2.msra.mxu0 0.0
  %238 = vmatprep.subr.mxu0 0.0
  %239 = vmatpush2.msra.mxu0 0.0
  %240 = vmatprep.subr.mxu0 0.0
  %241 = vmatpush2.msra.mxu0 0.0
  %242 = vmatprep.subr.mxu0 0.0
  %243 = vmatpush2.msra.mxu0 0.0
  %244 = vmatprep.subr.mxu0 0.0
  %245 = vmatpush2.msra.mxu0 0.0
  %246 = vmatprep.mubr.f32.mxu0 0.0
  %247 = vmatmul.mubr.f32.gmra.mxu0 %v132
  %v248 = vpop.f32.mrf.mxu0
  %v249 = vadd.f32 0.0, %v248
  %v250 = vpop.f32.mrf.mxu0
  %v251 = vadd.f32 0.0, %v250
  %252 = vmatprep.mubr.f32.mxu0 0.0
  %253 = vmatmul.mubr.f32.gmra.mxu0 %v137
  %v254 = vpop.f32.mrf.mxu0
  %v255 = vadd.f32 0.0, %v254
  %v256 = vpop.f32.mrf.mxu0
  %v257 = vadd.f32 0.0, %v256
  %258 = vmatprep.mubr.f32.mxu0 0.0
  %259 = vmatmul.mubr.f32.gmra.mxu0 %v142
  %v260 = vpop.f32.mrf.mxu0
  %v261 = vadd.f32 0.0, %v260
  %v262 = vpop.f32.mrf.mxu0
  %v263 = vadd.f32 0.0, %v262
  %264 = vmatprep.mubr.f32.mxu0 0.0
  %265 = vmatmul.mubr.f32.gmra.mxu0 %v147
  %v266 = vpop.f32.mrf.mxu0
  %v267 = vadd.f32 0.0, %v266
  %v268 = vpop.f32.mrf.mxu0
  %v269 = vadd.f32 0.0, %v268
  %270 = vdwg.mxu0
  %v271 = vlaneseq
  %v272 = vshrl.u32 %v271, 7
  %v273 = vsub.s32 1, %v272
  %v274 = vrot.slane %v24, %v273
  %v275 = vadd.f32 %v249, %v274
  %v276 = vadd.f32 %v255, %v274
  %v277 = vadd.f32 %v261, %v274
  %v278 = vadd.f32 %v267, %v274
  %v279 = vlaneseq
  %v280 = vshrl.u32 %v279, 7
  %v281 = vsub.s32 2, %v280
  %v282 = vrot.slane %v24, %v281
  %284 = vrot.lane.b32.xlu0 %v282, 64
  %v285 = vpop.permute.xlu0 %284
  %v287 = vadd.f32 %v249, %v285
  %v288 = vadd.f32 %v255, %v285
  %v289 = vadd.f32 %v261, %v285
  %v290 = vadd.f32 %v267, %v285
  %v291 = vlaneseq
  %v292 = vshrl.u32 %v291, 7
  %v293 = vsub.s32 3, %v292
  %v294 = vrot.slane %v24, %v293
  %v295 = vadd.f32 %v251, %v294
  %v296 = vadd.f32 %v257, %v294
  %v297 = vadd.f32 %v263, %v294
  %v298 = vadd.f32 %v269, %v294
  %303 = vrot.lane.b32.xlu0 %v287, 64
  %v304 = vpop.permute.xlu0 %303
  %305 = vrot.lane.b32.xlu0 %v288, 64
  %v306 = vpop.permute.xlu0 %305
  %307 = vrot.lane.b32.xlu0 %v289, 64
  %v308 = vpop.permute.xlu0 %307
  %309 = vrot.lane.b32.xlu0 %v290, 64
  %v310 = vpop.permute.xlu0 %309
  %vm311 = vcmask 130048
  %v313 = vsel %vm311, %v275, 0
  %v316 = vsel %vm311, %v276, 0
  %v319 = vsel %vm311, %v277, 0
  %v322 = vsel %vm311, %v278, 0
  %v324 = vsel %vm311, %v304, 0
  %v326 = vsel %vm311, %v306, 0
  %v328 = vsel %vm311, %v308, 0
  %v330 = vsel %vm311, %v310, 0
  %332 = vmatprep.subr.mxu0 0.0
  %333 = vmatpush1.xpose.msra.mxu0 0.0
  %334 = vmatprep.subr.mxu0 0.0
  %335 = vmatpush1.xpose.msra.mxu0 0.0
  %336 = vmatprep.subr.mxu0 0.0
  %337 = vmatpush1.xpose.msra.mxu0 0.0
  %338 = vmatprep.subr.mxu0 0.0
  %339 = vmatpush1.xpose.msra.mxu0 0.0
  %340 = vmatprep.subr.mxu0 0.0
  %341 = vmatpush1.xpose.msra.mxu0 0.0
  %342 = vmatprep.subr.mxu0 0.0
  %343 = vmatpush1.xpose.msra.mxu0 0.0
  %344 = vmatprep.subr.mxu0 0.0
  %345 = vmatpush1.xpose.msra.mxu0 0.0
  %346 = vmatprep.subr.mxu0 0.0
  %347 = vmatpush1.xpose.msra.mxu0 0.0
  %348 = vmatprep.subr.mxu0 0.0
  %349 = vmatpush1.xpose.msra.mxu0 0.0
  %350 = vmatprep.subr.mxu0 0.0
  %351 = vmatpush1.xpose.msra.mxu0 0.0
  %352 = vmatprep.subr.mxu0 0.0
  %353 = vmatpush1.xpose.msra.mxu0 0.0
  %354 = vmatprep.subr.mxu0 0.0
  %355 = vmatpush1.xpose.msra.mxu0 0.0
  %356 = vmatprep.subr.mxu0 0.0
  %357 = vmatpush1.xpose.msra.mxu0 %v330
  %358 = vmatprep.subr.mxu0 0.0
  %359 = vmatpush1.xpose.msra.mxu0 %v328
  %360 = vmatprep.subr.mxu0 0.0
  %361 = vmatpush1.xpose.msra.mxu0 %v326
  %362 = vmatprep.subr.mxu0 0.0
  %363 = vmatpush1.xpose.msra.mxu0 %v324
  %364 = vmatprep.subr.mxu0 0.0
  %365 = vmatpush2.xpose.msra.mxu0 0.0
  %366 = vmatprep.subr.mxu0 0.0
  %367 = vmatpush2.xpose.msra.mxu0 0.0
  %368 = vmatprep.subr.mxu0 0.0
  %369 = vmatpush2.xpose.msra.mxu0 0.0
  %370 = vmatprep.subr.mxu0 0.0
  %371 = vmatpush2.xpose.msra.mxu0 0.0
  %372 = vmatprep.subr.mxu0 0.0
  %373 = vmatpush2.xpose.msra.mxu0 0.0
  %374 = vmatprep.subr.mxu0 0.0
  %375 = vmatpush2.xpose.msra.mxu0 0.0
  %376 = vmatprep.subr.mxu0 0.0
  %377 = vmatpush2.xpose.msra.mxu0 0.0
  %378 = vmatprep.subr.mxu0 0.0
  %379 = vmatpush2.xpose.msra.mxu0 0.0
  %380 = vmatprep.subr.mxu0 0.0
  %381 = vmatpush2.xpose.msra.mxu0 0.0
  %382 = vmatprep.subr.mxu0 0.0
  %383 = vmatpush2.xpose.msra.mxu0 0.0
  %384 = vmatprep.subr.mxu0 0.0
  %385 = vmatpush2.xpose.msra.mxu0 0.0
  %386 = vmatprep.subr.mxu0 0.0
  %387 = vmatpush2.xpose.msra.mxu0 0.0
  %388 = vmatprep.subr.mxu0 0.0
  %389 = vmatpush2.xpose.msra.mxu0 0.0
  %390 = vmatprep.subr.mxu0 0.0
  %391 = vmatpush2.xpose.msra.mxu0 0.0
  %392 = vmatprep.subr.mxu0 0.0
  %393 = vmatpush2.xpose.msra.mxu0 0.0
  %394 = vmatprep.subr.mxu0 0.0
  %395 = vmatpush2.xpose.msra.mxu0 0.0
  %396 = vmatprep.mubr.f32.mxu0 0.0
  %397 = vmatmul.mubr.f32.gmra.mxu0 %v313
  %v398 = vpop.f32.mrf.mxu0
  %v399 = vadd.f32 0.0, %v398
  %v400 = vpop.f32.mrf.mxu0
  %401 = vmatprep.mubr.f32.mxu0 0.0
  %402 = vmatmul.mubr.f32.gmra.mxu0 %v316
  %v403 = vpop.f32.mrf.mxu0
  %v404 = vadd.f32 0.0, %v403
  %v405 = vpop.f32.mrf.mxu0
  %406 = vmatprep.mubr.f32.mxu0 0.0
  %407 = vmatmul.mubr.f32.gmra.mxu0 %v319
  %v408 = vpop.f32.mrf.mxu0
  %v409 = vadd.f32 0.0, %v408
  %v410 = vpop.f32.mrf.mxu0
  %411 = vmatprep.mubr.f32.mxu0 0.0
  %412 = vmatmul.mubr.f32.gmra.mxu0 %v322
  %v413 = vpop.f32.mrf.mxu0
  %v414 = vadd.f32 0.0, %v413
  %v415 = vpop.f32.mrf.mxu0
  %416 = vdwg.mxu0
  %417 = vrot.lane.b32.xlu0 %v275, 112
  %v418 = vpop.permute.xlu0 %417
  %419 = vrot.lane.b32.xlu0 %v276, 112
  %v420 = vpop.permute.xlu0 %419
  %421 = vrot.lane.b32.xlu0 %v277, 112
  %v422 = vpop.permute.xlu0 %421
  %423 = vrot.lane.b32.xlu0 %v278, 112
  %v424 = vpop.permute.xlu0 %423
  %425 = vrot.lane.b32.xlu0 %v287, 48
  %v426 = vpop.permute.xlu0 %425
  %427 = vrot.lane.b32.xlu0 %v288, 48
  %v428 = vpop.permute.xlu0 %427
  %429 = vrot.lane.b32.xlu0 %v289, 48
  %v430 = vpop.permute.xlu0 %429
  %431 = vrot.lane.b32.xlu0 %v290, 48
  %v432 = vpop.permute.xlu0 %431
  %v433 = vsel %vm311, %v418, 0
  %v435 = vsel %vm311, %v420, 0
  %v437 = vsel %vm311, %v422, 0
  %v439 = vsel %vm311, %v424, 0
  %v441 = vsel %vm311, %v426, 0
  %v443 = vsel %vm311, %v428, 0
  %v445 = vsel %vm311, %v430, 0
  %v447 = vsel %vm311, %v432, 0
  %449 = vmatprep.subr.mxu0 0.0
  %450 = vmatpush1.xpose.msra.mxu0 0.0
  %451 = vmatprep.subr.mxu0 0.0
  %452 = vmatpush1.xpose.msra.mxu0 0.0
  %453 = vmatprep.subr.mxu0 0.0
  %454 = vmatpush1.xpose.msra.mxu0 0.0
  %455 = vmatprep.subr.mxu0 0.0
  %456 = vmatpush1.xpose.msra.mxu0 0.0
  %457 = vmatprep.subr.mxu0 0.0
  %458 = vmatpush1.xpose.msra.mxu0 0.0
  %459 = vmatprep.subr.mxu0 0.0
  %460 = vmatpush1.xpose.msra.mxu0 0.0
  %461 = vmatprep.subr.mxu0 0.0
  %462 = vmatpush1.xpose.msra.mxu0 0.0
  %463 = vmatprep.subr.mxu0 0.0
  %464 = vmatpush1.xpose.msra.mxu0 0.0
  %465 = vmatprep.subr.mxu0 0.0
  %466 = vmatpush1.xpose.msra.mxu0 0.0
  %467 = vmatprep.subr.mxu0 0.0
  %468 = vmatpush1.xpose.msra.mxu0 0.0
  %469 = vmatprep.subr.mxu0 0.0
  %470 = vmatpush1.xpose.msra.mxu0 0.0
  %471 = vmatprep.subr.mxu0 0.0
  %472 = vmatpush1.xpose.msra.mxu0 0.0
  %473 = vmatprep.subr.mxu0 0.0
  %474 = vmatpush1.xpose.msra.mxu0 %v447
  %475 = vmatprep.subr.mxu0 0.0
  %476 = vmatpush1.xpose.msra.mxu0 %v445
  %477 = vmatprep.subr.mxu0 0.0
  %478 = vmatpush1.xpose.msra.mxu0 %v443
  %479 = vmatprep.subr.mxu0 0.0
  %480 = vmatpush1.xpose.msra.mxu0 %v441
  %481 = vmatprep.subr.mxu0 0.0
  %482 = vmatpush2.xpose.msra.mxu0 0.0
  %483 = vmatprep.subr.mxu0 0.0
  %484 = vmatpush2.xpose.msra.mxu0 0.0
  %485 = vmatprep.subr.mxu0 0.0
  %486 = vmatpush2.xpose.msra.mxu0 0.0
  %487 = vmatprep.subr.mxu0 0.0
  %488 = vmatpush2.xpose.msra.mxu0 0.0
  %489 = vmatprep.subr.mxu0 0.0
  %490 = vmatpush2.xpose.msra.mxu0 0.0
  %491 = vmatprep.subr.mxu0 0.0
  %492 = vmatpush2.xpose.msra.mxu0 0.0
  %493 = vmatprep.subr.mxu0 0.0
  %494 = vmatpush2.xpose.msra.mxu0 0.0
  %495 = vmatprep.subr.mxu0 0.0
  %496 = vmatpush2.xpose.msra.mxu0 0.0
  %497 = vmatprep.subr.mxu0 0.0
  %498 = vmatpush2.xpose.msra.mxu0 0.0
  %499 = vmatprep.subr.mxu0 0.0
  %500 = vmatpush2.xpose.msra.mxu0 0.0
  %501 = vmatprep.subr.mxu0 0.0
  %502 = vmatpush2.xpose.msra.mxu0 0.0
  %503 = vmatprep.subr.mxu0 0.0
  %504 = vmatpush2.xpose.msra.mxu0 0.0
  %505 = vmatprep.subr.mxu0 0.0
  %506 = vmatpush2.xpose.msra.mxu0 0.0
  %507 = vmatprep.subr.mxu0 0.0
  %508 = vmatpush2.xpose.msra.mxu0 0.0
  %509 = vmatprep.subr.mxu0 0.0
  %510 = vmatpush2.xpose.msra.mxu0 0.0
  %511 = vmatprep.subr.mxu0 0.0
  %512 = vmatpush2.xpose.msra.mxu0 0.0
  %513 = vmatprep.mubr.f32.mxu0 0.0
  %514 = vmatmul.mubr.f32.gmra.mxu0 %v433
  %v515 = vpop.f32.mrf.mxu0
  %v516 = vadd.f32 0.0, %v515
  %v517 = vpop.f32.mrf.mxu0
  %518 = vmatprep.mubr.f32.mxu0 0.0
  %519 = vmatmul.mubr.f32.gmra.mxu0 %v435
  %v520 = vpop.f32.mrf.mxu0
  %v521 = vadd.f32 0.0, %v520
  %v522 = vpop.f32.mrf.mxu0
  %523 = vmatprep.mubr.f32.mxu0 0.0
  %524 = vmatmul.mubr.f32.gmra.mxu0 %v437
  %v525 = vpop.f32.mrf.mxu0
  %v526 = vadd.f32 0.0, %v525
  %v527 = vpop.f32.mrf.mxu0
  %528 = vmatprep.mubr.f32.mxu0 0.0
  %529 = vmatmul.mubr.f32.gmra.mxu0 %v439
  %v530 = vpop.f32.mrf.mxu0
  %v531 = vadd.f32 0.0, %v530
  %v532 = vpop.f32.mrf.mxu0
  %533 = vdwg.mxu0
  %534 = vrot.lane.b32.xlu0 %v275, 96
  %v535 = vpop.permute.xlu0 %534
  %536 = vrot.lane.b32.xlu0 %v276, 96
  %v537 = vpop.permute.xlu0 %536
  %538 = vrot.lane.b32.xlu0 %v277, 96
  %v539 = vpop.permute.xlu0 %538
  %540 = vrot.lane.b32.xlu0 %v278, 96
  %v541 = vpop.permute.xlu0 %540
  %542 = vrot.lane.b32.xlu0 %v287, 32
  %v543 = vpop.permute.xlu0 %542
  %544 = vrot.lane.b32.xlu0 %v288, 32
  %v545 = vpop.permute.xlu0 %544
  %546 = vrot.lane.b32.xlu0 %v289, 32
  %v547 = vpop.permute.xlu0 %546
  %548 = vrot.lane.b32.xlu0 %v290, 32
  %v549 = vpop.permute.xlu0 %548
  %v550 = vsel %vm311, %v535, 0
  %v552 = vsel %vm311, %v537, 0
  %v554 = vsel %vm311, %v539, 0
  %v556 = vsel %vm311, %v541, 0
  %v558 = vsel %vm311, %v543, 0
  %v560 = vsel %vm311, %v545, 0
  %v562 = vsel %vm311, %v547, 0
  %v564 = vsel %vm311, %v549, 0
  %566 = vmatprep.subr.mxu0 0.0
  %567 = vmatpush1.xpose.msra.mxu0 0.0
  %568 = vmatprep.subr.mxu0 0.0
  %569 = vmatpush1.xpose.msra.mxu0 0.0
  %570 = vmatprep.subr.mxu0 0.0
  %571 = vmatpush1.xpose.msra.mxu0 0.0
  %572 = vmatprep.subr.mxu0 0.0
  %573 = vmatpush1.xpose.msra.mxu0 0.0
  %574 = vmatprep.subr.mxu0 0.0
  %575 = vmatpush1.xpose.msra.mxu0 0.0
  %576 = vmatprep.subr.mxu0 0.0
  %577 = vmatpush1.xpose.msra.mxu0 0.0
  %578 = vmatprep.subr.mxu0 0.0
  %579 = vmatpush1.xpose.msra.mxu0 0.0
  %580 = vmatprep.subr.mxu0 0.0
  %581 = vmatpush1.xpose.msra.mxu0 0.0
  %582 = vmatprep.subr.mxu0 0.0
  %583 = vmatpush1.xpose.msra.mxu0 0.0
  %584 = vmatprep.subr.mxu0 0.0
  %585 = vmatpush1.xpose.msra.mxu0 0.0
  %586 = vmatprep.subr.mxu0 0.0
  %587 = vmatpush1.xpose.msra.mxu0 0.0
  %588 = vmatprep.subr.mxu0 0.0
  %589 = vmatpush1.xpose.msra.mxu0 0.0
  %590 = vmatprep.subr.mxu0 0.0
  %591 = vmatpush1.xpose.msra.mxu0 %v564
  %592 = vmatprep.subr.mxu0 0.0
  %593 = vmatpush1.xpose.msra.mxu0 %v562
  %594 = vmatprep.subr.mxu0 0.0
  %595 = vmatpush1.xpose.msra.mxu0 %v560
  %596 = vmatprep.subr.mxu0 0.0
  %597 = vmatpush1.xpose.msra.mxu0 %v558
  %598 = vmatprep.subr.mxu0 0.0
  %599 = vmatpush2.xpose.msra.mxu0 0.0
  %600 = vmatprep.subr.mxu0 0.0
  %601 = vmatpush2.xpose.msra.mxu0 0.0
  %602 = vmatprep.subr.mxu0 0.0
  %603 = vmatpush2.xpose.msra.mxu0 0.0
  %604 = vmatprep.subr.mxu0 0.0
  %605 = vmatpush2.xpose.msra.mxu0 0.0
  %606 = vmatprep.subr.mxu0 0.0
  %607 = vmatpush2.xpose.msra.mxu0 0.0
  %608 = vmatprep.subr.mxu0 0.0
  %609 = vmatpush2.xpose.msra.mxu0 0.0
  %610 = vmatprep.subr.mxu0 0.0
  %611 = vmatpush2.xpose.msra.mxu0 0.0
  %612 = vmatprep.subr.mxu0 0.0
  %613 = vmatpush2.xpose.msra.mxu0 0.0
  %614 = vmatprep.subr.mxu0 0.0
  %615 = vmatpush2.xpose.msra.mxu0 0.0
  %616 = vmatprep.subr.mxu0 0.0
  %617 = vmatpush2.xpose.msra.mxu0 0.0
  %618 = vmatprep.subr.mxu0 0.0
  %619 = vmatpush2.xpose.msra.mxu0 0.0
  %620 = vmatprep.subr.mxu0 0.0
  %621 = vmatpush2.xpose.msra.mxu0 0.0
  %622 = vmatprep.subr.mxu0 0.0
  %623 = vmatpush2.xpose.msra.mxu0 0.0
  %624 = vmatprep.subr.mxu0 0.0
  %625 = vmatpush2.xpose.msra.mxu0 0.0
  %626 = vmatprep.subr.mxu0 0.0
  %627 = vmatpush2.xpose.msra.mxu0 0.0
  %628 = vmatprep.subr.mxu0 0.0
  %629 = vmatpush2.xpose.msra.mxu0 0.0
  %630 = vmatprep.mubr.f32.mxu0 0.0
  %631 = vmatmul.mubr.f32.gmra.mxu0 %v550
  %v632 = vpop.f32.mrf.mxu0
  %v633 = vadd.f32 0.0, %v632
  %v634 = vpop.f32.mrf.mxu0
  %635 = vmatprep.mubr.f32.mxu0 0.0
  %636 = vmatmul.mubr.f32.gmra.mxu0 %v552
  %v637 = vpop.f32.mrf.mxu0
  %v638 = vadd.f32 0.0, %v637
  %v639 = vpop.f32.mrf.mxu0
  %640 = vmatprep.mubr.f32.mxu0 0.0
  %641 = vmatmul.mubr.f32.gmra.mxu0 %v554
  %v642 = vpop.f32.mrf.mxu0
  %v643 = vadd.f32 0.0, %v642
  %v644 = vpop.f32.mrf.mxu0
  %645 = vmatprep.mubr.f32.mxu0 0.0
  %646 = vmatmul.mubr.f32.gmra.mxu0 %v556
  %v647 = vpop.f32.mrf.mxu0
  %v648 = vadd.f32 0.0, %v647
  %v649 = vpop.f32.mrf.mxu0
  %650 = vdwg.mxu0
  %651 = vrot.lane.b32.xlu0 %v275, 80
  %v652 = vpop.permute.xlu0 %651
  %653 = vrot.lane.b32.xlu0 %v276, 80
  %v654 = vpop.permute.xlu0 %653
  %655 = vrot.lane.b32.xlu0 %v277, 80
  %v656 = vpop.permute.xlu0 %655
  %657 = vrot.lane.b32.xlu0 %v278, 80
  %v658 = vpop.permute.xlu0 %657
  %659 = vrot.lane.b32.xlu0 %v287, 16
  %v660 = vpop.permute.xlu0 %659
  %661 = vrot.lane.b32.xlu0 %v288, 16
  %v662 = vpop.permute.xlu0 %661
  %663 = vrot.lane.b32.xlu0 %v289, 16
  %v664 = vpop.permute.xlu0 %663
  %665 = vrot.lane.b32.xlu0 %v290, 16
  %v666 = vpop.permute.xlu0 %665
  %v667 = vsel %vm311, %v652, 0
  %v669 = vsel %vm311, %v654, 0
  %v671 = vsel %vm311, %v656, 0
  %v673 = vsel %vm311, %v658, 0
  %v675 = vsel %vm311, %v660, 0
  %v677 = vsel %vm311, %v662, 0
  %v679 = vsel %vm311, %v664, 0
  %v681 = vsel %vm311, %v666, 0
  %683 = vmatprep.subr.mxu0 0.0
  %684 = vmatpush1.xpose.msra.mxu0 0.0
  %685 = vmatprep.subr.mxu0 0.0
  %686 = vmatpush1.xpose.msra.mxu0 0.0
  %687 = vmatprep.subr.mxu0 0.0
  %688 = vmatpush1.xpose.msra.mxu0 0.0
  %689 = vmatprep.subr.mxu0 0.0
  %690 = vmatpush1.xpose.msra.mxu0 0.0
  %691 = vmatprep.subr.mxu0 0.0
  %692 = vmatpush1.xpose.msra.mxu0 0.0
  %693 = vmatprep.subr.mxu0 0.0
  %694 = vmatpush1.xpose.msra.mxu0 0.0
  %695 = vmatprep.subr.mxu0 0.0
  %696 = vmatpush1.xpose.msra.mxu0 0.0
  %697 = vmatprep.subr.mxu0 0.0
  %698 = vmatpush1.xpose.msra.mxu0 0.0
  %699 = vmatprep.subr.mxu0 0.0
  %700 = vmatpush1.xpose.msra.mxu0 0.0
  %701 = vmatprep.subr.mxu0 0.0
  %702 = vmatpush1.xpose.msra.mxu0 0.0
  %703 = vmatprep.subr.mxu0 0.0
  %704 = vmatpush1.xpose.msra.mxu0 0.0
  %705 = vmatprep.subr.mxu0 0.0
  %706 = vmatpush1.xpose.msra.mxu0 0.0
  %707 = vmatprep.subr.mxu0 0.0
  %708 = vmatpush1.xpose.msra.mxu0 %v681
  %709 = vmatprep.subr.mxu0 0.0
  %710 = vmatpush1.xpose.msra.mxu0 %v679
  %711 = vmatprep.subr.mxu0 0.0
  %712 = vmatpush1.xpose.msra.mxu0 %v677
  %713 = vmatprep.subr.mxu0 0.0
  %714 = vmatpush1.xpose.msra.mxu0 %v675
  %715 = vmatprep.subr.mxu0 0.0
  %716 = vmatpush2.xpose.msra.mxu0 0.0
  %717 = vmatprep.subr.mxu0 0.0
  %718 = vmatpush2.xpose.msra.mxu0 0.0
  %719 = vmatprep.subr.mxu0 0.0
  %720 = vmatpush2.xpose.msra.mxu0 0.0
  %721 = vmatprep.subr.mxu0 0.0
  %722 = vmatpush2.xpose.msra.mxu0 0.0
  %723 = vmatprep.subr.mxu0 0.0
  %724 = vmatpush2.xpose.msra.mxu0 0.0
  %725 = vmatprep.subr.mxu0 0.0
  %726 = vmatpush2.xpose.msra.mxu0 0.0
  %727 = vmatprep.subr.mxu0 0.0
  %728 = vmatpush2.xpose.msra.mxu0 0.0
  %729 = vmatprep.subr.mxu0 0.0
  %730 = vmatpush2.xpose.msra.mxu0 0.0
  %731 = vmatprep.subr.mxu0 0.0
  %732 = vmatpush2.xpose.msra.mxu0 0.0
  %733 = vmatprep.subr.mxu0 0.0
  %734 = vmatpush2.xpose.msra.mxu0 0.0
  %735 = vmatprep.subr.mxu0 0.0
  %736 = vmatpush2.xpose.msra.mxu0 0.0
  %737 = vmatprep.subr.mxu0 0.0
  %738 = vmatpush2.xpose.msra.mxu0 0.0
  %739 = vmatprep.subr.mxu0 0.0
  %740 = vmatpush2.xpose.msra.mxu0 0.0
  %741 = vmatprep.subr.mxu0 0.0
  %742 = vmatpush2.xpose.msra.mxu0 0.0
  %743 = vmatprep.subr.mxu0 0.0
  %744 = vmatpush2.xpose.msra.mxu0 0.0
  %745 = vmatprep.subr.mxu0 0.0
  %746 = vmatpush2.xpose.msra.mxu0 0.0
  %747 = vmatprep.mubr.f32.mxu0 0.0
  %748 = vmatmul.mubr.f32.gmra.mxu0 %v667
  %v749 = vpop.f32.mrf.mxu0
  %v750 = vadd.f32 0.0, %v749
  %v751 = vpop.f32.mrf.mxu0
  %752 = vmatprep.mubr.f32.mxu0 0.0
  %753 = vmatmul.mubr.f32.gmra.mxu0 %v669
  %v754 = vpop.f32.mrf.mxu0
  %v755 = vadd.f32 0.0, %v754
  %v756 = vpop.f32.mrf.mxu0
  %757 = vmatprep.mubr.f32.mxu0 0.0
  %758 = vmatmul.mubr.f32.gmra.mxu0 %v671
  %v759 = vpop.f32.mrf.mxu0
  %v760 = vadd.f32 0.0, %v759
  %v761 = vpop.f32.mrf.mxu0
  %762 = vmatprep.mubr.f32.mxu0 0.0
  %763 = vmatmul.mubr.f32.gmra.mxu0 %v673
  %v764 = vpop.f32.mrf.mxu0
  %v765 = vadd.f32 0.0, %v764
  %v766 = vpop.f32.mrf.mxu0
  %767 = vdwg.mxu0
  %v768 = vmul.f32 %v399, 0.25
  %v769 = vmul.f32 %v404, 0.25
  %v770 = vmul.f32 %v409, 0.25
  %v771 = vmul.f32 %v414, 0.25
  %v772 = vmul.f32 %v516, 0.25
  %v773 = vmul.f32 %v521, 0.25
  %v774 = vmul.f32 %v526, 0.25
  %v775 = vmul.f32 %v531, 0.25
  %v776 = vmul.f32 %v633, 0.25
  %v777 = vmul.f32 %v638, 0.25
  %v778 = vmul.f32 %v643, 0.25
  %v779 = vmul.f32 %v648, 0.25
  %v780 = vmul.f32 %v750, 0.25
  %v781 = vmul.f32 %v755, 0.25
  %v782 = vmul.f32 %v760, 0.25
  %v783 = vmul.f32 %v765, 0.25
  %vm784 = vcmask 261120
  %v785 = vsel %vm784, %v768, -inf
  %v786 = vsel %vm784, %v772, -inf
  %v787 = vmax.f32 %v785, %v786
  %v788 = vsel %vm784, %v776, -inf
  %v789 = vmax.f32 %v787, %v788
  %v790 = vsel %vm784, %v780, -inf
  %v791 = vmax.f32 %v789, %v790
  %v792 = vsel %vm784, %v769, -inf
  %v793 = vsel %vm784, %v773, -inf
  %v794 = vmax.f32 %v792, %v793
  %v795 = vsel %vm784, %v777, -inf
  %v796 = vmax.f32 %v794, %v795
  %v797 = vsel %vm784, %v781, -inf
  %v798 = vmax.f32 %v796, %v797
  %v799 = vsel %vm784, %v770, -inf
  %v800 = vsel %vm784, %v774, -inf
  %v801 = vmax.f32 %v799, %v800
  %v802 = vsel %vm784, %v778, -inf
  %v803 = vmax.f32 %v801, %v802
  %v804 = vsel %vm784, %v782, -inf
  %v805 = vmax.f32 %v803, %v804
  %v806 = vsel %vm784, %v771, -inf
  %v807 = vsel %vm784, %v775, -inf
  %v808 = vmax.f32 %v806, %v807
  %v809 = vsel %vm784, %v779, -inf
  %v810 = vmax.f32 %v808, %v809
  %v811 = vsel %vm784, %v783, -inf
  %v812 = vmax.f32 %v810, %v811
  %v813 = vsub.f32 %v768, %v791
  %v814 = vsub.f32 %v769, %v798
  %v815 = vsub.f32 %v770, %v805
  %v816 = vsub.f32 %v771, %v812
  %v817 = vsub.f32 %v772, %v791
  %v818 = vsub.f32 %v773, %v798
  %v819 = vsub.f32 %v774, %v805
  %v820 = vsub.f32 %v775, %v812
  %v821 = vsub.f32 %v776, %v791
  %v822 = vsub.f32 %v777, %v798
  %v823 = vsub.f32 %v778, %v805
  %v824 = vsub.f32 %v779, %v812
  %v825 = vsub.f32 %v780, %v791
  %v826 = vsub.f32 %v781, %v798
  %v827 = vsub.f32 %v782, %v805
  %v828 = vsub.f32 %v783, %v812
  %v829 = vmul.f32 %v813, 1.442695
  %v830 = vpow.pop %v829
  %v831 = vmul.f32 %v814, 1.442695
  %v832 = vpow.pop %v831
  %v833 = vmul.f32 %v815, 1.442695
  %v834 = vpow.pop %v833
  %v835 = vmul.f32 %v816, 1.442695
  %v836 = vpow.pop %v835
  %v837 = vmul.f32 %v817, 1.442695
  %v838 = vpow.pop %v837
  %v839 = vmul.f32 %v818, 1.442695
  %v840 = vpow.pop %v839
  %v841 = vmul.f32 %v819, 1.442695
  %v842 = vpow.pop %v841
  %v843 = vmul.f32 %v820, 1.442695
  %v844 = vpow.pop %v843
  %v845 = vmul.f32 %v821, 1.442695
  %v846 = vpow.pop %v845
  %v847 = vmul.f32 %v822, 1.442695
  %v848 = vpow.pop %v847
  %v849 = vmul.f32 %v823, 1.442695
  %v850 = vpow.pop %v849
  %v851 = vmul.f32 %v824, 1.442695
  %v852 = vpow.pop %v851
  %v853 = vmul.f32 %v825, 1.442695
  %v854 = vpow.pop %v853
  %v855 = vmul.f32 %v826, 1.442695
  %v856 = vpow.pop %v855
  %v857 = vmul.f32 %v827, 1.442695
  %v858 = vpow.pop %v857
  %v859 = vmul.f32 %v828, 1.442695
  %v860 = vpow.pop %v859
  %v861 = vsel %vm784, %v830, 0.0
  %v862 = vsel %vm784, %v838, 0.0
  %v863 = vadd.f32 %v861, %v862
  %v864 = vsel %vm784, %v846, 0.0
  %v865 = vadd.f32 %v863, %v864
  %v866 = vsel %vm784, %v854, 0.0
  %v867 = vadd.f32 %v865, %v866
  %v868 = vsel %vm784, %v832, 0.0
  %v869 = vsel %vm784, %v840, 0.0
  %v870 = vadd.f32 %v868, %v869
  %v871 = vsel %vm784, %v848, 0.0
  %v872 = vadd.f32 %v870, %v871
  %v873 = vsel %vm784, %v856, 0.0
  %v874 = vadd.f32 %v872, %v873
  %v875 = vsel %vm784, %v834, 0.0
  %v876 = vsel %vm784, %v842, 0.0
  %v877 = vadd.f32 %v875, %v876
  %v878 = vsel %vm784, %v850, 0.0
  %v879 = vadd.f32 %v877, %v878
  %v880 = vsel %vm784, %v858, 0.0
  %v881 = vadd.f32 %v879, %v880
  %v882 = vsel %vm784, %v836, 0.0
  %v883 = vsel %vm784, %v844, 0.0
  %v884 = vadd.f32 %v882, %v883
  %v885 = vsel %vm784, %v852, 0.0
  %v886 = vadd.f32 %v884, %v885
  %v887 = vsel %vm784, %v860, 0.0
  %v888 = vadd.f32 %v886, %v887
  %v889 = vrcp.pop %v867
  %v890 = vmul.f32 %v830, %v889
  %v891 = vrcp.pop %v874
  %v892 = vmul.f32 %v832, %v891
  %v893 = vrcp.pop %v881
  %v894 = vmul.f32 %v834, %v893
  %v895 = vrcp.pop %v888
  %v896 = vmul.f32 %v836, %v895
  %v897 = vmul.f32 %v838, %v889
  %v898 = vmul.f32 %v840, %v891
  %v899 = vmul.f32 %v842, %v893
  %v900 = vmul.f32 %v844, %v895
  %v901 = vmul.f32 %v846, %v889
  %v902 = vmul.f32 %v848, %v891
  %v903 = vmul.f32 %v850, %v893
  %v904 = vmul.f32 %v852, %v895
  %v905 = vmul.f32 %v854, %v889
  %v906 = vmul.f32 %v856, %v891
  %v907 = vmul.f32 %v858, %v893
  %v908 = vmul.f32 %v860, %v895
  %v909 = vsel %vm36, 1, 0
  %v910 = vsel %vm37, 1, 0
  %v911 = vsel %vm38, 1, 0
  %v912 = vsel %vm39, 1, 0
  %vm913 = vcmp.eq.s32.totalorder %v909, 1
  %vm914 = vcmp.eq.s32.totalorder %v910, 1
  %vm915 = vcmp.eq.s32.totalorder %v911, 1
  %vm916 = vcmp.eq.s32.totalorder %v912, 1
  %v917 = vsel %vm913, 0.25, %v890
  %v918 = vsel %vm914, 0.25, %v892
  %v919 = vsel %vm915, 0.25, %v894
  %v920 = vsel %vm916, 0.25, %v896
  %v921 = vsel %vm913, 0.25, %v897
  %v922 = vsel %vm914, 0.25, %v898
  %v923 = vsel %vm915, 0.25, %v899
  %v924 = vsel %vm916, 0.25, %v900
  %v925 = vsel %vm913, 0.25, %v901
  %v926 = vsel %vm914, 0.25, %v902
  %v927 = vsel %vm915, 0.25, %v903
  %v928 = vsel %vm916, 0.25, %v904
  %v929 = vsel %vm913, 0.25, %v905
  %v930 = vsel %vm914, 0.25, %v906
  %v931 = vsel %vm915, 0.25, %v907
  %v932 = vsel %vm916, 0.25, %v908
  %v934 = vsel %vm784, %v917, 0
  %v937 = vsel %vm784, %v918, 0
  %v940 = vsel %vm784, %v919, 0
  %v943 = vsel %vm784, %v920, 0
  %945 = vmatprep.subr.mxu0 0.0
  %946 = vmatpush1.msra.mxu0 0.0
  %947 = vmatprep.subr.mxu0 0.0
  %948 = vmatpush1.msra.mxu0 0.0
  %949 = vmatprep.subr.mxu0 0.0
  %950 = vmatpush1.msra.mxu0 0.0
  %951 = vmatprep.subr.mxu0 0.0
  %952 = vmatpush1.msra.mxu0 0.0
  %953 = vmatprep.subr.mxu0 0.0
  %954 = vmatpush1.msra.mxu0 0.0
  %955 = vmatprep.subr.mxu0 0.0
  %956 = vmatpush1.msra.mxu0 0.0
  %957 = vmatprep.subr.mxu0 0.0
  %958 = vmatpush1.msra.mxu0 0.0
  %959 = vmatprep.subr.mxu0 0.0
  %960 = vmatpush1.msra.mxu0 0.0
  %961 = vmatprep.subr.mxu0 0.0
  %962 = vmatpush1.msra.mxu0 0.0
  %963 = vmatprep.subr.mxu0 0.0
  %964 = vmatpush1.msra.mxu0 0.0
  %965 = vmatprep.subr.mxu0 0.0
  %966 = vmatpush1.msra.mxu0 0.0
  %967 = vmatprep.subr.mxu0 0.0
  %968 = vmatpush1.msra.mxu0 0.0
  %969 = vmatprep.subr.mxu0 0.0
  %970 = vmatpush1.msra.mxu0 %v298
  %971 = vmatprep.subr.mxu0 0.0
  %972 = vmatpush1.msra.mxu0 %v297
  %973 = vmatprep.subr.mxu0 0.0
  %974 = vmatpush1.msra.mxu0 %v296
  %975 = vmatprep.subr.mxu0 0.0
  %976 = vmatpush1.msra.mxu0 %v295
  %977 = vmatprep.subr.mxu0 0.0
  %978 = vmatpush2.msra.mxu0 0.0
  %979 = vmatprep.subr.mxu0 0.0
  %980 = vmatpush2.msra.mxu0 0.0
  %981 = vmatprep.subr.mxu0 0.0
  %982 = vmatpush2.msra.mxu0 0.0
  %983 = vmatprep.subr.mxu0 0.0
  %984 = vmatpush2.msra.mxu0 0.0
  %985 = vmatprep.subr.mxu0 0.0
  %986 = vmatpush2.msra.mxu0 0.0
  %987 = vmatprep.subr.mxu0 0.0
  %988 = vmatpush2.msra.mxu0 0.0
  %989 = vmatprep.subr.mxu0 0.0
  %990 = vmatpush2.msra.mxu0 0.0
  %991 = vmatprep.subr.mxu0 0.0
  %992 = vmatpush2.msra.mxu0 0.0
  %993 = vmatprep.subr.mxu0 0.0
  %994 = vmatpush2.msra.mxu0 0.0
  %995 = vmatprep.subr.mxu0 0.0
  %996 = vmatpush2.msra.mxu0 0.0
  %997 = vmatprep.subr.mxu0 0.0
  %998 = vmatpush2.msra.mxu0 0.0
  %999 = vmatprep.subr.mxu0 0.0
  %1000 = vmatpush2.msra.mxu0 0.0
  %1001 = vmatprep.subr.mxu0 0.0
  %1002 = vmatpush2.msra.mxu0 0.0
  %1003 = vmatprep.subr.mxu0 0.0
  %1004 = vmatpush2.msra.mxu0 0.0
  %1005 = vmatprep.subr.mxu0 0.0
  %1006 = vmatpush2.msra.mxu0 0.0
  %1007 = vmatprep.subr.mxu0 0.0
  %1008 = vmatpush2.msra.mxu0 0.0
  %1009 = vmatprep.mubr.f32.mxu0 0.0
  %1010 = vmatmul.mubr.f32.gmra.mxu0 %v934
  %v1011 = vpop.f32.mrf.mxu0
  %v1012 = vadd.f32 0.0, %v1011
  %v1013 = vpop.f32.mrf.mxu0
  %1014 = vmatprep.mubr.f32.mxu0 0.0
  %1015 = vmatmul.mubr.f32.gmra.mxu0 %v937
  %v1016 = vpop.f32.mrf.mxu0
  %v1017 = vadd.f32 0.0, %v1016
  %v1018 = vpop.f32.mrf.mxu0
  %1019 = vmatprep.mubr.f32.mxu0 0.0
  %1020 = vmatmul.mubr.f32.gmra.mxu0 %v940
  %v1021 = vpop.f32.mrf.mxu0
  %v1022 = vadd.f32 0.0, %v1021
  %v1023 = vpop.f32.mrf.mxu0
  %1024 = vmatprep.mubr.f32.mxu0 0.0
  %1025 = vmatmul.mubr.f32.gmra.mxu0 %v943
  %v1026 = vpop.f32.mrf.mxu0
  %v1027 = vadd.f32 0.0, %v1026
  %v1028 = vpop.f32.mrf.mxu0
  %1029 = vdwg.mxu0
  %1034 = vrot.lane.b32.xlu0 %v295, 112
  %v1035 = vpop.permute.xlu0 %1034
  %1036 = vrot.lane.b32.xlu0 %v296, 112
  %v1037 = vpop.permute.xlu0 %1036
  %1038 = vrot.lane.b32.xlu0 %v297, 112
  %v1039 = vpop.permute.xlu0 %1038
  %1040 = vrot.lane.b32.xlu0 %v298, 112
  %v1041 = vpop.permute.xlu0 %1040
  %v1047 = vsel %vm784, %v921, 0
  %v1050 = vsel %vm784, %v922, 0
  %v1053 = vsel %vm784, %v923, 0
  %v1056 = vsel %vm784, %v924, 0
  %1058 = vmatprep.subr.mxu0 0.0
  %1059 = vmatpush1.msra.mxu0 0.0
  %1060 = vmatprep.subr.mxu0 0.0
  %1061 = vmatpush1.msra.mxu0 0.0
  %1062 = vmatprep.subr.mxu0 0.0
  %1063 = vmatpush1.msra.mxu0 0.0
  %1064 = vmatprep.subr.mxu0 0.0
  %1065 = vmatpush1.msra.mxu0 0.0
  %1066 = vmatprep.subr.mxu0 0.0
  %1067 = vmatpush1.msra.mxu0 0.0
  %1068 = vmatprep.subr.mxu0 0.0
  %1069 = vmatpush1.msra.mxu0 0.0
  %1070 = vmatprep.subr.mxu0 0.0
  %1071 = vmatpush1.msra.mxu0 0.0
  %1072 = vmatprep.subr.mxu0 0.0
  %1073 = vmatpush1.msra.mxu0 0.0
  %1074 = vmatprep.subr.mxu0 0.0
  %1075 = vmatpush1.msra.mxu0 0.0
  %1076 = vmatprep.subr.mxu0 0.0
  %1077 = vmatpush1.msra.mxu0 0.0
  %1078 = vmatprep.subr.mxu0 0.0
  %1079 = vmatpush1.msra.mxu0 0.0
  %1080 = vmatprep.subr.mxu0 0.0
  %1081 = vmatpush1.msra.mxu0 0.0
  %1082 = vmatprep.subr.mxu0 0.0
  %1083 = vmatpush1.msra.mxu0 %v1041
  %1084 = vmatprep.subr.mxu0 0.0
  %1085 = vmatpush1.msra.mxu0 %v1039
  %1086 = vmatprep.subr.mxu0 0.0
  %1087 = vmatpush1.msra.mxu0 %v1037
  %1088 = vmatprep.subr.mxu0 0.0
  %1089 = vmatpush1.msra.mxu0 %v1035
  %1090 = vmatprep.subr.mxu0 0.0
  %1091 = vmatpush2.msra.mxu0 0.0
  %1092 = vmatprep.subr.mxu0 0.0
  %1093 = vmatpush2.msra.mxu0 0.0
  %1094 = vmatprep.subr.mxu0 0.0
  %1095 = vmatpush2.msra.mxu0 0.0
  %1096 = vmatprep.subr.mxu0 0.0
  %1097 = vmatpush2.msra.mxu0 0.0
  %1098 = vmatprep.subr.mxu0 0.0
  %1099 = vmatpush2.msra.mxu0 0.0
  %1100 = vmatprep.subr.mxu0 0.0
  %1101 = vmatpush2.msra.mxu0 0.0
  %1102 = vmatprep.subr.mxu0 0.0
  %1103 = vmatpush2.msra.mxu0 0.0
  %1104 = vmatprep.subr.mxu0 0.0
  %1105 = vmatpush2.msra.mxu0 0.0
  %1106 = vmatprep.subr.mxu0 0.0
  %1107 = vmatpush2.msra.mxu0 0.0
  %1108 = vmatprep.subr.mxu0 0.0
  %1109 = vmatpush2.msra.mxu0 0.0
  %1110 = vmatprep.subr.mxu0 0.0
  %1111 = vmatpush2.msra.mxu0 0.0
  %1112 = vmatprep.subr.mxu0 0.0
  %1113 = vmatpush2.msra.mxu0 0.0
  %1114 = vmatprep.subr.mxu0 0.0
  %1115 = vmatpush2.msra.mxu0 0.0
  %1116 = vmatprep.subr.mxu0 0.0
  %1117 = vmatpush2.msra.mxu0 0.0
  %1118 = vmatprep.subr.mxu0 0.0
  %1119 = vmatpush2.msra.mxu0 0.0
  %1120 = vmatprep.subr.mxu0 0.0
  %1121 = vmatpush2.msra.mxu0 0.0
  %1122 = vmatprep.mubr.f32.mxu0 0.0
  %1123 = vmatmul.mubr.f32.gmra.mxu0 %v1047
  %v1124 = vpop.f32.mrf.mxu0
  %v1125 = vadd.f32 0.0, %v1124
  %v1126 = vpop.f32.mrf.mxu0
  %1127 = vmatprep.mubr.f32.mxu0 0.0
  %1128 = vmatmul.mubr.f32.gmra.mxu0 %v1050
  %v1129 = vpop.f32.mrf.mxu0
  %v1130 = vadd.f32 0.0, %v1129
  %v1131 = vpop.f32.mrf.mxu0
  %1132 = vmatprep.mubr.f32.mxu0 0.0
  %1133 = vmatmul.mubr.f32.gmra.mxu0 %v1053
  %v1134 = vpop.f32.mrf.mxu0
  %v1135 = vadd.f32 0.0, %v1134
  %v1136 = vpop.f32.mrf.mxu0
  %1137 = vmatprep.mubr.f32.mxu0 0.0
  %1138 = vmatmul.mubr.f32.gmra.mxu0 %v1056
  %v1139 = vpop.f32.mrf.mxu0
  %v1140 = vadd.f32 0.0, %v1139
  %v1141 = vpop.f32.mrf.mxu0
  %1142 = vdwg.mxu0
  %1143 = vrot.lane.b32.xlu0 %v295, 96
  %v1144 = vpop.permute.xlu0 %1143
  %1145 = vrot.lane.b32.xlu0 %v296, 96
  %v1146 = vpop.permute.xlu0 %1145
  %1147 = vrot.lane.b32.xlu0 %v297, 96
  %v1148 = vpop.permute.xlu0 %1147
  %1149 = vrot.lane.b32.xlu0 %v298, 96
  %v1150 = vpop.permute.xlu0 %1149
  %v1156 = vsel %vm784, %v925, 0
  %v1159 = vsel %vm784, %v926, 0
  %v1162 = vsel %vm784, %v927, 0
  %v1165 = vsel %vm784, %v928, 0
  %1167 = vmatprep.subr.mxu0 0.0
  %1168 = vmatpush1.msra.mxu0 0.0
  %1169 = vmatprep.subr.mxu0 0.0
  %1170 = vmatpush1.msra.mxu0 0.0
  %1171 = vmatprep.subr.mxu0 0.0
  %1172 = vmatpush1.msra.mxu0 0.0
  %1173 = vmatprep.subr.mxu0 0.0
  %1174 = vmatpush1.msra.mxu0 0.0
  %1175 = vmatprep.subr.mxu0 0.0
  %1176 = vmatpush1.msra.mxu0 0.0
  %1177 = vmatprep.subr.mxu0 0.0
  %1178 = vmatpush1.msra.mxu0 0.0
  %1179 = vmatprep.subr.mxu0 0.0
  %1180 = vmatpush1.msra.mxu0 0.0
  %1181 = vmatprep.subr.mxu0 0.0
  %1182 = vmatpush1.msra.mxu0 0.0
  %1183 = vmatprep.subr.mxu0 0.0
  %1184 = vmatpush1.msra.mxu0 0.0
  %1185 = vmatprep.subr.mxu0 0.0
  %1186 = vmatpush1.msra.mxu0 0.0
  %1187 = vmatprep.subr.mxu0 0.0
  %1188 = vmatpush1.msra.mxu0 0.0
  %1189 = vmatprep.subr.mxu0 0.0
  %1190 = vmatpush1.msra.mxu0 0.0
  %1191 = vmatprep.subr.mxu0 0.0
  %1192 = vmatpush1.msra.mxu0 %v1150
  %1193 = vmatprep.subr.mxu0 0.0
  %1194 = vmatpush1.msra.mxu0 %v1148
  %1195 = vmatprep.subr.mxu0 0.0
  %1196 = vmatpush1.msra.mxu0 %v1146
  %1197 = vmatprep.subr.mxu0 0.0
  %1198 = vmatpush1.msra.mxu0 %v1144
  %1199 = vmatprep.subr.mxu0 0.0
  %1200 = vmatpush2.msra.mxu0 0.0
  %1201 = vmatprep.subr.mxu0 0.0
  %1202 = vmatpush2.msra.mxu0 0.0
  %1203 = vmatprep.subr.mxu0 0.0
  %1204 = vmatpush2.msra.mxu0 0.0
  %1205 = vmatprep.subr.mxu0 0.0
  %1206 = vmatpush2.msra.mxu0 0.0
  %1207 = vmatprep.subr.mxu0 0.0
  %1208 = vmatpush2.msra.mxu0 0.0
  %1209 = vmatprep.subr.mxu0 0.0
  %1210 = vmatpush2.msra.mxu0 0.0
  %1211 = vmatprep.subr.mxu0 0.0
  %1212 = vmatpush2.msra.mxu0 0.0
  %1213 = vmatprep.subr.mxu0 0.0
  %1214 = vmatpush2.msra.mxu0 0.0
  %1215 = vmatprep.subr.mxu0 0.0
  %1216 = vmatpush2.msra.mxu0 0.0
  %1217 = vmatprep.subr.mxu0 0.0
  %1218 = vmatpush2.msra.mxu0 0.0
  %1219 = vmatprep.subr.mxu0 0.0
  %1220 = vmatpush2.msra.mxu0 0.0
  %1221 = vmatprep.subr.mxu0 0.0
  %1222 = vmatpush2.msra.mxu0 0.0
  %1223 = vmatprep.subr.mxu0 0.0
  %1224 = vmatpush2.msra.mxu0 0.0
  %1225 = vmatprep.subr.mxu0 0.0
  %1226 = vmatpush2.msra.mxu0 0.0
  %1227 = vmatprep.subr.mxu0 0.0
  %1228 = vmatpush2.msra.mxu0 0.0
  %1229 = vmatprep.subr.mxu0 0.0
  %1230 = vmatpush2.msra.mxu0 0.0
  %1231 = vmatprep.mubr.f32.mxu0 0.0
  %1232 = vmatmul.mubr.f32.gmra.mxu0 %v1156
  %v1233 = vpop.f32.mrf.mxu0
  %v1234 = vadd.f32 0.0, %v1233
  %v1235 = vpop.f32.mrf.mxu0
  %1236 = vmatprep.mubr.f32.mxu0 0.0
  %1237 = vmatmul.mubr.f32.gmra.mxu0 %v1159
  %v1238 = vpop.f32.mrf.mxu0
  %v1239 = vadd.f32 0.0, %v1238
  %v1240 = vpop.f32.mrf.mxu0
  %1241 = vmatprep.mubr.f32.mxu0 0.0
  %1242 = vmatmul.mubr.f32.gmra.mxu0 %v1162
  %v1243 = vpop.f32.mrf.mxu0
  %v1244 = vadd.f32 0.0, %v1243
  %v1245 = vpop.f32.mrf.mxu0
  %1246 = vmatprep.mubr.f32.mxu0 0.0
  %1247 = vmatmul.mubr.f32.gmra.mxu0 %v1165
  %v1248 = vpop.f32.mrf.mxu0
  %v1249 = vadd.f32 0.0, %v1248
  %v1250 = vpop.f32.mrf.mxu0
  %1251 = vdwg.mxu0
  %1252 = vrot.lane.b32.xlu0 %v295, 80
  %v1253 = vpop.permute.xlu0 %1252
  %1254 = vrot.lane.b32.xlu0 %v296, 80
  %v1255 = vpop.permute.xlu0 %1254
  %1256 = vrot.lane.b32.xlu0 %v297, 80
  %v1257 = vpop.permute.xlu0 %1256
  %1258 = vrot.lane.b32.xlu0 %v298, 80
  %v1259 = vpop.permute.xlu0 %1258
  %v1265 = vsel %vm784, %v929, 0
  %v1268 = vsel %vm784, %v930, 0
  %v1271 = vsel %vm784, %v931, 0
  %v1274 = vsel %vm784, %v932, 0
  %1276 = vmatprep.subr.mxu0 0.0
  %1277 = vmatpush1.msra.mxu0 0.0
  %1278 = vmatprep.subr.mxu0 0.0
  %1279 = vmatpush1.msra.mxu0 0.0
  %1280 = vmatprep.subr.mxu0 0.0
  %1281 = vmatpush1.msra.mxu0 0.0
  %1282 = vmatprep.subr.mxu0 0.0
  %1283 = vmatpush1.msra.mxu0 0.0
  %1284 = vmatprep.subr.mxu0 0.0
  %1285 = vmatpush1.msra.mxu0 0.0
  %1286 = vmatprep.subr.mxu0 0.0
  %1287 = vmatpush1.msra.mxu0 0.0
  %1288 = vmatprep.subr.mxu0 0.0
  %1289 = vmatpush1.msra.mxu0 0.0
  %1290 = vmatprep.subr.mxu0 0.0
  %1291 = vmatpush1.msra.mxu0 0.0
  %1292 = vmatprep.subr.mxu0 0.0
  %1293 = vmatpush1.msra.mxu0 0.0
  %1294 = vmatprep.subr.mxu0 0.0
  %1295 = vmatpush1.msra.mxu0 0.0
  %1296 = vmatprep.subr.mxu0 0.0
  %1297 = vmatpush1.msra.mxu0 0.0
  %1298 = vmatprep.subr.mxu0 0.0
  %1299 = vmatpush1.msra.mxu0 0.0
  %1300 = vmatprep.subr.mxu0 0.0
  %1301 = vmatpush1.msra.mxu0 %v1259
  %1302 = vmatprep.subr.mxu0 0.0
  %1303 = vmatpush1.msra.mxu0 %v1257
  %1304 = vmatprep.subr.mxu0 0.0
  %1305 = vmatpush1.msra.mxu0 %v1255
  %1306 = vmatprep.subr.mxu0 0.0
  %1307 = vmatpush1.msra.mxu0 %v1253
  %1308 = vmatprep.subr.mxu0 0.0
  %1309 = vmatpush2.msra.mxu0 0.0
  %1310 = vmatprep.subr.mxu0 0.0
  %1311 = vmatpush2.msra.mxu0 0.0
  %1312 = vmatprep.subr.mxu0 0.0
  %1313 = vmatpush2.msra.mxu0 0.0
  %1314 = vmatprep.subr.mxu0 0.0
  %1315 = vmatpush2.msra.mxu0 0.0
  %1316 = vmatprep.subr.mxu0 0.0
  %1317 = vmatpush2.msra.mxu0 0.0
  %1318 = vmatprep.subr.mxu0 0.0
  %1319 = vmatpush2.msra.mxu0 0.0
  %1320 = vmatprep.subr.mxu0 0.0
  %1321 = vmatpush2.msra.mxu0 0.0
  %1322 = vmatprep.subr.mxu0 0.0
  %1323 = vmatpush2.msra.mxu0 0.0
  %1324 = vmatprep.subr.mxu0 0.0
  %1325 = vmatpush2.msra.mxu0 0.0
  %1326 = vmatprep.subr.mxu0 0.0
  %1327 = vmatpush2.msra.mxu0 0.0
  %1328 = vmatprep.subr.mxu0 0.0
  %1329 = vmatpush2.msra.mxu0 0.0
  %1330 = vmatprep.subr.mxu0 0.0
  %1331 = vmatpush2.msra.mxu0 0.0
  %1332 = vmatprep.subr.mxu0 0.0
  %1333 = vmatpush2.msra.mxu0 0.0
  %1334 = vmatprep.subr.mxu0 0.0
  %1335 = vmatpush2.msra.mxu0 0.0
  %1336 = vmatprep.subr.mxu0 0.0
  %1337 = vmatpush2.msra.mxu0 0.0
  %1338 = vmatprep.subr.mxu0 0.0
  %1339 = vmatpush2.msra.mxu0 0.0
  %1340 = vmatprep.mubr.f32.mxu0 0.0
  %1341 = vmatmul.mubr.f32.gmra.mxu0 %v1265
  %v1342 = vpop.f32.mrf.mxu0
  %v1343 = vadd.f32 0.0, %v1342
  %v1344 = vpop.f32.mrf.mxu0
  %1345 = vmatprep.mubr.f32.mxu0 0.0
  %1346 = vmatmul.mubr.f32.gmra.mxu0 %v1268
  %v1347 = vpop.f32.mrf.mxu0
  %v1348 = vadd.f32 0.0, %v1347
  %v1349 = vpop.f32.mrf.mxu0
  %1350 = vmatprep.mubr.f32.mxu0 0.0
  %1351 = vmatmul.mubr.f32.gmra.mxu0 %v1271
  %v1352 = vpop.f32.mrf.mxu0
  %v1353 = vadd.f32 0.0, %v1352
  %v1354 = vpop.f32.mrf.mxu0
  %1355 = vmatprep.mubr.f32.mxu0 0.0
  %1356 = vmatmul.mubr.f32.gmra.mxu0 %v1274
  %v1357 = vpop.f32.mrf.mxu0
  %v1358 = vadd.f32 0.0, %v1357
  %v1359 = vpop.f32.mrf.mxu0
  %1360 = vdwg.mxu0
  %1365 = vrot.lane.b32.xlu0 %v1125, 16
  %v1366 = vpop.permute.xlu0 %1365
  %1367 = vrot.lane.b32.xlu0 %v1130, 16
  %v1368 = vpop.permute.xlu0 %1367
  %1369 = vrot.lane.b32.xlu0 %v1135, 16
  %v1370 = vpop.permute.xlu0 %1369
  %1371 = vrot.lane.b32.xlu0 %v1140, 16
  %v1372 = vpop.permute.xlu0 %1371
  %1381 = vrot.lane.b32.xlu0 %v1234, 32
  %v1382 = vpop.permute.xlu0 %1381
  %1383 = vrot.lane.b32.xlu0 %v1239, 32
  %v1384 = vpop.permute.xlu0 %1383
  %1385 = vrot.lane.b32.xlu0 %v1244, 32
  %v1386 = vpop.permute.xlu0 %1385
  %1387 = vrot.lane.b32.xlu0 %v1249, 32
  %v1388 = vpop.permute.xlu0 %1387
  %1397 = vrot.lane.b32.xlu0 %v1343, 48
  %v1398 = vpop.permute.xlu0 %1397
  %1399 = vrot.lane.b32.xlu0 %v1348, 48
  %v1400 = vpop.permute.xlu0 %1399
  %1401 = vrot.lane.b32.xlu0 %v1353, 48
  %v1402 = vpop.permute.xlu0 %1401
  %1403 = vrot.lane.b32.xlu0 %v1358, 48
  %v1404 = vpop.permute.xlu0 %1403
  %v1409 = vsel %vm311, %v1012, %v1366
  %v1410 = vsel %vm311, %v1017, %v1368
  %v1411 = vsel %vm311, %v1022, %v1370
  %v1412 = vsel %vm311, %v1027, %v1372
  %v1413 = vsel %vm784, %v1409, %v1382
  %v1414 = vsel %vm784, %v1410, %v1384
  %v1415 = vsel %vm784, %v1411, %v1386
  %v1416 = vsel %vm784, %v1412, %v1388
  %vm1417 = vcmask 392192
  %v1418 = vsel %vm1417, %v1413, %v1398
  %v1419 = vsel %vm1417, %v1414, %v1400
  %v1420 = vsel %vm1417, %v1415, %v1402
  %v1421 = vsel %vm1417, %v1416, %v1404
  %v1422 = vld [vmem:[%s3 + $0x80] sm:$0xff]
  %v1423 = vld [vmem:[%s3 + $0x88] sm:$0xff]
  %v1424 = vld [vmem:[%s3 + $0x90] sm:$0xff]
  %v1425 = vld [vmem:[%s3 + $0x98] sm:$0xff]
  %v1426 = vld [vmem:[%s3 + $0xa0] sm:$0xff]
  %v1427 = vld [vmem:[%s3 + $0xa8] sm:$0xff]
  %v1428 = vld [vmem:[%s3 + $0xb0] sm:$0xff]
  %v1429 = vld [vmem:[%s3 + $0xb8] sm:$0xff]
  %v1430 = vlaneseq
  %v1431 = vshrl.u32 %v1430, 7
  %v1432 = vsub.s32 4, %v1431
  %v1433 = vrot.slane %v24, %v1432
  %vm1434 = vcmask 523264
  %v1436 = vsel %vm1434, %v1418, 0
  %v1439 = vsel %vm1434, %v1419, 0
  %v1442 = vsel %vm1434, %v1420, 0
  %v1445 = vsel %vm1434, %v1421, 0
  %1447 = vmatprep.subr.mxu0 0.0
  %1448 = vmatpush1.msra.mxu0 0.0
  %1449 = vmatprep.subr.mxu0 0.0
  %1450 = vmatpush1.msra.mxu0 0.0
  %1451 = vmatprep.subr.mxu0 0.0
  %1452 = vmatpush1.msra.mxu0 0.0
  %1453 = vmatprep.subr.mxu0 0.0
  %1454 = vmatpush1.msra.mxu0 0.0
  %1455 = vmatprep.subr.mxu0 0.0
  %1456 = vmatpush1.msra.mxu0 0.0
  %1457 = vmatprep.subr.mxu0 0.0
  %1458 = vmatpush1.msra.mxu0 0.0
  %1459 = vmatprep.subr.mxu0 0.0
  %1460 = vmatpush1.msra.mxu0 0.0
  %1461 = vmatprep.subr.mxu0 0.0
  %1462 = vmatpush1.msra.mxu0 0.0
  %1463 = vmatprep.subr.mxu0 0.0
  %1464 = vmatpush1.msra.mxu0 %v1429
  %1465 = vmatprep.subr.mxu0 0.0
  %1466 = vmatpush1.msra.mxu0 %v1428
  %1467 = vmatprep.subr.mxu0 0.0
  %1468 = vmatpush1.msra.mxu0 %v1427
  %1469 = vmatprep.subr.mxu0 0.0
  %1470 = vmatpush1.msra.mxu0 %v1426
  %1471 = vmatprep.subr.mxu0 0.0
  %1472 = vmatpush1.msra.mxu0 %v1425
  %1473 = vmatprep.subr.mxu0 0.0
  %1474 = vmatpush1.msra.mxu0 %v1424
  %1475 = vmatprep.subr.mxu0 0.0
  %1476 = vmatpush1.msra.mxu0 %v1423
  %1477 = vmatprep.subr.mxu0 0.0
  %1478 = vmatpush1.msra.mxu0 %v1422
  %1479 = vmatprep.subr.mxu0 0.0
  %1480 = vmatpush2.msra.mxu0 0.0
  %1481 = vmatprep.subr.mxu0 0.0
  %1482 = vmatpush2.msra.mxu0 0.0
  %1483 = vmatprep.subr.mxu0 0.0
  %1484 = vmatpush2.msra.mxu0 0.0
  %1485 = vmatprep.subr.mxu0 0.0
  %1486 = vmatpush2.msra.mxu0 0.0
  %1487 = vmatprep.subr.mxu0 0.0
  %1488 = vmatpush2.msra.mxu0 0.0
  %1489 = vmatprep.subr.mxu0 0.0
  %1490 = vmatpush2.msra.mxu0 0.0
  %1491 = vmatprep.subr.mxu0 0.0
  %1492 = vmatpush2.msra.mxu0 0.0
  %1493 = vmatprep.subr.mxu0 0.0
  %1494 = vmatpush2.msra.mxu0 0.0
  %1495 = vmatprep.subr.mxu0 0.0
  %1496 = vmatpush2.msra.mxu0 0.0
  %1497 = vmatprep.subr.mxu0 0.0
  %1498 = vmatpush2.msra.mxu0 0.0
  %1499 = vmatprep.subr.mxu0 0.0
  %1500 = vmatpush2.msra.mxu0 0.0
  %1501 = vmatprep.subr.mxu0 0.0
  %1502 = vmatpush2.msra.mxu0 0.0
  %1503 = vmatprep.subr.mxu0 0.0
  %1504 = vmatpush2.msra.mxu0 0.0
  %1505 = vmatprep.subr.mxu0 0.0
  %1506 = vmatpush2.msra.mxu0 0.0
  %1507 = vmatprep.subr.mxu0 0.0
  %1508 = vmatpush2.msra.mxu0 0.0
  %1509 = vmatprep.subr.mxu0 0.0
  %1510 = vmatpush2.msra.mxu0 0.0
  %1511 = vmatprep.mubr.f32.mxu0 0.0
  %1512 = vmatmul.mubr.f32.gmra.mxu0 %v1436
  %v1513 = vpop.f32.mrf.mxu0
  %v1514 = vadd.f32 %v1433, %v1513
  %v1515 = vpop.f32.mrf.mxu0
  %1516 = vmatprep.mubr.f32.mxu0 0.0
  %1517 = vmatmul.mubr.f32.gmra.mxu0 %v1439
  %v1518 = vpop.f32.mrf.mxu0
  %v1519 = vadd.f32 %v1433, %v1518
  %v1520 = vpop.f32.mrf.mxu0
  %1521 = vmatprep.mubr.f32.mxu0 0.0
  %1522 = vmatmul.mubr.f32.gmra.mxu0 %v1442
  %v1523 = vpop.f32.mrf.mxu0
  %v1524 = vadd.f32 %v1433, %v1523
  %v1525 = vpop.f32.mrf.mxu0
  %1526 = vmatprep.mubr.f32.mxu0 0.0
  %1527 = vmatmul.mubr.f32.gmra.mxu0 %v1445
  %v1528 = vpop.f32.mrf.mxu0
  %v1529 = vadd.f32 %v1433, %v1528
  %v1530 = vpop.f32.mrf.mxu0
  %1531 = vdwg.mxu0
  %v1532 = vadd.f32 %v132, %v1514
  %v1533 = vadd.f32 %v137, %v1519
  %v1534 = vadd.f32 %v142, %v1524
  %v1535 = vadd.f32 %v147, %v1529
  %v1536 = vmul.f32 %v1532, %v44
  %v1537 = vmul.f32 %v1533, %v44
  %v1538 = vmul.f32 %v1534, %v44
  %v1539 = vmul.f32 %v1535, %v44
  %1540 = vadd.xlane.f32.xlu0 %v1536
  %v1541 = vpop.xlane.xlu0 %1540
  %1542 = vadd.xlane.f32.xlu0 %v1537
  %v1543 = vpop.xlane.xlu0 %1542
  %1544 = vadd.xlane.f32.xlu0 %v1538
  %v1545 = vpop.xlane.xlu0 %1544
  %1546 = vadd.xlane.f32.xlu0 %v1539
  %v1547 = vpop.xlane.xlu0 %1546
  %v1548 = vrcp.pop 64.0
  %v1549 = vmul.f32 %v1541, %v1548
  %v1550 = vmul.f32 %v1543, %v1548
  %v1551 = vmul.f32 %v1545, %v1548
  %v1552 = vmul.f32 %v1547, %v1548
  %v1553 = vsub.f32 %v1536, %v1549
  %v1554 = vsub.f32 %v1537, %v1550
  %v1555 = vsub.f32 %v1538, %v1551
  %v1556 = vsub.f32 %v1539, %v1552
  %v1557 = vmul.f32 %v1553, %v44
  %v1558 = vmul.f32 %v1554, %v44
  %v1559 = vmul.f32 %v1555, %v44
  %v1560 = vmul.f32 %v1556, %v44
  %v1561 = vmul.f32 %v1557, %v1557
  %v1562 = vmul.f32 %v1558, %v1558
  %v1563 = vmul.f32 %v1559, %v1559
  %v1564 = vmul.f32 %v1560, %v1560
  %1565 = vadd.xlane.f32.xlu0 %v1561
  %v1566 = vpop.xlane.xlu0 %1565
  %1567 = vadd.xlane.f32.xlu0 %v1562
  %v1568 = vpop.xlane.xlu0 %1567
  %1569 = vadd.xlane.f32.xlu0 %v1563
  %v1570 = vpop.xlane.xlu0 %1569
  %1571 = vadd.xlane.f32.xlu0 %v1564
  %v1572 = vpop.xlane.xlu0 %1571
  %v1573 = vmul.f32 %v1566, %v1548
  %v1574 = vmul.f32 %v1568, %v1548
  %v1575 = vmul.f32 %v1570, %v1548
  %v1576 = vmul.f32 %v1572, %v1548
  %v1577 = vadd.f32 %v1573, 1e-05
  %v1578 = vadd.f32 %v1574, 1e-05
  %v1579 = vadd.f32 %v1575, 1e-05
  %v1580 = vadd.f32 %v1576, 1e-05
  %v1581 = vrsqrt.pop %v1577
  %v1582 = vrsqrt.pop %v1578
  %v1583 = vrsqrt.pop %v1579
  %v1584 = vrsqrt.pop %v1580
  %v1585 = vmul.f32 %v1557, %v1581
  %v1586 = vmul.f32 %v1558, %v1582
  %v1587 = vmul.f32 %v1559, %v1583
  %v1588 = vmul.f32 %v1560, %v1584
  %v1589 = vlaneseq
  %v1590 = vshrl.u32 %v1589, 7
  %v1591 = vsub.s32 7, %v1590
  %v1592 = vrot.slane %v24, %v1591
  %v1593 = vmul.f32 %v1585, %v1592
  %v1594 = vmul.f32 %v1586, %v1592
  %v1595 = vmul.f32 %v1587, %v1592
  %v1596 = vmul.f32 %v1588, %v1592
  %v1597 = vlaneseq
  %v1598 = vshrl.u32 %v1597, 7
  %v1599 = vsub.s32 0, %v1598
  %v1600 = vrot.slane %v25, %v1599
  %v1601 = vadd.f32 %v1593, %v1600
  %v1602 = vadd.f32 %v1594, %v1600
  %v1603 = vadd.f32 %v1595, %v1600
  %v1604 = vadd.f32 %v1596, %v1600
  %v1605 = vld [vmem:[%s3 + $0xc0] sm:$0xff]
  %v1606 = vld [vmem:[%s3 + $0xc8] sm:$0xff]
  %v1607 = vld [vmem:[%s3 + $0xd0] sm:$0xff]
  %v1608 = vld [vmem:[%s3 + $0xd8] sm:$0xff]
  %v1609 = vld [vmem:[%s3 + $0xe0] sm:$0xff]
  %v1610 = vld [vmem:[%s3 + $0xe8] sm:$0xff]
  %v1611 = vld [vmem:[%s3 + $0xf0] sm:$0xff]
  %v1612 = vld [vmem:[%s3 + $0xf8] sm:$0xff]
  %v1613 = vld [vmem:[%s3 + $0x100] sm:$0xff]
  %v1614 = vld [vmem:[%s3 + $0x108] sm:$0xff]
  %v1615 = vld [vmem:[%s3 + $0x110] sm:$0xff]
  %v1616 = vld [vmem:[%s3 + $0x118] sm:$0xff]
  %v1617 = vld [vmem:[%s3 + $0x120] sm:$0xff]
  %v1618 = vld [vmem:[%s3 + $0x128] sm:$0xff]
  %v1619 = vld [vmem:[%s3 + $0x130] sm:$0xff]
  %v1620 = vld [vmem:[%s3 + $0x138] sm:$0xff]
  %v1621 = vld [vmem:[%s3 + $0x140] sm:$0xff]
  %v1622 = vld [vmem:[%s3 + $0x148] sm:$0xff]
  %v1623 = vld [vmem:[%s3 + $0x150] sm:$0xff]
  %v1624 = vld [vmem:[%s3 + $0x158] sm:$0xff]
  %v1625 = vld [vmem:[%s3 + $0x160] sm:$0xff]
  %v1626 = vld [vmem:[%s3 + $0x168] sm:$0xff]
  %v1627 = vld [vmem:[%s3 + $0x170] sm:$0xff]
  %v1628 = vld [vmem:[%s3 + $0x178] sm:$0xff]
  %v1629 = vld [vmem:[%s3 + $0x180] sm:$0xff]
  %v1630 = vld [vmem:[%s3 + $0x188] sm:$0xff]
  %v1631 = vld [vmem:[%s3 + $0x190] sm:$0xff]
  %v1632 = vld [vmem:[%s3 + $0x198] sm:$0xff]
  %v1633 = vld [vmem:[%s3 + $0x1a0] sm:$0xff]
  %v1634 = vld [vmem:[%s3 + $0x1a8] sm:$0xff]
  %v1635 = vld [vmem:[%s3 + $0x1b0] sm:$0xff]
  %v1636 = vld [vmem:[%s3 + $0x1b8] sm:$0xff]
  %v1637 = vlaneseq
  %v1638 = vshrl.u32 %v1637, 7
  %v1639 = vsub.s32 5, %v1638
  %v1640 = vrot.slane %v24, %v1639
  %1641 = vmatprep.subr.mxu0 0.0
  %1642 = vmatpush1.msra.mxu0 %v1620
  %1643 = vmatprep.subr.mxu0 0.0
  %1644 = vmatpush1.msra.mxu0 %v1619
  %1645 = vmatprep.subr.mxu0 0.0
  %1646 = vmatpush1.msra.mxu0 %v1618
  %1647 = vmatprep.subr.mxu0 0.0
  %1648 = vmatpush1.msra.mxu0 %v1617
  %1649 = vmatprep.subr.mxu0 0.0
  %1650 = vmatpush1.msra.mxu0 %v1616
  %1651 = vmatprep.subr.mxu0 0.0
  %1652 = vmatpush1.msra.mxu0 %v1615
  %1653 = vmatprep.subr.mxu0 0.0
  %1654 = vmatpush1.msra.mxu0 %v1614
  %1655 = vmatprep.subr.mxu0 0.0
  %1656 = vmatpush1.msra.mxu0 %v1613
  %1657 = vmatprep.subr.mxu0 0.0
  %1658 = vmatpush1.msra.mxu0 %v1612
  %1659 = vmatprep.subr.mxu0 0.0
  %1660 = vmatpush1.msra.mxu0 %v1611
  %1661 = vmatprep.subr.mxu0 0.0
  %1662 = vmatpush1.msra.mxu0 %v1610
  %1663 = vmatprep.subr.mxu0 0.0
  %1664 = vmatpush1.msra.mxu0 %v1609
  %1665 = vmatprep.subr.mxu0 0.0
  %1666 = vmatpush1.msra.mxu0 %v1608
  %1667 = vmatprep.subr.mxu0 0.0
  %1668 = vmatpush1.msra.mxu0 %v1607
  %1669 = vmatprep.subr.mxu0 0.0
  %1670 = vmatpush1.msra.mxu0 %v1606
  %1671 = vmatprep.subr.mxu0 0.0
  %1672 = vmatpush1.msra.mxu0 %v1605
  %1673 = vmatprep.subr.mxu0 0.0
  %1674 = vmatpush2.msra.mxu0 0.0
  %1675 = vmatprep.subr.mxu0 0.0
  %1676 = vmatpush2.msra.mxu0 0.0
  %1677 = vmatprep.subr.mxu0 0.0
  %1678 = vmatpush2.msra.mxu0 0.0
  %1679 = vmatprep.subr.mxu0 0.0
  %1680 = vmatpush2.msra.mxu0 0.0
  %1681 = vmatprep.subr.mxu0 0.0
  %1682 = vmatpush2.msra.mxu0 0.0
  %1683 = vmatprep.subr.mxu0 0.0
  %1684 = vmatpush2.msra.mxu0 0.0
  %1685 = vmatprep.subr.mxu0 0.0
  %1686 = vmatpush2.msra.mxu0 0.0
  %1687 = vmatprep.subr.mxu0 0.0
  %1688 = vmatpush2.msra.mxu0 0.0
  %1689 = vmatprep.subr.mxu0 0.0
  %1690 = vmatpush2.msra.mxu0 0.0
  %1691 = vmatprep.subr.mxu0 0.0
  %1692 = vmatpush2.msra.mxu0 0.0
  %1693 = vmatprep.subr.mxu0 0.0
  %1694 = vmatpush2.msra.mxu0 0.0
  %1695 = vmatprep.subr.mxu0 0.0
  %1696 = vmatpush2.msra.mxu0 0.0
  %1697 = vmatprep.subr.mxu0 0.0
  %1698 = vmatpush2.msra.mxu0 0.0
  %1699 = vmatprep.subr.mxu0 0.0
  %1700 = vmatpush2.msra.mxu0 0.0
  %1701 = vmatprep.subr.mxu0 0.0
  %1702 = vmatpush2.msra.mxu0 0.0
  %1703 = vmatprep.subr.mxu0 0.0
  %1704 = vmatpush2.msra.mxu0 0.0
  %1705 = vmatprep.mubr.f32.mxu0 0.0
  %1706 = vmatmul.mubr.f32.gmra.mxu0 %v1601
  %v1707 = vpop.f32.mrf.mxu0
  %v1708 = vadd.f32 %v1640, %v1707
  %v1709 = vpop.f32.mrf.mxu0
  %1710 = vmatprep.mubr.f32.mxu0 0.0
  %1711 = vmatmul.mubr.f32.gmra.mxu0 %v1602
  %v1712 = vpop.f32.mrf.mxu0
  %v1713 = vadd.f32 %v1640, %v1712
  %v1714 = vpop.f32.mrf.mxu0
  %1715 = vmatprep.mubr.f32.mxu0 0.0
  %1716 = vmatmul.mubr.f32.gmra.mxu0 %v1603
  %v1717 = vpop.f32.mrf.mxu0
  %v1718 = vadd.f32 %v1640, %v1717
  %v1719 = vpop.f32.mrf.mxu0
  %1720 = vmatprep.mubr.f32.mxu0 0.0
  %1721 = vmatmul.mubr.f32.gmra.mxu0 %v1604
  %v1722 = vpop.f32.mrf.mxu0
  %v1723 = vadd.f32 %v1640, %v1722
  %v1724 = vpop.f32.mrf.mxu0
  %1725 = vdwg.mxu0
  %v1726 = vmax.f32 %v1708, 0.0
  %v1727 = vmax.f32 %v1713, 0.0
  %v1728 = vmax.f32 %v1718, 0.0
  %v1729 = vmax.f32 %v1723, 0.0
  %v1730 = vlaneseq
  %v1731 = vshrl.u32 %v1730, 7
  %v1732 = vsub.s32 6, %v1731
  %v1733 = vrot.slane %v24, %v1732
  %1734 = vmatprep.subr.mxu0 0.0
  %1735 = vmatpush1.msra.mxu0 %v1636
  %1736 = vmatprep.subr.mxu0 0.0
  %1737 = vmatpush1.msra.mxu0 %v1635
  %1738 = vmatprep.subr.mxu0 0.0
  %1739 = vmatpush1.msra.mxu0 %v1634
  %1740 = vmatprep.subr.mxu0 0.0
  %1741 = vmatpush1.msra.mxu0 %v1633
  %1742 = vmatprep.subr.mxu0 0.0
  %1743 = vmatpush1.msra.mxu0 %v1632
  %1744 = vmatprep.subr.mxu0 0.0
  %1745 = vmatpush1.msra.mxu0 %v1631
  %1746 = vmatprep.subr.mxu0 0.0
  %1747 = vmatpush1.msra.mxu0 %v1630
  %1748 = vmatprep.subr.mxu0 0.0
  %1749 = vmatpush1.msra.mxu0 %v1629
  %1750 = vmatprep.subr.mxu0 0.0
  %1751 = vmatpush1.msra.mxu0 %v1628
  %1752 = vmatprep.subr.mxu0 0.0
  %1753 = vmatpush1.msra.mxu0 %v1627
  %1754 = vmatprep.subr.mxu0 0.0
  %1755 = vmatpush1.msra.mxu0 %v1626
  %1756 = vmatprep.subr.mxu0 0.0
  %1757 = vmatpush1.msra.mxu0 %v1625
  %1758 = vmatprep.subr.mxu0 0.0
  %1759 = vmatpush1.msra.mxu0 %v1624
  %1760 = vmatprep.subr.mxu0 0.0
  %1761 = vmatpush1.msra.mxu0 %v1623
  %1762 = vmatprep.subr.mxu0 0.0
  %1763 = vmatpush1.msra.mxu0 %v1622
  %1764 = vmatprep.subr.mxu0 0.0
  %1765 = vmatpush1.msra.mxu0 %v1621
  %1766 = vmatprep.subr.mxu0 0.0
  %1767 = vmatpush2.msra.mxu0 0.0
  %1768 = vmatprep.subr.mxu0 0.0
  %1769 = vmatpush2.msra.mxu0 0.0
  %1770 = vmatprep.subr.mxu0 0.0
  %1771 = vmatpush2.msra.mxu0 0.0
  %1772 = vmatprep.subr.mxu0 0.0
  %1773 = vmatpush2.msra.mxu0 0.0
  %1774 = vmatprep.subr.mxu0 0.0
  %1775 = vmatpush2.msra.mxu0 0.0
  %1776 = vmatprep.subr.mxu0 0.0
  %1777 = vmatpush2.msra.mxu0 0.0
  %1778 = vmatprep.subr.mxu0 0.0
  %1779 = vmatpush2.msra.mxu0 0.0
  %1780 = vmatprep.subr.mxu0 0.0
  %1781 = vmatpush2.msra.mxu0 0.0
  %1782 = vmatprep.subr.mxu0 0.0
  %1783 = vmatpush2.msra.mxu0 0.0
  %1784 = vmatprep.subr.mxu0 0.0
  %1785 = vmatpush2.msra.mxu0 0.0
  %1786 = vmatprep.subr.mxu0 0.0
  %1787 = vmatpush2.msra.mxu0 0.0
  %1788 = vmatprep.subr.mxu0 0.0
  %1789 = vmatpush2.msra.mxu0 0.0
  %1790 = vmatprep.subr.mxu0 0.0
  %1791 = vmatpush2.msra.mxu0 0.0
  %1792 = vmatprep.subr.mxu0 0.0
  %1793 = vmatpush2.msra.mxu0 0.0
  %1794 = vmatprep.subr.mxu0 0.0
  %1795 = vmatpush2.msra.mxu0 0.0
  %1796 = vmatprep.subr.mxu0 0.0
  %1797 = vmatpush2.msra.mxu0 0.0
  %1798 = vmatprep.mubr.f32.mxu0 0.0
  %1799 = vmatmul.mubr.f32.gmra.mxu0 %v1726
  %v1800 = vpop.f32.mrf.mxu0
  %v1801 = vadd.f32 %v1733, %v1800
  %v1802 = vpop.f32.mrf.mxu0
  %1803 = vmatprep.mubr.f32.mxu0 0.0
  %1804 = vmatmul.mubr.f32.gmra.mxu0 %v1727
  %v1805 = vpop.f32.mrf.mxu0
  %v1806 = vadd.f32 %v1733, %v1805
  %v1807 = vpop.f32.mrf.mxu0
  %1808 = vmatprep.mubr.f32.mxu0 0.0
  %1809 = vmatmul.mubr.f32.gmra.mxu0 %v1728
  %v1810 = vpop.f32.mrf.mxu0
  %v1811 = vadd.f32 %v1733, %v1810
  %v1812 = vpop.f32.mrf.mxu0
  %1813 = vmatprep.mubr.f32.mxu0 0.0
  %1814 = vmatmul.mubr.f32.gmra.mxu0 %v1729
  %v1815 = vpop.f32.mrf.mxu0
  %v1816 = vadd.f32 %v1733, %v1815
  %v1817 = vpop.f32.mrf.mxu0
  %1818 = vdwg.mxu0
  %v1819 = vadd.f32 %v1601, %v1801
  %v1820 = vadd.f32 %v1602, %v1806
  %v1821 = vadd.f32 %v1603, %v1811
  %v1822 = vadd.f32 %v1604, %v1816
  %v1823 = vmul.f32 %v1819, %v44
  %v1824 = vmul.f32 %v1820, %v44
  %v1825 = vmul.f32 %v1821, %v44
  %v1826 = vmul.f32 %v1822, %v44
  %1827 = vadd.xlane.f32.xlu0 %v1823
  %v1828 = vpop.xlane.xlu0 %1827
  %1829 = vadd.xlane.f32.xlu0 %v1824
  %v1830 = vpop.xlane.xlu0 %1829
  %1831 = vadd.xlane.f32.xlu0 %v1825
  %v1832 = vpop.xlane.xlu0 %1831
  %1833 = vadd.xlane.f32.xlu0 %v1826
  %v1834 = vpop.xlane.xlu0 %1833
  %v1835 = vmul.f32 %v1828, %v1548
  %v1836 = vmul.f32 %v1830, %v1548
  %v1837 = vmul.f32 %v1832, %v1548
  %v1838 = vmul.f32 %v1834, %v1548
  %v1839 = vsub.f32 %v1823, %v1835
  %v1840 = vsub.f32 %v1824, %v1836
  %v1841 = vsub.f32 %v1825, %v1837
  %v1842 = vsub.f32 %v1826, %v1838
  %v1843 = vmul.f32 %v1839, %v44
  %v1844 = vmul.f32 %v1840, %v44
  %v1845 = vmul.f32 %v1841, %v44
  %v1846 = vmul.f32 %v1842, %v44
  %v1847 = vmul.f32 %v1843, %v1843
  %v1848 = vmul.f32 %v1844, %v1844
  %v1849 = vmul.f32 %v1845, %v1845
  %v1850 = vmul.f32 %v1846, %v1846
  %1851 = vadd.xlane.f32.xlu0 %v1847
  %v1852 = vpop.xlane.xlu0 %1851
  %1853 = vadd.xlane.f32.xlu0 %v1848
  %v1854 = vpop.xlane.xlu0 %1853
  %1855 = vadd.xlane.f32.xlu0 %v1849
  %v1856 = vpop.xlane.xlu0 %1855
  %1857 = vadd.xlane.f32.xlu0 %v1850
  %v1858 = vpop.xlane.xlu0 %1857
  %v1859 = vmul.f32 %v1852, %v1548
  %v1860 = vmul.f32 %v1854, %v1548
  %v1861 = vmul.f32 %v1856, %v1548
  %v1862 = vmul.f32 %v1858, %v1548
  %v1863 = vadd.f32 %v1859, 1e-05
  %v1864 = vadd.f32 %v1860, 1e-05
  %v1865 = vadd.f32 %v1861, 1e-05
  %v1866 = vadd.f32 %v1862, 1e-05
  %v1867 = vrsqrt.pop %v1863
  %v1868 = vrsqrt.pop %v1864
  %v1869 = vrsqrt.pop %v1865
  %v1870 = vrsqrt.pop %v1866
  %v1871 = vmul.f32 %v1843, %v1867
  %v1872 = vmul.f32 %v1844, %v1868
  %v1873 = vmul.f32 %v1845, %v1869
  %v1874 = vmul.f32 %v1846, %v1870
  %v1875 = vlaneseq
  %v1876 = vshrl.u32 %v1875, 7
  %v1877 = vsub.s32 1, %v1876
  %v1878 = vrot.slane %v25, %v1877
  %v1879 = vmul.f32 %v1871, %v1878
  %v1880 = vmul.f32 %v1872, %v1878
  %v1881 = vmul.f32 %v1873, %v1878
  %v1882 = vmul.f32 %v1874, %v1878
  %v1883 = vlaneseq
  %v1884 = vshrl.u32 %v1883, 7
  %v1885 = vsub.s32 2, %v1884
  %v1886 = vrot.slane %v25, %v1885
  %v1887 = vadd.f32 %v1879, %v1886
  %v1888 = vadd.f32 %v1880, %v1886
  %v1889 = vadd.f32 %v1881, %v1886
  %v1890 = vadd.f32 %v1882, %v1886
  %v1891 = vld [vmem:[%s2 + $0x100] sm:$0xff]
  %v1892 = vld [vmem:[%s2 + $0x108] sm:$0xff]
  %v1893 = vld [vmem:[%s2 + $0x110] sm:$0xff]
  %v1894 = vld [vmem:[%s2 + $0x118] sm:$0xff]
  %v1895 = vld [vmem:[%s2 + $0x120] sm:$0xff]
  %v1896 = vld [vmem:[%s2 + $0x128] sm:$0xff]
  %v1897 = vld [vmem:[%s2 + $0x130] sm:$0xff]
  %v1898 = vld [vmem:[%s2 + $0x138] sm:$0xff]
  %v1899 = vld [vmem:[%s2 + $0x140] sm:$0xff]
  %v1900 = vld [vmem:[%s2 + $0x148] sm:$0xff]
  %v1901 = vld [vmem:[%s2 + $0x150] sm:$0xff]
  %v1902 = vld [vmem:[%s2 + $0x158] sm:$0xff]
  %v1903 = vld [vmem:[%s2 + $0x160] sm:$0xff]
  %v1904 = vld [vmem:[%s2 + $0x168] sm:$0xff]
  %v1905 = vld [vmem:[%s2 + $0x170] sm:$0xff]
  %v1906 = vld [vmem:[%s2 + $0x178] sm:$0xff]
  %v1907 = vld [vmem:[%s2 + $0x180] sm:$0xff]
  %v1908 = vld [vmem:[%s2 + $0x188] sm:$0xff]
  %v1909 = vld [vmem:[%s2 + $0x190] sm:$0xff]
  %v1910 = vld [vmem:[%s2 + $0x198] sm:$0xff]
  %v1911 = vld [vmem:[%s2 + $0x1a0] sm:$0xff]
  %v1912 = vld [vmem:[%s2 + $0x1a8] sm:$0xff]
  %v1913 = vld [vmem:[%s2 + $0x1b0] sm:$0xff]
  %v1914 = vld [vmem:[%s2 + $0x1b8] sm:$0xff]
  %v1915 = vld [vmem:[%s2 + $0x1c0] sm:$0xff]
  %v1916 = vld [vmem:[%s2 + $0x1c8] sm:$0xff]
  %v1917 = vld [vmem:[%s2 + $0x1d0] sm:$0xff]
  %v1918 = vld [vmem:[%s2 + $0x1d8] sm:$0xff]
  %v1919 = vld [vmem:[%s2 + $0x1e0] sm:$0xff]
  %v1920 = vld [vmem:[%s2 + $0x1e8] sm:$0xff]
  %v1921 = vld [vmem:[%s2 + $0x1f0] sm:$0xff]
  %v1922 = vld [vmem:[%s2 + $0x1f8] sm:$0xff]
  %1923 = vmatprep.subr.mxu0 %v1922
  %1924 = vmatpush1.msra.mxu0 %v1921
  %1925 = vmatprep.subr.mxu0 %v1920
  %1926 = vmatpush1.msra.mxu0 %v1919
  %1927 = vmatprep.subr.mxu0 %v1918
  %1928 = vmatpush1.msra.mxu0 %v1917
  %1929 = vmatprep.subr.mxu0 %v1916
  %1930 = vmatpush1.msra.mxu0 %v1915
  %1931 = vmatprep.subr.mxu0 %v1914
  %1932 = vmatpush1.msra.mxu0 %v1913
  %1933 = vmatprep.subr.mxu0 %v1912
  %1934 = vmatpush1.msra.mxu0 %v1911
  %1935 = vmatprep.subr.mxu0 %v1910
  %1936 = vmatpush1.msra.mxu0 %v1909
  %1937 = vmatprep.subr.mxu0 %v1908
  %1938 = vmatpush1.msra.mxu0 %v1907
  %1939 = vmatprep.subr.mxu0 %v1906
  %1940 = vmatpush1.msra.mxu0 %v1905
  %1941 = vmatprep.subr.mxu0 %v1904
  %1942 = vmatpush1.msra.mxu0 %v1903
  %1943 = vmatprep.subr.mxu0 %v1902
  %1944 = vmatpush1.msra.mxu0 %v1901
  %1945 = vmatprep.subr.mxu0 %v1900
  %1946 = vmatpush1.msra.mxu0 %v1899
  %1947 = vmatprep.subr.mxu0 %v1898
  %1948 = vmatpush1.msra.mxu0 %v1897
  %1949 = vmatprep.subr.mxu0 %v1896
  %1950 = vmatpush1.msra.mxu0 %v1895
  %1951 = vmatprep.subr.mxu0 %v1894
  %1952 = vmatpush1.msra.mxu0 %v1893
  %1953 = vmatprep.subr.mxu0 %v1892
  %1954 = vmatpush1.msra.mxu0 %v1891
  %1955 = vmatprep.subr.mxu0 0.0
  %1956 = vmatpush2.msra.mxu0 0.0
  %1957 = vmatprep.subr.mxu0 0.0
  %1958 = vmatpush2.msra.mxu0 0.0
  %1959 = vmatprep.subr.mxu0 0.0
  %1960 = vmatpush2.msra.mxu0 0.0
  %1961 = vmatprep.subr.mxu0 0.0
  %1962 = vmatpush2.msra.mxu0 0.0
  %1963 = vmatprep.subr.mxu0 0.0
  %1964 = vmatpush2.msra.mxu0 0.0
  %1965 = vmatprep.subr.mxu0 0.0
  %1966 = vmatpush2.msra.mxu0 0.0
  %1967 = vmatprep.subr.mxu0 0.0
  %1968 = vmatpush2.msra.mxu0 0.0
  %1969 = vmatprep.subr.mxu0 0.0
  %1970 = vmatpush2.msra.mxu0 0.0
  %1971 = vmatprep.subr.mxu0 0.0
  %1972 = vmatpush2.msra.mxu0 0.0
  %1973 = vmatprep.subr.mxu0 0.0
  %1974 = vmatpush2.msra.mxu0 0.0
  %1975 = vmatprep.subr.mxu0 0.0
  %1976 = vmatpush2.msra.mxu0 0.0
  %1977 = vmatprep.subr.mxu0 0.0
  %1978 = vmatpush2.msra.mxu0 0.0
  %1979 = vmatprep.subr.mxu0 0.0
  %1980 = vmatpush2.msra.mxu0 0.0
  %1981 = vmatprep.subr.mxu0 0.0
  %1982 = vmatpush2.msra.mxu0 0.0
  %1983 = vmatprep.subr.mxu0 0.0
  %1984 = vmatpush2.msra.mxu0 0.0
  %1985 = vmatprep.subr.mxu0 0.0
  %1986 = vmatpush2.msra.mxu0 0.0
  %1987 = vmatprep.mubr.f32.mxu0 0.0
  %1988 = vmatmul.mubr.f32.gmra.mxu0 %v1887
  %v1989 = vpop.f32.mrf.mxu0
  %v1990 = vadd.f32 0.0, %v1989
  %v1991 = vpop.f32.mrf.mxu0
  %v1992 = vadd.f32 0.0, %v1991
  %1993 = vmatprep.mubr.f32.mxu0 0.0
  %1994 = vmatmul.mubr.f32.gmra.mxu0 %v1888
  %v1995 = vpop.f32.mrf.mxu0
  %v1996 = vadd.f32 0.0, %v1995
  %v1997 = vpop.f32.mrf.mxu0
  %v1998 = vadd.f32 0.0, %v1997
  %1999 = vmatprep.mubr.f32.mxu0 0.0
  %2000 = vmatmul.mubr.f32.gmra.mxu0 %v1889
  %v2001 = vpop.f32.mrf.mxu0
  %v2002 = vadd.f32 0.0, %v2001
  %v2003 = vpop.f32.mrf.mxu0
  %v2004 = vadd.f32 0.0, %v2003
  %2005 = vmatprep.mubr.f32.mxu0 0.0
  %2006 = vmatmul.mubr.f32.gmra.mxu0 %v1890
  %v2007 = vpop.f32.mrf.mxu0
  %v2008 = vadd.f32 0.0, %v2007
  %v2009 = vpop.f32.mrf.mxu0
  %v2010 = vadd.f32 0.0, %v2009
  %2011 = vdwg.mxu0
  %v2012 = vlaneseq
  %v2013 = vshrl.u32 %v2012, 7
  %v2014 = vsub.s32 3, %v2013
  %v2015 = vrot.slane %v25, %v2014
  %v2016 = vadd.f32 %v1990, %v2015
  %v2017 = vadd.f32 %v1996, %v2015
  %v2018 = vadd.f32 %v2002, %v2015
  %v2019 = vadd.f32 %v2008, %v2015
  %v2020 = vlaneseq
  %v2021 = vshrl.u32 %v2020, 7
  %v2022 = vsub.s32 4, %v2021
  %v2023 = vrot.slane %v25, %v2022
  %2025 = vrot.lane.b32.xlu0 %v2023, 64
  %v2026 = vpop.permute.xlu0 %2025
  %v2028 = vadd.f32 %v1990, %v2026
  %v2029 = vadd.f32 %v1996, %v2026
  %v2030 = vadd.f32 %v2002, %v2026
  %v2031 = vadd.f32 %v2008, %v2026
  %v2032 = vlaneseq
  %v2033 = vshrl.u32 %v2032, 7
  %v2034 = vsub.s32 5, %v2033
  %v2035 = vrot.slane %v25, %v2034
  %v2036 = vadd.f32 %v1992, %v2035
  %v2037 = vadd.f32 %v1998, %v2035
  %v2038 = vadd.f32 %v2004, %v2035
  %v2039 = vadd.f32 %v2010, %v2035
  %2044 = vrot.lane.b32.xlu0 %v2028, 64
  %v2045 = vpop.permute.xlu0 %2044
  %2046 = vrot.lane.b32.xlu0 %v2029, 64
  %v2047 = vpop.permute.xlu0 %2046
  %2048 = vrot.lane.b32.xlu0 %v2030, 64
  %v2049 = vpop.permute.xlu0 %2048
  %2050 = vrot.lane.b32.xlu0 %v2031, 64
  %v2051 = vpop.permute.xlu0 %2050
  %v2053 = vsel %vm311, %v2016, 0
  %v2056 = vsel %vm311, %v2017, 0
  %v2059 = vsel %vm311, %v2018, 0
  %v2062 = vsel %vm311, %v2019, 0
  %v2064 = vsel %vm311, %v2045, 0
  %v2066 = vsel %vm311, %v2047, 0
  %v2068 = vsel %vm311, %v2049, 0
  %v2070 = vsel %vm311, %v2051, 0
  %2072 = vmatprep.subr.mxu0 0.0
  %2073 = vmatpush1.xpose.msra.mxu0 0.0
  %2074 = vmatprep.subr.mxu0 0.0
  %2075 = vmatpush1.xpose.msra.mxu0 0.0
  %2076 = vmatprep.subr.mxu0 0.0
  %2077 = vmatpush1.xpose.msra.mxu0 0.0
  %2078 = vmatprep.subr.mxu0 0.0
  %2079 = vmatpush1.xpose.msra.mxu0 0.0
  %2080 = vmatprep.subr.mxu0 0.0
  %2081 = vmatpush1.xpose.msra.mxu0 0.0
  %2082 = vmatprep.subr.mxu0 0.0
  %2083 = vmatpush1.xpose.msra.mxu0 0.0
  %2084 = vmatprep.subr.mxu0 0.0
  %2085 = vmatpush1.xpose.msra.mxu0 0.0
  %2086 = vmatprep.subr.mxu0 0.0
  %2087 = vmatpush1.xpose.msra.mxu0 0.0
  %2088 = vmatprep.subr.mxu0 0.0
  %2089 = vmatpush1.xpose.msra.mxu0 0.0
  %2090 = vmatprep.subr.mxu0 0.0
  %2091 = vmatpush1.xpose.msra.mxu0 0.0
  %2092 = vmatprep.subr.mxu0 0.0
  %2093 = vmatpush1.xpose.msra.mxu0 0.0
  %2094 = vmatprep.subr.mxu0 0.0
  %2095 = vmatpush1.xpose.msra.mxu0 0.0
  %2096 = vmatprep.subr.mxu0 0.0
  %2097 = vmatpush1.xpose.msra.mxu0 %v2070
  %2098 = vmatprep.subr.mxu0 0.0
  %2099 = vmatpush1.xpose.msra.mxu0 %v2068
  %2100 = vmatprep.subr.mxu0 0.0
  %2101 = vmatpush1.xpose.msra.mxu0 %v2066
  %2102 = vmatprep.subr.mxu0 0.0
  %2103 = vmatpush1.xpose.msra.mxu0 %v2064
  %2104 = vmatprep.subr.mxu0 0.0
  %2105 = vmatpush2.xpose.msra.mxu0 0.0
  %2106 = vmatprep.subr.mxu0 0.0
  %2107 = vmatpush2.xpose.msra.mxu0 0.0
  %2108 = vmatprep.subr.mxu0 0.0
  %2109 = vmatpush2.xpose.msra.mxu0 0.0
  %2110 = vmatprep.subr.mxu0 0.0
  %2111 = vmatpush2.xpose.msra.mxu0 0.0
  %2112 = vmatprep.subr.mxu0 0.0
  %2113 = vmatpush2.xpose.msra.mxu0 0.0
  %2114 = vmatprep.subr.mxu0 0.0
  %2115 = vmatpush2.xpose.msra.mxu0 0.0
  %2116 = vmatprep.subr.mxu0 0.0
  %2117 = vmatpush2.xpose.msra.mxu0 0.0
  %2118 = vmatprep.subr.mxu0 0.0
  %2119 = vmatpush2.xpose.msra.mxu0 0.0
  %2120 = vmatprep.subr.mxu0 0.0
  %2121 = vmatpush2.xpose.msra.mxu0 0.0
  %2122 = vmatprep.subr.mxu0 0.0
  %2123 = vmatpush2.xpose.msra.mxu0 0.0
  %2124 = vmatprep.subr.mxu0 0.0
  %2125 = vmatpush2.xpose.msra.mxu0 0.0
  %2126 = vmatprep.subr.mxu0 0.0
  %2127 = vmatpush2.xpose.msra.mxu0 0.0
  %2128 = vmatprep.subr.mxu0 0.0
  %2129 = vmatpush2.xpose.msra.mxu0 0.0
  %2130 = vmatprep.subr.mxu0 0.0
  %2131 = vmatpush2.xpose.msra.mxu0 0.0
  %2132 = vmatprep.subr.mxu0 0.0
  %2133 = vmatpush2.xpose.msra.mxu0 0.0
  %2134 = vmatprep.subr.mxu0 0.0
  %2135 = vmatpush2.xpose.msra.mxu0 0.0
  %2136 = vmatprep.mubr.f32.mxu0 0.0
  %2137 = vmatmul.mubr.f32.gmra.mxu0 %v2053
  %v2138 = vpop.f32.mrf.mxu0
  %v2139 = vadd.f32 0.0, %v2138
  %v2140 = vpop.f32.mrf.mxu0
  %2141 = vmatprep.mubr.f32.mxu0 0.0
  %2142 = vmatmul.mubr.f32.gmra.mxu0 %v2056
  %v2143 = vpop.f32.mrf.mxu0
  %v2144 = vadd.f32 0.0, %v2143
  %v2145 = vpop.f32.mrf.mxu0
  %2146 = vmatprep.mubr.f32.mxu0 0.0
  %2147 = vmatmul.mubr.f32.gmra.mxu0 %v2059
  %v2148 = vpop.f32.mrf.mxu0
  %v2149 = vadd.f32 0.0, %v2148
  %v2150 = vpop.f32.mrf.mxu0
  %2151 = vmatprep.mubr.f32.mxu0 0.0
  %2152 = vmatmul.mubr.f32.gmra.mxu0 %v2062
  %v2153 = vpop.f32.mrf.mxu0
  %v2154 = vadd.f32 0.0, %v2153
  %v2155 = vpop.f32.mrf.mxu0
  %2156 = vdwg.mxu0
  %2157 = vrot.lane.b32.xlu0 %v2016, 112
  %v2158 = vpop.permute.xlu0 %2157
  %2159 = vrot.lane.b32.xlu0 %v2017, 112
  %v2160 = vpop.permute.xlu0 %2159
  %2161 = vrot.lane.b32.xlu0 %v2018, 112
  %v2162 = vpop.permute.xlu0 %2161
  %2163 = vrot.lane.b32.xlu0 %v2019, 112
  %v2164 = vpop.permute.xlu0 %2163
  %2165 = vrot.lane.b32.xlu0 %v2028, 48
  %v2166 = vpop.permute.xlu0 %2165
  %2167 = vrot.lane.b32.xlu0 %v2029, 48
  %v2168 = vpop.permute.xlu0 %2167
  %2169 = vrot.lane.b32.xlu0 %v2030, 48
  %v2170 = vpop.permute.xlu0 %2169
  %2171 = vrot.lane.b32.xlu0 %v2031, 48
  %v2172 = vpop.permute.xlu0 %2171
  %v2173 = vsel %vm311, %v2158, 0
  %v2175 = vsel %vm311, %v2160, 0
  %v2177 = vsel %vm311, %v2162, 0
  %v2179 = vsel %vm311, %v2164, 0
  %v2181 = vsel %vm311, %v2166, 0
  %v2183 = vsel %vm311, %v2168, 0
  %v2185 = vsel %vm311, %v2170, 0
  %v2187 = vsel %vm311, %v2172, 0
  %2189 = vmatprep.subr.mxu0 0.0
  %2190 = vmatpush1.xpose.msra.mxu0 0.0
  %2191 = vmatprep.subr.mxu0 0.0
  %2192 = vmatpush1.xpose.msra.mxu0 0.0
  %2193 = vmatprep.subr.mxu0 0.0
  %2194 = vmatpush1.xpose.msra.mxu0 0.0
  %2195 = vmatprep.subr.mxu0 0.0
  %2196 = vmatpush1.xpose.msra.mxu0 0.0
  %2197 = vmatprep.subr.mxu0 0.0
  %2198 = vmatpush1.xpose.msra.mxu0 0.0
  %2199 = vmatprep.subr.mxu0 0.0
  %2200 = vmatpush1.xpose.msra.mxu0 0.0
  %2201 = vmatprep.subr.mxu0 0.0
  %2202 = vmatpush1.xpose.msra.mxu0 0.0
  %2203 = vmatprep.subr.mxu0 0.0
  %2204 = vmatpush1.xpose.msra.mxu0 0.0
  %2205 = vmatprep.subr.mxu0 0.0
  %2206 = vmatpush1.xpose.msra.mxu0 0.0
  %2207 = vmatprep.subr.mxu0 0.0
  %2208 = vmatpush1.xpose.msra.mxu0 0.0
  %2209 = vmatprep.subr.mxu0 0.0
  %2210 = vmatpush1.xpose.msra.mxu0 0.0
  %2211 = vmatprep.subr.mxu0 0.0
  %2212 = vmatpush1.xpose.msra.mxu0 0.0
  %2213 = vmatprep.subr.mxu0 0.0
  %2214 = vmatpush1.xpose.msra.mxu0 %v2187
  %2215 = vmatprep.subr.mxu0 0.0
  %2216 = vmatpush1.xpose.msra.mxu0 %v2185
  %2217 = vmatprep.subr.mxu0 0.0
  %2218 = vmatpush1.xpose.msra.mxu0 %v2183
  %2219 = vmatprep.subr.mxu0 0.0
  %2220 = vmatpush1.xpose.msra.mxu0 %v2181
  %2221 = vmatprep.subr.mxu0 0.0
  %2222 = vmatpush2.xpose.msra.mxu0 0.0
  %2223 = vmatprep.subr.mxu0 0.0
  %2224 = vmatpush2.xpose.msra.mxu0 0.0
  %2225 = vmatprep.subr.mxu0 0.0
  %2226 = vmatpush2.xpose.msra.mxu0 0.0
  %2227 = vmatprep.subr.mxu0 0.0
  %2228 = vmatpush2.xpose.msra.mxu0 0.0
  %2229 = vmatprep.subr.mxu0 0.0
  %2230 = vmatpush2.xpose.msra.mxu0 0.0
  %2231 = vmatprep.subr.mxu0 0.0
  %2232 = vmatpush2.xpose.msra.mxu0 0.0
  %2233 = vmatprep.subr.mxu0 0.0
  %2234 = vmatpush2.xpose.msra.mxu0 0.0
  %2235 = vmatprep.subr.mxu0 0.0
  %2236 = vmatpush2.xpose.msra.mxu0 0.0
  %2237 = vmatprep.subr.mxu0 0.0
  %2238 = vmatpush2.xpose.msra.mxu0 0.0
  %2239 = vmatprep.subr.mxu0 0.0
  %2240 = vmatpush2.xpose.msra.mxu0 0.0
  %2241 = vmatprep.subr.mxu0 0.0
  %2242 = vmatpush2.xpose.msra.mxu0 0.0
  %2243 = vmatprep.subr.mxu0 0.0
  %2244 = vmatpush2.xpose.msra.mxu0 0.0
  %2245 = vmatprep.subr.mxu0 0.0
  %2246 = vmatpush2.xpose.msra.mxu0 0.0
  %2247 = vmatprep.subr.mxu0 0.0
  %2248 = vmatpush2.xpose.msra.mxu0 0.0
  %2249 = vmatprep.subr.mxu0 0.0
  %2250 = vmatpush2.xpose.msra.mxu0 0.0
  %2251 = vmatprep.subr.mxu0 0.0
  %2252 = vmatpush2.xpose.msra.mxu0 0.0
  %2253 = vmatprep.mubr.f32.mxu0 0.0
  %2254 = vmatmul.mubr.f32.gmra.mxu0 %v2173
  %v2255 = vpop.f32.mrf.mxu0
  %v2256 = vadd.f32 0.0, %v2255
  %v2257 = vpop.f32.mrf.mxu0
  %2258 = vmatprep.mubr.f32.mxu0 0.0
  %2259 = vmatmul.mubr.f32.gmra.mxu0 %v2175
  %v2260 = vpop.f32.mrf.mxu0
  %v2261 = vadd.f32 0.0, %v2260
  %v2262 = vpop.f32.mrf.mxu0
  %2263 = vmatprep.mubr.f32.mxu0 0.0
  %2264 = vmatmul.mubr.f32.gmra.mxu0 %v2177
  %v2265 = vpop.f32.mrf.mxu0
  %v2266 = vadd.f32 0.0, %v2265
  %v2267 = vpop.f32.mrf.mxu0
  %2268 = vmatprep.mubr.f32.mxu0 0.0
  %2269 = vmatmul.mubr.f32.gmra.mxu0 %v2179
  %v2270 = vpop.f32.mrf.mxu0
  %v2271 = vadd.f32 0.0, %v2270
  %v2272 = vpop.f32.mrf.mxu0
  %2273 = vdwg.mxu0
  %2274 = vrot.lane.b32.xlu0 %v2016, 96
  %v2275 = vpop.permute.xlu0 %2274
  %2276 = vrot.lane.b32.xlu0 %v2017, 96
  %v2277 = vpop.permute.xlu0 %2276
  %2278 = vrot.lane.b32.xlu0 %v2018, 96
  %v2279 = vpop.permute.xlu0 %2278
  %2280 = vrot.lane.b32.xlu0 %v2019, 96
  %v2281 = vpop.permute.xlu0 %2280
  %2282 = vrot.lane.b32.xlu0 %v2028, 32
  %v2283 = vpop.permute.xlu0 %2282
  %2284 = vrot.lane.b32.xlu0 %v2029, 32
  %v2285 = vpop.permute.xlu0 %2284
  %2286 = vrot.lane.b32.xlu0 %v2030, 32
  %v2287 = vpop.permute.xlu0 %2286
  %2288 = vrot.lane.b32.xlu0 %v2031, 32
  %v2289 = vpop.permute.xlu0 %2288
  %v2290 = vsel %vm311, %v2275, 0
  %v2292 = vsel %vm311, %v2277, 0
  %v2294 = vsel %vm311, %v2279, 0
  %v2296 = vsel %vm311, %v2281, 0
  %v2298 = vsel %vm311, %v2283, 0
  %v2300 = vsel %vm311, %v2285, 0
  %v2302 = vsel %vm311, %v2287, 0
  %v2304 = vsel %vm311, %v2289, 0
  %2306 = vmatprep.subr.mxu0 0.0
  %2307 = vmatpush1.xpose.msra.mxu0 0.0
  %2308 = vmatprep.subr.mxu0 0.0
  %2309 = vmatpush1.xpose.msra.mxu0 0.0
  %2310 = vmatprep.subr.mxu0 0.0
  %2311 = vmatpush1.xpose.msra.mxu0 0.0
  %2312 = vmatprep.subr.mxu0 0.0
  %2313 = vmatpush1.xpose.msra.mxu0 0.0
  %2314 = vmatprep.subr.mxu0 0.0
  %2315 = vmatpush1.xpose.msra.mxu0 0.0
  %2316 = vmatprep.subr.mxu0 0.0
  %2317 = vmatpush1.xpose.msra.mxu0 0.0
  %2318 = vmatprep.subr.mxu0 0.0
  %2319 = vmatpush1.xpose.msra.mxu0 0.0
  %2320 = vmatprep.subr.mxu0 0.0
  %2321 = vmatpush1.xpose.msra.mxu0 0.0
  %2322 = vmatprep.subr.mxu0 0.0
  %2323 = vmatpush1.xpose.msra.mxu0 0.0
  %2324 = vmatprep.subr.mxu0 0.0
  %2325 = vmatpush1.xpose.msra.mxu0 0.0
  %2326 = vmatprep.subr.mxu0 0.0
  %2327 = vmatpush1.xpose.msra.mxu0 0.0
  %2328 = vmatprep.subr.mxu0 0.0
  %2329 = vmatpush1.xpose.msra.mxu0 0.0
  %2330 = vmatprep.subr.mxu0 0.0
  %2331 = vmatpush1.xpose.msra.mxu0 %v2304
  %2332 = vmatprep.subr.mxu0 0.0
  %2333 = vmatpush1.xpose.msra.mxu0 %v2302
  %2334 = vmatprep.subr.mxu0 0.0
  %2335 = vmatpush1.xpose.msra.mxu0 %v2300
  %2336 = vmatprep.subr.mxu0 0.0
  %2337 = vmatpush1.xpose.msra.mxu0 %v2298
  %2338 = vmatprep.subr.mxu0 0.0
  %2339 = vmatpush2.xpose.msra.mxu0 0.0
  %2340 = vmatprep.subr.mxu0 0.0
  %2341 = vmatpush2.xpose.msra.mxu0 0.0
  %2342 = vmatprep.subr.mxu0 0.0
  %2343 = vmatpush2.xpose.msra.mxu0 0.0
  %2344 = vmatprep.subr.mxu0 0.0
  %2345 = vmatpush2.xpose.msra.mxu0 0.0
  %2346 = vmatprep.subr.mxu0 0.0
  %2347 = vmatpush2.xpose.msra.mxu0 0.0
  %2348 = vmatprep.subr.mxu0 0.0
  %2349 = vmatpush2.xpose.msra.mxu0 0.0
  %2350 = vmatprep.subr.mxu0 0.0
  %2351 = vmatpush2.xpose.msra.mxu0 0.0
  %2352 = vmatprep.subr.mxu0 0.0
  %2353 = vmatpush2.xpose.msra.mxu0 0.0
  %2354 = vmatprep.subr.mxu0 0.0
  %2355 = vmatpush2.xpose.msra.mxu0 0.0
  %2356 = vmatprep.subr.mxu0 0.0
  %2357 = vmatpush2.xpose.msra.mxu0 0.0
  %2358 = vmatprep.subr.mxu0 0.0
  %2359 = vmatpush2.xpose.msra.mxu0 0.0
  %2360 = vmatprep.subr.mxu0 0.0
  %2361 = vmatpush2.xpose.msra.mxu0 0.0
  %2362 = vmatprep.subr.mxu0 0.0
  %2363 = vmatpush2.xpose.msra.mxu0 0.0
  %2364 = vmatprep.subr.mxu0 0.0
  %2365 = vmatpush2.xpose.msra.mxu0 0.0
  %2366 = vmatprep.subr.mxu0 0.0
  %2367 = vmatpush2.xpose.msra.mxu0 0.0
  %2368 = vmatprep.subr.mxu0 0.0
  %2369 = vmatpush2.xpose.msra.mxu0 0.0
  %2370 = vmatprep.mubr.f32.mxu0 0.0
  %2371 = vmatmul.mubr.f32.gmra.mxu0 %v2290
  %v2372 = vpop.f32.mrf.mxu0
  %v2373 = vadd.f32 0.0, %v2372
  %v2374 = vpop.f32.mrf.mxu0
  %2375 = vmatprep.mubr.f32.mxu0 0.0
  %2376 = vmatmul.mubr.f32.gmra.mxu0 %v2292
  %v2377 = vpop.f32.mrf.mxu0
  %v2378 = vadd.f32 0.0, %v2377
  %v2379 = vpop.f32.mrf.mxu0
  %2380 = vmatprep.mubr.f32.mxu0 0.0
  %2381 = vmatmul.mubr.f32.gmra.mxu0 %v2294
  %v2382 = vpop.f32.mrf.mxu0
  %v2383 = vadd.f32 0.0, %v2382
  %v2384 = vpop.f32.mrf.mxu0
  %2385 = vmatprep.mubr.f32.mxu0 0.0
  %2386 = vmatmul.mubr.f32.gmra.mxu0 %v2296
  %v2387 = vpop.f32.mrf.mxu0
  %v2388 = vadd.f32 0.0, %v2387
  %v2389 = vpop.f32.mrf.mxu0
  %2390 = vdwg.mxu0
  %2391 = vrot.lane.b32.xlu0 %v2016, 80
  %v2392 = vpop.permute.xlu0 %2391
  %2393 = vrot.lane.b32.xlu0 %v2017, 80
  %v2394 = vpop.permute.xlu0 %2393
  %2395 = vrot.lane.b32.xlu0 %v2018, 80
  %v2396 = vpop.permute.xlu0 %2395
  %2397 = vrot.lane.b32.xlu0 %v2019, 80
  %v2398 = vpop.permute.xlu0 %2397
  %2399 = vrot.lane.b32.xlu0 %v2028, 16
  %v2400 = vpop.permute.xlu0 %2399
  %2401 = vrot.lane.b32.xlu0 %v2029, 16
  %v2402 = vpop.permute.xlu0 %2401
  %2403 = vrot.lane.b32.xlu0 %v2030, 16
  %v2404 = vpop.permute.xlu0 %2403
  %2405 = vrot.lane.b32.xlu0 %v2031, 16
  %v2406 = vpop.permute.xlu0 %2405
  %v2407 = vsel %vm311, %v2392, 0
  %v2409 = vsel %vm311, %v2394, 0
  %v2411 = vsel %vm311, %v2396, 0
  %v2413 = vsel %vm311, %v2398, 0
  %v2415 = vsel %vm311, %v2400, 0
  %v2417 = vsel %vm311, %v2402, 0
  %v2419 = vsel %vm311, %v2404, 0
  %v2421 = vsel %vm311, %v2406, 0
  %2423 = vmatprep.subr.mxu0 0.0
  %2424 = vmatpush1.xpose.msra.mxu0 0.0
  %2425 = vmatprep.subr.mxu0 0.0
  %2426 = vmatpush1.xpose.msra.mxu0 0.0
  %2427 = vmatprep.subr.mxu0 0.0
  %2428 = vmatpush1.xpose.msra.mxu0 0.0
  %2429 = vmatprep.subr.mxu0 0.0
  %2430 = vmatpush1.xpose.msra.mxu0 0.0
  %2431 = vmatprep.subr.mxu0 0.0
  %2432 = vmatpush1.xpose.msra.mxu0 0.0
  %2433 = vmatprep.subr.mxu0 0.0
  %2434 = vmatpush1.xpose.msra.mxu0 0.0
  %2435 = vmatprep.subr.mxu0 0.0
  %2436 = vmatpush1.xpose.msra.mxu0 0.0
  %2437 = vmatprep.subr.mxu0 0.0
  %2438 = vmatpush1.xpose.msra.mxu0 0.0
  %2439 = vmatprep.subr.mxu0 0.0
  %2440 = vmatpush1.xpose.msra.mxu0 0.0
  %2441 = vmatprep.subr.mxu0 0.0
  %2442 = vmatpush1.xpose.msra.mxu0 0.0
  %2443 = vmatprep.subr.mxu0 0.0
  %2444 = vmatpush1.xpose.msra.mxu0 0.0
  %2445 = vmatprep.subr.mxu0 0.0
  %2446 = vmatpush1.xpose.msra.mxu0 0.0
  %2447 = vmatprep.subr.mxu0 0.0
  %2448 = vmatpush1.xpose.msra.mxu0 %v2421
  %2449 = vmatprep.subr.mxu0 0.0
  %2450 = vmatpush1.xpose.msra.mxu0 %v2419
  %2451 = vmatprep.subr.mxu0 0.0
  %2452 = vmatpush1.xpose.msra.mxu0 %v2417
  %2453 = vmatprep.subr.mxu0 0.0
  %2454 = vmatpush1.xpose.msra.mxu0 %v2415
  %2455 = vmatprep.subr.mxu0 0.0
  %2456 = vmatpush2.xpose.msra.mxu0 0.0
  %2457 = vmatprep.subr.mxu0 0.0
  %2458 = vmatpush2.xpose.msra.mxu0 0.0
  %2459 = vmatprep.subr.mxu0 0.0
  %2460 = vmatpush2.xpose.msra.mxu0 0.0
  %2461 = vmatprep.subr.mxu0 0.0
  %2462 = vmatpush2.xpose.msra.mxu0 0.0
  %2463 = vmatprep.subr.mxu0 0.0
  %2464 = vmatpush2.xpose.msra.mxu0 0.0
  %2465 = vmatprep.subr.mxu0 0.0
  %2466 = vmatpush2.xpose.msra.mxu0 0.0
  %2467 = vmatprep.subr.mxu0 0.0
  %2468 = vmatpush2.xpose.msra.mxu0 0.0
  %2469 = vmatprep.subr.mxu0 0.0
  %2470 = vmatpush2.xpose.msra.mxu0 0.0
  %2471 = vmatprep.subr.mxu0 0.0
  %2472 = vmatpush2.xpose.msra.mxu0 0.0
  %2473 = vmatprep.subr.mxu0 0.0
  %2474 = vmatpush2.xpose.msra.mxu0 0.0
  %2475 = vmatprep.subr.mxu0 0.0
  %2476 = vmatpush2.xpose.msra.mxu0 0.0
  %2477 = vmatprep.subr.mxu0 0.0
  %2478 = vmatpush2.xpose.msra.mxu0 0.0
  %2479 = vmatprep.subr.mxu0 0.0
  %2480 = vmatpush2.xpose.msra.mxu0 0.0
  %2481 = vmatprep.subr.mxu0 0.0
  %2482 = vmatpush2.xpose.msra.mxu0 0.0
  %2483 = vmatprep.subr.mxu0 0.0
  %2484 = vmatpush2.xpose.msra.mxu0 0.0
  %2485 = vmatprep.subr.mxu0 0.0
  %2486 = vmatpush2.xpose.msra.mxu0 0.0
  %2487 = vmatprep.mubr.f32.mxu0 0.0
  %2488 = vmatmul.mubr.f32.gmra.mxu0 %v2407
  %v2489 = vpop.f32.mrf.mxu0
  %v2490 = vadd.f32 0.0, %v2489
  %v2491 = vpop.f32.mrf.mxu0
  %2492 = vmatprep.mubr.f32.mxu0 0.0
  %2493 = vmatmul.mubr.f32.gmra.mxu0 %v2409
  %v2494 = vpop.f32.mrf.mxu0
  %v2495 = vadd.f32 0.0, %v2494
  %v2496 = vpop.f32.mrf.mxu0
  %2497 = vmatprep.mubr.f32.mxu0 0.0
  %2498 = vmatmul.mubr.f32.gmra.mxu0 %v2411
  %v2499 = vpop.f32.mrf.mxu0
  %v2500 = vadd.f32 0.0, %v2499
  %v2501 = vpop.f32.mrf.mxu0
  %2502 = vmatprep.mubr.f32.mxu0 0.0
  %2503 = vmatmul.mubr.f32.gmra.mxu0 %v2413
  %v2504 = vpop.f32.mrf.mxu0
  %v2505 = vadd.f32 0.0, %v2504
  %v2506 = vpop.f32.mrf.mxu0
  %2507 = vdwg.mxu0
  %v2508 = vmul.f32 %v2139, 0.25
  %v2509 = vmul.f32 %v2144, 0.25
  %v2510 = vmul.f32 %v2149, 0.25
  %v2511 = vmul.f32 %v2154, 0.25
  %v2512 = vmul.f32 %v2256, 0.25
  %v2513 = vmul.f32 %v2261, 0.25
  %v2514 = vmul.f32 %v2266, 0.25
  %v2515 = vmul.f32 %v2271, 0.25
  %v2516 = vmul.f32 %v2373, 0.25
  %v2517 = vmul.f32 %v2378, 0.25
  %v2518 = vmul.f32 %v2383, 0.25
  %v2519 = vmul.f32 %v2388, 0.25
  %v2520 = vmul.f32 %v2490, 0.25
  %v2521 = vmul.f32 %v2495, 0.25
  %v2522 = vmul.f32 %v2500, 0.25
  %v2523 = vmul.f32 %v2505, 0.25
  %v2524 = vsel %vm784, %v2508, -inf
  %v2525 = vsel %vm784, %v2512, -inf
  %v2526 = vmax.f32 %v2524, %v2525
  %v2527 = vsel %vm784, %v2516, -inf
  %v2528 = vmax.f32 %v2526, %v2527
  %v2529 = vsel %vm784, %v2520, -inf
  %v2530 = vmax.f32 %v2528, %v2529
  %v2531 = vsel %vm784, %v2509, -inf
  %v2532 = vsel %vm784, %v2513, -inf
  %v2533 = vmax.f32 %v2531, %v2532
  %v2534 = vsel %vm784, %v2517, -inf
  %v2535 = vmax.f32 %v2533, %v2534
  %v2536 = vsel %vm784, %v2521, -inf
  %v2537 = vmax.f32 %v2535, %v2536
  %v2538 = vsel %vm784, %v2510, -inf
  %v2539 = vsel %vm784, %v2514, -inf
  %v2540 = vmax.f32 %v2538, %v2539
  %v2541 = vsel %vm784, %v2518, -inf
  %v2542 = vmax.f32 %v2540, %v2541
  %v2543 = vsel %vm784, %v2522, -inf
  %v2544 = vmax.f32 %v2542, %v2543
  %v2545 = vsel %vm784, %v2511, -inf
  %v2546 = vsel %vm784, %v2515, -inf
  %v2547 = vmax.f32 %v2545, %v2546
  %v2548 = vsel %vm784, %v2519, -inf
  %v2549 = vmax.f32 %v2547, %v2548
  %v2550 = vsel %vm784, %v2523, -inf
  %v2551 = vmax.f32 %v2549, %v2550
  %v2552 = vsub.f32 %v2508, %v2530
  %v2553 = vsub.f32 %v2509, %v2537
  %v2554 = vsub.f32 %v2510, %v2544
  %v2555 = vsub.f32 %v2511, %v2551
  %v2556 = vsub.f32 %v2512, %v2530
  %v2557 = vsub.f32 %v2513, %v2537
  %v2558 = vsub.f32 %v2514, %v2544
  %v2559 = vsub.f32 %v2515, %v2551
  %v2560 = vsub.f32 %v2516, %v2530
  %v2561 = vsub.f32 %v2517, %v2537
  %v2562 = vsub.f32 %v2518, %v2544
  %v2563 = vsub.f32 %v2519, %v2551
  %v2564 = vsub.f32 %v2520, %v2530
  %v2565 = vsub.f32 %v2521, %v2537
  %v2566 = vsub.f32 %v2522, %v2544
  %v2567 = vsub.f32 %v2523, %v2551
  %v2568 = vmul.f32 %v2552, 1.442695
  %v2569 = vpow.pop %v2568
  %v2570 = vmul.f32 %v2553, 1.442695
  %v2571 = vpow.pop %v2570
  %v2572 = vmul.f32 %v2554, 1.442695
  %v2573 = vpow.pop %v2572
  %v2574 = vmul.f32 %v2555, 1.442695
  %v2575 = vpow.pop %v2574
  %v2576 = vmul.f32 %v2556, 1.442695
  %v2577 = vpow.pop %v2576
  %v2578 = vmul.f32 %v2557, 1.442695
  %v2579 = vpow.pop %v2578
  %v2580 = vmul.f32 %v2558, 1.442695
  %v2581 = vpow.pop %v2580
  %v2582 = vmul.f32 %v2559, 1.442695
  %v2583 = vpow.pop %v2582
  %v2584 = vmul.f32 %v2560, 1.442695
  %v2585 = vpow.pop %v2584
  %v2586 = vmul.f32 %v2561, 1.442695
  %v2587 = vpow.pop %v2586
  %v2588 = vmul.f32 %v2562, 1.442695
  %v2589 = vpow.pop %v2588
  %v2590 = vmul.f32 %v2563, 1.442695
  %v2591 = vpow.pop %v2590
  %v2592 = vmul.f32 %v2564, 1.442695
  %v2593 = vpow.pop %v2592
  %v2594 = vmul.f32 %v2565, 1.442695
  %v2595 = vpow.pop %v2594
  %v2596 = vmul.f32 %v2566, 1.442695
  %v2597 = vpow.pop %v2596
  %v2598 = vmul.f32 %v2567, 1.442695
  %v2599 = vpow.pop %v2598
  %v2600 = vsel %vm784, %v2569, 0.0
  %v2601 = vsel %vm784, %v2577, 0.0
  %v2602 = vadd.f32 %v2600, %v2601
  %v2603 = vsel %vm784, %v2585, 0.0
  %v2604 = vadd.f32 %v2602, %v2603
  %v2605 = vsel %vm784, %v2593, 0.0
  %v2606 = vadd.f32 %v2604, %v2605
  %v2607 = vsel %vm784, %v2571, 0.0
  %v2608 = vsel %vm784, %v2579, 0.0
  %v2609 = vadd.f32 %v2607, %v2608
  %v2610 = vsel %vm784, %v2587, 0.0
  %v2611 = vadd.f32 %v2609, %v2610
  %v2612 = vsel %vm784, %v2595, 0.0
  %v2613 = vadd.f32 %v2611, %v2612
  %v2614 = vsel %vm784, %v2573, 0.0
  %v2615 = vsel %vm784, %v2581, 0.0
  %v2616 = vadd.f32 %v2614, %v2615
  %v2617 = vsel %vm784, %v2589, 0.0
  %v2618 = vadd.f32 %v2616, %v2617
  %v2619 = vsel %vm784, %v2597, 0.0
  %v2620 = vadd.f32 %v2618, %v2619
  %v2621 = vsel %vm784, %v2575, 0.0
  %v2622 = vsel %vm784, %v2583, 0.0
  %v2623 = vadd.f32 %v2621, %v2622
  %v2624 = vsel %vm784, %v2591, 0.0
  %v2625 = vadd.f32 %v2623, %v2624
  %v2626 = vsel %vm784, %v2599, 0.0
  %v2627 = vadd.f32 %v2625, %v2626
  %v2628 = vrcp.pop %v2606
  %v2629 = vmul.f32 %v2569, %v2628
  %v2630 = vrcp.pop %v2613
  %v2631 = vmul.f32 %v2571, %v2630
  %v2632 = vrcp.pop %v2620
  %v2633 = vmul.f32 %v2573, %v2632
  %v2634 = vrcp.pop %v2627
  %v2635 = vmul.f32 %v2575, %v2634
  %v2636 = vmul.f32 %v2577, %v2628
  %v2637 = vmul.f32 %v2579, %v2630
  %v2638 = vmul.f32 %v2581, %v2632
  %v2639 = vmul.f32 %v2583, %v2634
  %v2640 = vmul.f32 %v2585, %v2628
  %v2641 = vmul.f32 %v2587, %v2630
  %v2642 = vmul.f32 %v2589, %v2632
  %v2643 = vmul.f32 %v2591, %v2634
  %v2644 = vmul.f32 %v2593, %v2628
  %v2645 = vmul.f32 %v2595, %v2630
  %v2646 = vmul.f32 %v2597, %v2632
  %v2647 = vmul.f32 %v2599, %v2634
  %v2648 = vsel %vm913, 0.25, %v2629
  %v2649 = vsel %vm914, 0.25, %v2631
  %v2650 = vsel %vm915, 0.25, %v2633
  %v2651 = vsel %vm916, 0.25, %v2635
  %v2652 = vsel %vm913, 0.25, %v2636
  %v2653 = vsel %vm914, 0.25, %v2637
  %v2654 = vsel %vm915, 0.25, %v2638
  %v2655 = vsel %vm916, 0.25, %v2639
  %v2656 = vsel %vm913, 0.25, %v2640
  %v2657 = vsel %vm914, 0.25, %v2641
  %v2658 = vsel %vm915, 0.25, %v2642
  %v2659 = vsel %vm916, 0.25, %v2643
  %v2660 = vsel %vm913, 0.25, %v2644
  %v2661 = vsel %vm914, 0.25, %v2645
  %v2662 = vsel %vm915, 0.25, %v2646
  %v2663 = vsel %vm916, 0.25, %v2647
  %v2665 = vsel %vm784, %v2648, 0
  %v2668 = vsel %vm784, %v2649, 0
  %v2671 = vsel %vm784, %v2650, 0
  %v2674 = vsel %vm784, %v2651, 0
  %2676 = vmatprep.subr.mxu0 0.0
  %2677 = vmatpush1.msra.mxu0 0.0
  %2678 = vmatprep.subr.mxu0 0.0
  %2679 = vmatpush1.msra.mxu0 0.0
  %2680 = vmatprep.subr.mxu0 0.0
  %2681 = vmatpush1.msra.mxu0 0.0
  %2682 = vmatprep.subr.mxu0 0.0
  %2683 = vmatpush1.msra.mxu0 0.0
  %2684 = vmatprep.subr.mxu0 0.0
  %2685 = vmatpush1.msra.mxu0 0.0
  %2686 = vmatprep.subr.mxu0 0.0
  %2687 = vmatpush1.msra.mxu0 0.0
  %2688 = vmatprep.subr.mxu0 0.0
  %2689 = vmatpush1.msra.mxu0 0.0
  %2690 = vmatprep.subr.mxu0 0.0
  %2691 = vmatpush1.msra.mxu0 0.0
  %2692 = vmatprep.subr.mxu0 0.0
  %2693 = vmatpush1.msra.mxu0 0.0
  %2694 = vmatprep.subr.mxu0 0.0
  %2695 = vmatpush1.msra.mxu0 0.0
  %2696 = vmatprep.subr.mxu0 0.0
  %2697 = vmatpush1.msra.mxu0 0.0
  %2698 = vmatprep.subr.mxu0 0.0
  %2699 = vmatpush1.msra.mxu0 0.0
  %2700 = vmatprep.subr.mxu0 0.0
  %2701 = vmatpush1.msra.mxu0 %v2039
  %2702 = vmatprep.subr.mxu0 0.0
  %2703 = vmatpush1.msra.mxu0 %v2038
  %2704 = vmatprep.subr.mxu0 0.0
  %2705 = vmatpush1.msra.mxu0 %v2037
  %2706 = vmatprep.subr.mxu0 0.0
  %2707 = vmatpush1.msra.mxu0 %v2036
  %2708 = vmatprep.subr.mxu0 0.0
  %2709 = vmatpush2.msra.mxu0 0.0
  %2710 = vmatprep.subr.mxu0 0.0
  %2711 = vmatpush2.msra.mxu0 0.0
  %2712 = vmatprep.subr.mxu0 0.0
  %2713 = vmatpush2.msra.mxu0 0.0
  %2714 = vmatprep.subr.mxu0 0.0
  %2715 = vmatpush2.msra.mxu0 0.0
  %2716 = vmatprep.subr.mxu0 0.0
  %2717 = vmatpush2.msra.mxu0 0.0
  %2718 = vmatprep.subr.mxu0 0.0
  %2719 = vmatpush2.msra.mxu0 0.0
  %2720 = vmatprep.subr.mxu0 0.0
  %2721 = vmatpush2.msra.mxu0 0.0
  %2722 = vmatprep.subr.mxu0 0.0
  %2723 = vmatpush2.msra.mxu0 0.0
  %2724 = vmatprep.subr.mxu0 0.0
  %2725 = vmatpush2.msra.mxu0 0.0
  %2726 = vmatprep.subr.mxu0 0.0
  %2727 = vmatpush2.msra.mxu0 0.0
  %2728 = vmatprep.subr.mxu0 0.0
  %2729 = vmatpush2.msra.mxu0 0.0
  %2730 = vmatprep.subr.mxu0 0.0
  %2731 = vmatpush2.msra.mxu0 0.0
  %2732 = vmatprep.subr.mxu0 0.0
  %2733 = vmatpush2.msra.mxu0 0.0
  %2734 = vmatprep.subr.mxu0 0.0
  %2735 = vmatpush2.msra.mxu0 0.0
  %2736 = vmatprep.subr.mxu0 0.0
  %2737 = vmatpush2.msra.mxu0 0.0
  %2738 = vmatprep.subr.mxu0 0.0
  %2739 = vmatpush2.msra.mxu0 0.0
  %2740 = vmatprep.mubr.f32.mxu0 0.0
  %2741 = vmatmul.mubr.f32.gmra.mxu0 %v2665
  %v2742 = vpop.f32.mrf.mxu0
  %v2743 = vadd.f32 0.0, %v2742
  %v2744 = vpop.f32.mrf.mxu0
  %2745 = vmatprep.mubr.f32.mxu0 0.0
  %2746 = vmatmul.mubr.f32.gmra.mxu0 %v2668
  %v2747 = vpop.f32.mrf.mxu0
  %v2748 = vadd.f32 0.0, %v2747
  %v2749 = vpop.f32.mrf.mxu0
  %2750 = vmatprep.mubr.f32.mxu0 0.0
  %2751 = vmatmul.mubr.f32.gmra.mxu0 %v2671
  %v2752 = vpop.f32.mrf.mxu0
  %v2753 = vadd.f32 0.0, %v2752
  %v2754 = vpop.f32.mrf.mxu0
  %2755 = vmatprep.mubr.f32.mxu0 0.0
  %2756 = vmatmul.mubr.f32.gmra.mxu0 %v2674
  %v2757 = vpop.f32.mrf.mxu0
  %v2758 = vadd.f32 0.0, %v2757
  %v2759 = vpop.f32.mrf.mxu0
  %2760 = vdwg.mxu0
  %2765 = vrot.lane.b32.xlu0 %v2036, 112
  %v2766 = vpop.permute.xlu0 %2765
  %2767 = vrot.lane.b32.xlu0 %v2037, 112
  %v2768 = vpop.permute.xlu0 %2767
  %2769 = vrot.lane.b32.xlu0 %v2038, 112
  %v2770 = vpop.permute.xlu0 %2769
  %2771 = vrot.lane.b32.xlu0 %v2039, 112
  %v2772 = vpop.permute.xlu0 %2771
  %v2778 = vsel %vm784, %v2652, 0
  %v2781 = vsel %vm784, %v2653, 0
  %v2784 = vsel %vm784, %v2654, 0
  %v2787 = vsel %vm784, %v2655, 0
  %2789 = vmatprep.subr.mxu0 0.0
  %2790 = vmatpush1.msra.mxu0 0.0
  %2791 = vmatprep.subr.mxu0 0.0
  %2792 = vmatpush1.msra.mxu0 0.0
  %2793 = vmatprep.subr.mxu0 0.0
  %2794 = vmatpush1.msra.mxu0 0.0
  %2795 = vmatprep.subr.mxu0 0.0
  %2796 = vmatpush1.msra.mxu0 0.0
  %2797 = vmatprep.subr.mxu0 0.0
  %2798 = vmatpush1.msra.mxu0 0.0
  %2799 = vmatprep.subr.mxu0 0.0
  %2800 = vmatpush1.msra.mxu0 0.0
  %2801 = vmatprep.subr.mxu0 0.0
  %2802 = vmatpush1.msra.mxu0 0.0
  %2803 = vmatprep.subr.mxu0 0.0
  %2804 = vmatpush1.msra.mxu0 0.0
  %2805 = vmatprep.subr.mxu0 0.0
  %2806 = vmatpush1.msra.mxu0 0.0
  %2807 = vmatprep.subr.mxu0 0.0
  %2808 = vmatpush1.msra.mxu0 0.0
  %2809 = vmatprep.subr.mxu0 0.0
  %2810 = vmatpush1.msra.mxu0 0.0
  %2811 = vmatprep.subr.mxu0 0.0
  %2812 = vmatpush1.msra.mxu0 0.0
  %2813 = vmatprep.subr.mxu0 0.0
  %2814 = vmatpush1.msra.mxu0 %v2772
  %2815 = vmatprep.subr.mxu0 0.0
  %2816 = vmatpush1.msra.mxu0 %v2770
  %2817 = vmatprep.subr.mxu0 0.0
  %2818 = vmatpush1.msra.mxu0 %v2768
  %2819 = vmatprep.subr.mxu0 0.0
  %2820 = vmatpush1.msra.mxu0 %v2766
  %2821 = vmatprep.subr.mxu0 0.0
  %2822 = vmatpush2.msra.mxu0 0.0
  %2823 = vmatprep.subr.mxu0 0.0
  %2824 = vmatpush2.msra.mxu0 0.0
  %2825 = vmatprep.subr.mxu0 0.0
  %2826 = vmatpush2.msra.mxu0 0.0
  %2827 = vmatprep.subr.mxu0 0.0
  %2828 = vmatpush2.msra.mxu0 0.0
  %2829 = vmatprep.subr.mxu0 0.0
  %2830 = vmatpush2.msra.mxu0 0.0
  %2831 = vmatprep.subr.mxu0 0.0
  %2832 = vmatpush2.msra.mxu0 0.0
  %2833 = vmatprep.subr.mxu0 0.0
  %2834 = vmatpush2.msra.mxu0 0.0
  %2835 = vmatprep.subr.mxu0 0.0
  %2836 = vmatpush2.msra.mxu0 0.0
  %2837 = vmatprep.subr.mxu0 0.0
  %2838 = vmatpush2.msra.mxu0 0.0
  %2839 = vmatprep.subr.mxu0 0.0
  %2840 = vmatpush2.msra.mxu0 0.0
  %2841 = vmatprep.subr.mxu0 0.0
  %2842 = vmatpush2.msra.mxu0 0.0
  %2843 = vmatprep.subr.mxu0 0.0
  %2844 = vmatpush2.msra.mxu0 0.0
  %2845 = vmatprep.subr.mxu0 0.0
  %2846 = vmatpush2.msra.mxu0 0.0
  %2847 = vmatprep.subr.mxu0 0.0
  %2848 = vmatpush2.msra.mxu0 0.0
  %2849 = vmatprep.subr.mxu0 0.0
  %2850 = vmatpush2.msra.mxu0 0.0
  %2851 = vmatprep.subr.mxu0 0.0
  %2852 = vmatpush2.msra.mxu0 0.0
  %2853 = vmatprep.mubr.f32.mxu0 0.0
  %2854 = vmatmul.mubr.f32.gmra.mxu0 %v2778
  %v2855 = vpop.f32.mrf.mxu0
  %v2856 = vadd.f32 0.0, %v2855
  %v2857 = vpop.f32.mrf.mxu0
  %2858 = vmatprep.mubr.f32.mxu0 0.0
  %2859 = vmatmul.mubr.f32.gmra.mxu0 %v2781
  %v2860 = vpop.f32.mrf.mxu0
  %v2861 = vadd.f32 0.0, %v2860
  %v2862 = vpop.f32.mrf.mxu0
  %2863 = vmatprep.mubr.f32.mxu0 0.0
  %2864 = vmatmul.mubr.f32.gmra.mxu0 %v2784
  %v2865 = vpop.f32.mrf.mxu0
  %v2866 = vadd.f32 0.0, %v2865
  %v2867 = vpop.f32.mrf.mxu0
  %2868 = vmatprep.mubr.f32.mxu0 0.0
  %2869 = vmatmul.mubr.f32.gmra.mxu0 %v2787
  %v2870 = vpop.f32.mrf.mxu0
  %v2871 = vadd.f32 0.0, %v2870
  %v2872 = vpop.f32.mrf.mxu0
  %2873 = vdwg.mxu0
  %2874 = vrot.lane.b32.xlu0 %v2036, 96
  %v2875 = vpop.permute.xlu0 %2874
  %2876 = vrot.lane.b32.xlu0 %v2037, 96
  %v2877 = vpop.permute.xlu0 %2876
  %2878 = vrot.lane.b32.xlu0 %v2038, 96
  %v2879 = vpop.permute.xlu0 %2878
  %2880 = vrot.lane.b32.xlu0 %v2039, 96
  %v2881 = vpop.permute.xlu0 %2880
  %v2887 = vsel %vm784, %v2656, 0
  %v2890 = vsel %vm784, %v2657, 0
  %v2893 = vsel %vm784, %v2658, 0
  %v2896 = vsel %vm784, %v2659, 0
  %2898 = vmatprep.subr.mxu0 0.0
  %2899 = vmatpush1.msra.mxu0 0.0
  %2900 = vmatprep.subr.mxu0 0.0
  %2901 = vmatpush1.msra.mxu0 0.0
  %2902 = vmatprep.subr.mxu0 0.0
  %2903 = vmatpush1.msra.mxu0 0.0
  %2904 = vmatprep.subr.mxu0 0.0
  %2905 = vmatpush1.msra.mxu0 0.0
  %2906 = vmatprep.subr.mxu0 0.0
  %2907 = vmatpush1.msra.mxu0 0.0
  %2908 = vmatprep.subr.mxu0 0.0
  %2909 = vmatpush1.msra.mxu0 0.0
  %2910 = vmatprep.subr.mxu0 0.0
  %2911 = vmatpush1.msra.mxu0 0.0
  %2912 = vmatprep.subr.mxu0 0.0
  %2913 = vmatpush1.msra.mxu0 0.0
  %2914 = vmatprep.subr.mxu0 0.0
  %2915 = vmatpush1.msra.mxu0 0.0
  %2916 = vmatprep.subr.mxu0 0.0
  %2917 = vmatpush1.msra.mxu0 0.0
  %2918 = vmatprep.subr.mxu0 0.0
  %2919 = vmatpush1.msra.mxu0 0.0
  %2920 = vmatprep.subr.mxu0 0.0
  %2921 = vmatpush1.msra.mxu0 0.0
  %2922 = vmatprep.subr.mxu0 0.0
  %2923 = vmatpush1.msra.mxu0 %v2881
  %2924 = vmatprep.subr.mxu0 0.0
  %2925 = vmatpush1.msra.mxu0 %v2879
  %2926 = vmatprep.subr.mxu0 0.0
  %2927 = vmatpush1.msra.mxu0 %v2877
  %2928 = vmatprep.subr.mxu0 0.0
  %2929 = vmatpush1.msra.mxu0 %v2875
  %2930 = vmatprep.subr.mxu0 0.0
  %2931 = vmatpush2.msra.mxu0 0.0
  %2932 = vmatprep.subr.mxu0 0.0
  %2933 = vmatpush2.msra.mxu0 0.0
  %2934 = vmatprep.subr.mxu0 0.0
  %2935 = vmatpush2.msra.mxu0 0.0
  %2936 = vmatprep.subr.mxu0 0.0
  %2937 = vmatpush2.msra.mxu0 0.0
  %2938 = vmatprep.subr.mxu0 0.0
  %2939 = vmatpush2.msra.mxu0 0.0
  %2940 = vmatprep.subr.mxu0 0.0
  %2941 = vmatpush2.msra.mxu0 0.0
  %2942 = vmatprep.subr.mxu0 0.0
  %2943 = vmatpush2.msra.mxu0 0.0
  %2944 = vmatprep.subr.mxu0 0.0
  %2945 = vmatpush2.msra.mxu0 0.0
  %2946 = vmatprep.subr.mxu0 0.0
  %2947 = vmatpush2.msra.mxu0 0.0
  %2948 = vmatprep.subr.mxu0 0.0
  %2949 = vmatpush2.msra.mxu0 0.0
  %2950 = vmatprep.subr.mxu0 0.0
  %2951 = vmatpush2.msra.mxu0 0.0
  %2952 = vmatprep.subr.mxu0 0.0
  %2953 = vmatpush2.msra.mxu0 0.0
  %2954 = vmatprep.subr.mxu0 0.0
  %2955 = vmatpush2.msra.mxu0 0.0
  %2956 = vmatprep.subr.mxu0 0.0
  %2957 = vmatpush2.msra.mxu0 0.0
  %2958 = vmatprep.subr.mxu0 0.0
  %2959 = vmatpush2.msra.mxu0 0.0
  %2960 = vmatprep.subr.mxu0 0.0
  %2961 = vmatpush2.msra.mxu0 0.0
  %2962 = vmatprep.mubr.f32.mxu0 0.0
  %2963 = vmatmul.mubr.f32.gmra.mxu0 %v2887
  %v2964 = vpop.f32.mrf.mxu0
  %v2965 = vadd.f32 0.0, %v2964
  %v2966 = vpop.f32.mrf.mxu0
  %2967 = vmatprep.mubr.f32.mxu0 0.0
  %2968 = vmatmul.mubr.f32.gmra.mxu0 %v2890
  %v2969 = vpop.f32.mrf.mxu0
  %v2970 = vadd.f32 0.0, %v2969
  %v2971 = vpop.f32.mrf.mxu0
  %2972 = vmatprep.mubr.f32.mxu0 0.0
  %2973 = vmatmul.mubr.f32.gmra.mxu0 %v2893
  %v2974 = vpop.f32.mrf.mxu0
  %v2975 = vadd.f32 0.0, %v2974
  %v2976 = vpop.f32.mrf.mxu0
  %2977 = vmatprep.mubr.f32.mxu0 0.0
  %2978 = vmatmul.mubr.f32.gmra.mxu0 %v2896
  %v2979 = vpop.f32.mrf.mxu0
  %v2980 = vadd.f32 0.0, %v2979
  %v2981 = vpop.f32.mrf.mxu0
  %2982 = vdwg.mxu0
  %2983 = vrot.lane.b32.xlu0 %v2036, 80
  %v2984 = vpop.permute.xlu0 %2983
  %2985 = vrot.lane.b32.xlu0 %v2037, 80
  %v2986 = vpop.permute.xlu0 %2985
  %2987 = vrot.lane.b32.xlu0 %v2038, 80
  %v2988 = vpop.permute.xlu0 %2987
  %2989 = vrot.lane.b32.xlu0 %v2039, 80
  %v2990 = vpop.permute.xlu0 %2989
  %v2996 = vsel %vm784, %v2660, 0
  %v2999 = vsel %vm784, %v2661, 0
  %v3002 = vsel %vm784, %v2662, 0
  %v3005 = vsel %vm784, %v2663, 0
  %3007 = vmatprep.subr.mxu0 0.0
  %3008 = vmatpush1.msra.mxu0 0.0
  %3009 = vmatprep.subr.mxu0 0.0
  %3010 = vmatpush1.msra.mxu0 0.0
  %3011 = vmatprep.subr.mxu0 0.0
  %3012 = vmatpush1.msra.mxu0 0.0
  %3013 = vmatprep.subr.mxu0 0.0
  %3014 = vmatpush1.msra.mxu0 0.0
  %3015 = vmatprep.subr.mxu0 0.0
  %3016 = vmatpush1.msra.mxu0 0.0
  %3017 = vmatprep.subr.mxu0 0.0
  %3018 = vmatpush1.msra.mxu0 0.0
  %3019 = vmatprep.subr.mxu0 0.0
  %3020 = vmatpush1.msra.mxu0 0.0
  %3021 = vmatprep.subr.mxu0 0.0
  %3022 = vmatpush1.msra.mxu0 0.0
  %3023 = vmatprep.subr.mxu0 0.0
  %3024 = vmatpush1.msra.mxu0 0.0
  %3025 = vmatprep.subr.mxu0 0.0
  %3026 = vmatpush1.msra.mxu0 0.0
  %3027 = vmatprep.subr.mxu0 0.0
  %3028 = vmatpush1.msra.mxu0 0.0
  %3029 = vmatprep.subr.mxu0 0.0
  %3030 = vmatpush1.msra.mxu0 0.0
  %3031 = vmatprep.subr.mxu0 0.0
  %3032 = vmatpush1.msra.mxu0 %v2990
  %3033 = vmatprep.subr.mxu0 0.0
  %3034 = vmatpush1.msra.mxu0 %v2988
  %3035 = vmatprep.subr.mxu0 0.0
  %3036 = vmatpush1.msra.mxu0 %v2986
  %3037 = vmatprep.subr.mxu0 0.0
  %3038 = vmatpush1.msra.mxu0 %v2984
  %3039 = vmatprep.subr.mxu0 0.0
  %3040 = vmatpush2.msra.mxu0 0.0
  %3041 = vmatprep.subr.mxu0 0.0
  %3042 = vmatpush2.msra.mxu0 0.0
  %3043 = vmatprep.subr.mxu0 0.0
  %3044 = vmatpush2.msra.mxu0 0.0
  %3045 = vmatprep.subr.mxu0 0.0
  %3046 = vmatpush2.msra.mxu0 0.0
  %3047 = vmatprep.subr.mxu0 0.0
  %3048 = vmatpush2.msra.mxu0 0.0
  %3049 = vmatprep.subr.mxu0 0.0
  %3050 = vmatpush2.msra.mxu0 0.0
  %3051 = vmatprep.subr.mxu0 0.0
  %3052 = vmatpush2.msra.mxu0 0.0
  %3053 = vmatprep.subr.mxu0 0.0
  %3054 = vmatpush2.msra.mxu0 0.0
  %3055 = vmatprep.subr.mxu0 0.0
  %3056 = vmatpush2.msra.mxu0 0.0
  %3057 = vmatprep.subr.mxu0 0.0
  %3058 = vmatpush2.msra.mxu0 0.0
  %3059 = vmatprep.subr.mxu0 0.0
  %3060 = vmatpush2.msra.mxu0 0.0
  %3061 = vmatprep.subr.mxu0 0.0
  %3062 = vmatpush2.msra.mxu0 0.0
  %3063 = vmatprep.subr.mxu0 0.0
  %3064 = vmatpush2.msra.mxu0 0.0
  %3065 = vmatprep.subr.mxu0 0.0
  %3066 = vmatpush2.msra.mxu0 0.0
  %3067 = vmatprep.subr.mxu0 0.0
  %3068 = vmatpush2.msra.mxu0 0.0
  %3069 = vmatprep.subr.mxu0 0.0
  %3070 = vmatpush2.msra.mxu0 0.0
  %3071 = vmatprep.mubr.f32.mxu0 0.0
  %3072 = vmatmul.mubr.f32.gmra.mxu0 %v2996
  %v3073 = vpop.f32.mrf.mxu0
  %v3074 = vadd.f32 0.0, %v3073
  %v3075 = vpop.f32.mrf.mxu0
  %3076 = vmatprep.mubr.f32.mxu0 0.0
  %3077 = vmatmul.mubr.f32.gmra.mxu0 %v2999
  %v3078 = vpop.f32.mrf.mxu0
  %v3079 = vadd.f32 0.0, %v3078
  %v3080 = vpop.f32.mrf.mxu0
  %3081 = vmatprep.mubr.f32.mxu0 0.0
  %3082 = vmatmul.mubr.f32.gmra.mxu0 %v3002
  %v3083 = vpop.f32.mrf.mxu0
  %v3084 = vadd.f32 0.0, %v3083
  %v3085 = vpop.f32.mrf.mxu0
  %3086 = vmatprep.mubr.f32.mxu0 0.0
  %3087 = vmatmul.mubr.f32.gmra.mxu0 %v3005
  %v3088 = vpop.f32.mrf.mxu0
  %v3089 = vadd.f32 0.0, %v3088
  %v3090 = vpop.f32.mrf.mxu0
  %3091 = vdwg.mxu0
  %3096 = vrot.lane.b32.xlu0 %v2856, 16
  %v3097 = vpop.permute.xlu0 %3096
  %3098 = vrot.lane.b32.xlu0 %v2861, 16
  %v3099 = vpop.permute.xlu0 %3098
  %3100 = vrot.lane.b32.xlu0 %v2866, 16
  %v3101 = vpop.permute.xlu0 %3100
  %3102 = vrot.lane.b32.xlu0 %v2871, 16
  %v3103 = vpop.permute.xlu0 %3102
  %3112 = vrot.lane.b32.xlu0 %v2965, 32
  %v3113 = vpop.permute.xlu0 %3112
  %3114 = vrot.lane.b32.xlu0 %v2970, 32
  %v3115 = vpop.permute.xlu0 %3114
  %3116 = vrot.lane.b32.xlu0 %v2975, 32
  %v3117 = vpop.permute.xlu0 %3116
  %3118 = vrot.lane.b32.xlu0 %v2980, 32
  %v3119 = vpop.permute.xlu0 %3118
  %3128 = vrot.lane.b32.xlu0 %v3074, 48
  %v3129 = vpop.permute.xlu0 %3128
  %3130 = vrot.lane.b32.xlu0 %v3079, 48
  %v3131 = vpop.permute.xlu0 %3130
  %3132 = vrot.lane.b32.xlu0 %v3084, 48
  %v3133 = vpop.permute.xlu0 %3132
  %3134 = vrot.lane.b32.xlu0 %v3089, 48
  %v3135 = vpop.permute.xlu0 %3134
  %v3140 = vsel %vm311, %v2743, %v3097
  %v3141 = vsel %vm311, %v2748, %v3099
  %v3142 = vsel %vm311, %v2753, %v3101
  %v3143 = vsel %vm311, %v2758, %v3103
  %v3144 = vsel %vm784, %v3140, %v3113
  %v3145 = vsel %vm784, %v3141, %v3115
  %v3146 = vsel %vm784, %v3142, %v3117
  %v3147 = vsel %vm784, %v3143, %v3119
  %v3148 = vsel %vm1417, %v3144, %v3129
  %v3149 = vsel %vm1417, %v3145, %v3131
  %v3150 = vsel %vm1417, %v3146, %v3133
  %v3151 = vsel %vm1417, %v3147, %v3135
  %v3152 = vld [vmem:[%s3 + $0x1c0] sm:$0xff]
  %v3153 = vld [vmem:[%s3 + $0x1c8] sm:$0xff]
  %v3154 = vld [vmem:[%s3 + $0x1d0] sm:$0xff]
  %v3155 = vld [vmem:[%s3 + $0x1d8] sm:$0xff]
  %v3156 = vld [vmem:[%s3 + $0x1e0] sm:$0xff]
  %v3157 = vld [vmem:[%s3 + $0x1e8] sm:$0xff]
  %v3158 = vld [vmem:[%s3 + $0x1f0] sm:$0xff]
  %v3159 = vld [vmem:[%s3 + $0x1f8] sm:$0xff]
  %v3160 = vlaneseq
  %v3161 = vshrl.u32 %v3160, 7
  %v3162 = vsub.s32 6, %v3161
  %v3163 = vrot.slane %v25, %v3162
  %v3165 = vsel %vm1434, %v3148, 0
  %v3168 = vsel %vm1434, %v3149, 0
  %v3171 = vsel %vm1434, %v3150, 0
  %v3174 = vsel %vm1434, %v3151, 0
  %3176 = vmatprep.subr.mxu0 0.0
  %3177 = vmatpush1.msra.mxu0 0.0
  %3178 = vmatprep.subr.mxu0 0.0
  %3179 = vmatpush1.msra.mxu0 0.0
  %3180 = vmatprep.subr.mxu0 0.0
  %3181 = vmatpush1.msra.mxu0 0.0
  %3182 = vmatprep.subr.mxu0 0.0
  %3183 = vmatpush1.msra.mxu0 0.0
  %3184 = vmatprep.subr.mxu0 0.0
  %3185 = vmatpush1.msra.mxu0 0.0
  %3186 = vmatprep.subr.mxu0 0.0
  %3187 = vmatpush1.msra.mxu0 0.0
  %3188 = vmatprep.subr.mxu0 0.0
  %3189 = vmatpush1.msra.mxu0 0.0
  %3190 = vmatprep.subr.mxu0 0.0
  %3191 = vmatpush1.msra.mxu0 0.0
  %3192 = vmatprep.subr.mxu0 0.0
  %3193 = vmatpush1.msra.mxu0 %v3159
  %3194 = vmatprep.subr.mxu0 0.0
  %3195 = vmatpush1.msra.mxu0 %v3158
  %3196 = vmatprep.subr.mxu0 0.0
  %3197 = vmatpush1.msra.mxu0 %v3157
  %3198 = vmatprep.subr.mxu0 0.0
  %3199 = vmatpush1.msra.mxu0 %v3156
  %3200 = vmatprep.subr.mxu0 0.0
  %3201 = vmatpush1.msra.mxu0 %v3155
  %3202 = vmatprep.subr.mxu0 0.0
  %3203 = vmatpush1.msra.mxu0 %v3154
  %3204 = vmatprep.subr.mxu0 0.0
  %3205 = vmatpush1.msra.mxu0 %v3153
  %3206 = vmatprep.subr.mxu0 0.0
  %3207 = vmatpush1.msra.mxu0 %v3152
  %3208 = vmatprep.subr.mxu0 0.0
  %3209 = vmatpush2.msra.mxu0 0.0
  %3210 = vmatprep.subr.mxu0 0.0
  %3211 = vmatpush2.msra.mxu0 0.0
  %3212 = vmatprep.subr.mxu0 0.0
  %3213 = vmatpush2.msra.mxu0 0.0
  %3214 = vmatprep.subr.mxu0 0.0
  %3215 = vmatpush2.msra.mxu0 0.0
  %3216 = vmatprep.subr.mxu0 0.0
  %3217 = vmatpush2.msra.mxu0 0.0
  %3218 = vmatprep.subr.mxu0 0.0
  %3219 = vmatpush2.msra.mxu0 0.0
  %3220 = vmatprep.subr.mxu0 0.0
  %3221 = vmatpush2.msra.mxu0 0.0
  %3222 = vmatprep.subr.mxu0 0.0
  %3223 = vmatpush2.msra.mxu0 0.0
  %3224 = vmatprep.subr.mxu0 0.0
  %3225 = vmatpush2.msra.mxu0 0.0
  %3226 = vmatprep.subr.mxu0 0.0
  %3227 = vmatpush2.msra.mxu0 0.0
  %3228 = vmatprep.subr.mxu0 0.0
  %3229 = vmatpush2.msra.mxu0 0.0
  %3230 = vmatprep.subr.mxu0 0.0
  %3231 = vmatpush2.msra.mxu0 0.0
  %3232 = vmatprep.subr.mxu0 0.0
  %3233 = vmatpush2.msra.mxu0 0.0
  %3234 = vmatprep.subr.mxu0 0.0
  %3235 = vmatpush2.msra.mxu0 0.0
  %3236 = vmatprep.subr.mxu0 0.0
  %3237 = vmatpush2.msra.mxu0 0.0
  %3238 = vmatprep.subr.mxu0 0.0
  %3239 = vmatpush2.msra.mxu0 0.0
  %3240 = vmatprep.mubr.f32.mxu0 0.0
  %3241 = vmatmul.mubr.f32.gmra.mxu0 %v3165
  %v3242 = vpop.f32.mrf.mxu0
  %v3243 = vadd.f32 %v3163, %v3242
  %v3244 = vpop.f32.mrf.mxu0
  %3245 = vmatprep.mubr.f32.mxu0 0.0
  %3246 = vmatmul.mubr.f32.gmra.mxu0 %v3168
  %v3247 = vpop.f32.mrf.mxu0
  %v3248 = vadd.f32 %v3163, %v3247
  %v3249 = vpop.f32.mrf.mxu0
  %3250 = vmatprep.mubr.f32.mxu0 0.0
  %3251 = vmatmul.mubr.f32.gmra.mxu0 %v3171
  %v3252 = vpop.f32.mrf.mxu0
  %v3253 = vadd.f32 %v3163, %v3252
  %v3254 = vpop.f32.mrf.mxu0
  %3255 = vmatprep.mubr.f32.mxu0 0.0
  %3256 = vmatmul.mubr.f32.gmra.mxu0 %v3174
  %v3257 = vpop.f32.mrf.mxu0
  %v3258 = vadd.f32 %v3163, %v3257
  %v3259 = vpop.f32.mrf.mxu0
  %3260 = vdwg.mxu0
  %v3261 = vadd.f32 %v1887, %v3243
  %v3262 = vadd.f32 %v1888, %v3248
  %v3263 = vadd.f32 %v1889, %v3253
  %v3264 = vadd.f32 %v1890, %v3258
  %v3265 = vmul.f32 %v3261, %v44
  %v3266 = vmul.f32 %v3262, %v44
  %v3267 = vmul.f32 %v3263, %v44
  %v3268 = vmul.f32 %v3264, %v44
  %3269 = vadd.xlane.f32.xlu0 %v3265
  %v3270 = vpop.xlane.xlu0 %3269
  %3271 = vadd.xlane.f32.xlu0 %v3266
  %v3272 = vpop.xlane.xlu0 %3271
  %3273 = vadd.xlane.f32.xlu0 %v3267
  %v3274 = vpop.xlane.xlu0 %3273
  %3275 = vadd.xlane.f32.xlu0 %v3268
  %v3276 = vpop.xlane.xlu0 %3275
  %v3277 = vmul.f32 %v3270, %v1548
  %v3278 = vmul.f32 %v3272, %v1548
  %v3279 = vmul.f32 %v3274, %v1548
  %v3280 = vmul.f32 %v3276, %v1548
  %v3281 = vsub.f32 %v3265, %v3277
  %v3282 = vsub.f32 %v3266, %v3278
  %v3283 = vsub.f32 %v3267, %v3279
  %v3284 = vsub.f32 %v3268, %v3280
  %v3285 = vmul.f32 %v3281, %v44
  %v3286 = vmul.f32 %v3282, %v44
  %v3287 = vmul.f32 %v3283, %v44
  %v3288 = vmul.f32 %v3284, %v44
  %v3289 = vmul.f32 %v3285, %v3285
  %v3290 = vmul.f32 %v3286, %v3286
  %v3291 = vmul.f32 %v3287, %v3287
  %v3292 = vmul.f32 %v3288, %v3288
  %3293 = vadd.xlane.f32.xlu0 %v3289
  %v3294 = vpop.xlane.xlu0 %3293
  %3295 = vadd.xlane.f32.xlu0 %v3290
  %v3296 = vpop.xlane.xlu0 %3295
  %3297 = vadd.xlane.f32.xlu0 %v3291
  %v3298 = vpop.xlane.xlu0 %3297
  %3299 = vadd.xlane.f32.xlu0 %v3292
  %v3300 = vpop.xlane.xlu0 %3299
  %v3301 = vmul.f32 %v3294, %v1548
  %v3302 = vmul.f32 %v3296, %v1548
  %v3303 = vmul.f32 %v3298, %v1548
  %v3304 = vmul.f32 %v3300, %v1548
  %v3305 = vadd.f32 %v3301, 1e-05
  %v3306 = vadd.f32 %v3302, 1e-05
  %v3307 = vadd.f32 %v3303, 1e-05
  %v3308 = vadd.f32 %v3304, 1e-05
  %v3309 = vrsqrt.pop %v3305
  %v3310 = vrsqrt.pop %v3306
  %v3311 = vrsqrt.pop %v3307
  %v3312 = vrsqrt.pop %v3308
  %v3313 = vmul.f32 %v3285, %v3309
  %v3314 = vmul.f32 %v3286, %v3310
  %v3315 = vmul.f32 %v3287, %v3311
  %v3316 = vmul.f32 %v3288, %v3312
  %v3317 = vlaneseq
  %v3318 = vshrl.u32 %v3317, 7
  %v3319 = vsub.s32 1, %v3318
  %v3320 = vrot.slane %v26, %v3319
  %v3321 = vmul.f32 %v3313, %v3320
  %v3322 = vmul.f32 %v3314, %v3320
  %v3323 = vmul.f32 %v3315, %v3320
  %v3324 = vmul.f32 %v3316, %v3320
  %v3325 = vlaneseq
  %v3326 = vshrl.u32 %v3325, 7
  %v3327 = vsub.s32 2, %v3326
  %v3328 = vrot.slane %v26, %v3327
  %v3329 = vadd.f32 %v3321, %v3328
  %v3330 = vadd.f32 %v3322, %v3328
  %v3331 = vadd.f32 %v3323, %v3328
  %v3332 = vadd.f32 %v3324, %v3328
  %v3333 = vld [vmem:[%s3 + $0x200] sm:$0xff]
  %v3334 = vld [vmem:[%s3 + $0x208] sm:$0xff]
  %v3335 = vld [vmem:[%s3 + $0x210] sm:$0xff]
  %v3336 = vld [vmem:[%s3 + $0x218] sm:$0xff]
  %v3337 = vld [vmem:[%s3 + $0x220] sm:$0xff]
  %v3338 = vld [vmem:[%s3 + $0x228] sm:$0xff]
  %v3339 = vld [vmem:[%s3 + $0x230] sm:$0xff]
  %v3340 = vld [vmem:[%s3 + $0x238] sm:$0xff]
  %v3341 = vld [vmem:[%s3 + $0x240] sm:$0xff]
  %v3342 = vld [vmem:[%s3 + $0x248] sm:$0xff]
  %v3343 = vld [vmem:[%s3 + $0x250] sm:$0xff]
  %v3344 = vld [vmem:[%s3 + $0x258] sm:$0xff]
  %v3345 = vld [vmem:[%s3 + $0x260] sm:$0xff]
  %v3346 = vld [vmem:[%s3 + $0x268] sm:$0xff]
  %v3347 = vld [vmem:[%s3 + $0x270] sm:$0xff]
  %v3348 = vld [vmem:[%s3 + $0x278] sm:$0xff]
  %v3349 = vld [vmem:[%s3 + $0x280] sm:$0xff]
  %v3350 = vld [vmem:[%s3 + $0x288] sm:$0xff]
  %v3351 = vld [vmem:[%s3 + $0x290] sm:$0xff]
  %v3352 = vld [vmem:[%s3 + $0x298] sm:$0xff]
  %v3353 = vld [vmem:[%s3 + $0x2a0] sm:$0xff]
  %v3354 = vld [vmem:[%s3 + $0x2a8] sm:$0xff]
  %v3355 = vld [vmem:[%s3 + $0x2b0] sm:$0xff]
  %v3356 = vld [vmem:[%s3 + $0x2b8] sm:$0xff]
  %v3357 = vld [vmem:[%s3 + $0x2c0] sm:$0xff]
  %v3358 = vld [vmem:[%s3 + $0x2c8] sm:$0xff]
  %v3359 = vld [vmem:[%s3 + $0x2d0] sm:$0xff]
  %v3360 = vld [vmem:[%s3 + $0x2d8] sm:$0xff]
  %v3361 = vld [vmem:[%s3 + $0x2e0] sm:$0xff]
  %v3362 = vld [vmem:[%s3 + $0x2e8] sm:$0xff]
  %v3363 = vld [vmem:[%s3 + $0x2f0] sm:$0xff]
  %v3364 = vld [vmem:[%s3 + $0x2f8] sm:$0xff]
  %v3365 = vlaneseq
  %v3366 = vshrl.u32 %v3365, 7
  %v3367 = vsub.s32 7, %v3366
  %v3368 = vrot.slane %v25, %v3367
  %3369 = vmatprep.subr.mxu0 0.0
  %3370 = vmatpush1.msra.mxu0 %v3348
  %3371 = vmatprep.subr.mxu0 0.0
  %3372 = vmatpush1.msra.mxu0 %v3347
  %3373 = vmatprep.subr.mxu0 0.0
  %3374 = vmatpush1.msra.mxu0 %v3346
  %3375 = vmatprep.subr.mxu0 0.0
  %3376 = vmatpush1.msra.mxu0 %v3345
  %3377 = vmatprep.subr.mxu0 0.0
  %3378 = vmatpush1.msra.mxu0 %v3344
  %3379 = vmatprep.subr.mxu0 0.0
  %3380 = vmatpush1.msra.mxu0 %v3343
  %3381 = vmatprep.subr.mxu0 0.0
  %3382 = vmatpush1.msra.mxu0 %v3342
  %3383 = vmatprep.subr.mxu0 0.0
  %3384 = vmatpush1.msra.mxu0 %v3341
  %3385 = vmatprep.subr.mxu0 0.0
  %3386 = vmatpush1.msra.mxu0 %v3340
  %3387 = vmatprep.subr.mxu0 0.0
  %3388 = vmatpush1.msra.mxu0 %v3339
  %3389 = vmatprep.subr.mxu0 0.0
  %3390 = vmatpush1.msra.mxu0 %v3338
  %3391 = vmatprep.subr.mxu0 0.0
  %3392 = vmatpush1.msra.mxu0 %v3337
  %3393 = vmatprep.subr.mxu0 0.0
  %3394 = vmatpush1.msra.mxu0 %v3336
  %3395 = vmatprep.subr.mxu0 0.0
  %3396 = vmatpush1.msra.mxu0 %v3335
  %3397 = vmatprep.subr.mxu0 0.0
  %3398 = vmatpush1.msra.mxu0 %v3334
  %3399 = vmatprep.subr.mxu0 0.0
  %3400 = vmatpush1.msra.mxu0 %v3333
  %3401 = vmatprep.subr.mxu0 0.0
  %3402 = vmatpush2.msra.mxu0 0.0
  %3403 = vmatprep.subr.mxu0 0.0
  %3404 = vmatpush2.msra.mxu0 0.0
  %3405 = vmatprep.subr.mxu0 0.0
  %3406 = vmatpush2.msra.mxu0 0.0
  %3407 = vmatprep.subr.mxu0 0.0
  %3408 = vmatpush2.msra.mxu0 0.0
  %3409 = vmatprep.subr.mxu0 0.0
  %3410 = vmatpush2.msra.mxu0 0.0
  %3411 = vmatprep.subr.mxu0 0.0
  %3412 = vmatpush2.msra.mxu0 0.0
  %3413 = vmatprep.subr.mxu0 0.0
  %3414 = vmatpush2.msra.mxu0 0.0
  %3415 = vmatprep.subr.mxu0 0.0
  %3416 = vmatpush2.msra.mxu0 0.0
  %3417 = vmatprep.subr.mxu0 0.0
  %3418 = vmatpush2.msra.mxu0 0.0
  %3419 = vmatprep.subr.mxu0 0.0
  %3420 = vmatpush2.msra.mxu0 0.0
  %3421 = vmatprep.subr.mxu0 0.0
  %3422 = vmatpush2.msra.mxu0 0.0
  %3423 = vmatprep.subr.mxu0 0.0
  %3424 = vmatpush2.msra.mxu0 0.0
  %3425 = vmatprep.subr.mxu0 0.0
  %3426 = vmatpush2.msra.mxu0 0.0
  %3427 = vmatprep.subr.mxu0 0.0
  %3428 = vmatpush2.msra.mxu0 0.0
  %3429 = vmatprep.subr.mxu0 0.0
  %3430 = vmatpush2.msra.mxu0 0.0
  %3431 = vmatprep.subr.mxu0 0.0
  %3432 = vmatpush2.msra.mxu0 0.0
  %3433 = vmatprep.mubr.f32.mxu0 0.0
  %3434 = vmatmul.mubr.f32.gmra.mxu0 %v3329
  %v3435 = vpop.f32.mrf.mxu0
  %v3436 = vadd.f32 %v3368, %v3435
  %v3437 = vpop.f32.mrf.mxu0
  %3438 = vmatprep.mubr.f32.mxu0 0.0
  %3439 = vmatmul.mubr.f32.gmra.mxu0 %v3330
  %v3440 = vpop.f32.mrf.mxu0
  %v3441 = vadd.f32 %v3368, %v3440
  %v3442 = vpop.f32.mrf.mxu0
  %3443 = vmatprep.mubr.f32.mxu0 0.0
  %3444 = vmatmul.mubr.f32.gmra.mxu0 %v3331
  %v3445 = vpop.f32.mrf.mxu0
  %v3446 = vadd.f32 %v3368, %v3445
  %v3447 = vpop.f32.mrf.mxu0
  %3448 = vmatprep.mubr.f32.mxu0 0.0
  %3449 = vmatmul.mubr.f32.gmra.mxu0 %v3332
  %v3450 = vpop.f32.mrf.mxu0
  %v3451 = vadd.f32 %v3368, %v3450
  %v3452 = vpop.f32.mrf.mxu0
  %3453 = vdwg.mxu0
  %v3454 = vmax.f32 %v3436, 0.0
  %v3455 = vmax.f32 %v3441, 0.0
  %v3456 = vmax.f32 %v3446, 0.0
  %v3457 = vmax.f32 %v3451, 0.0
  %v3458 = vlaneseq
  %v3459 = vshrl.u32 %v3458, 7
  %v3460 = vsub.s32 0, %v3459
  %v3461 = vrot.slane %v26, %v3460
  %3462 = vmatprep.subr.mxu0 0.0
  %3463 = vmatpush1.msra.mxu0 %v3364
  %3464 = vmatprep.subr.mxu0 0.0
  %3465 = vmatpush1.msra.mxu0 %v3363
  %3466 = vmatprep.subr.mxu0 0.0
  %3467 = vmatpush1.msra.mxu0 %v3362
  %3468 = vmatprep.subr.mxu0 0.0
  %3469 = vmatpush1.msra.mxu0 %v3361
  %3470 = vmatprep.subr.mxu0 0.0
  %3471 = vmatpush1.msra.mxu0 %v3360
  %3472 = vmatprep.subr.mxu0 0.0
  %3473 = vmatpush1.msra.mxu0 %v3359
  %3474 = vmatprep.subr.mxu0 0.0
  %3475 = vmatpush1.msra.mxu0 %v3358
  %3476 = vmatprep.subr.mxu0 0.0
  %3477 = vmatpush1.msra.mxu0 %v3357
  %3478 = vmatprep.subr.mxu0 0.0
  %3479 = vmatpush1.msra.mxu0 %v3356
  %3480 = vmatprep.subr.mxu0 0.0
  %3481 = vmatpush1.msra.mxu0 %v3355
  %3482 = vmatprep.subr.mxu0 0.0
  %3483 = vmatpush1.msra.mxu0 %v3354
  %3484 = vmatprep.subr.mxu0 0.0
  %3485 = vmatpush1.msra.mxu0 %v3353
  %3486 = vmatprep.subr.mxu0 0.0
  %3487 = vmatpush1.msra.mxu0 %v3352
  %3488 = vmatprep.subr.mxu0 0.0
  %3489 = vmatpush1.msra.mxu0 %v3351
  %3490 = vmatprep.subr.mxu0 0.0
  %3491 = vmatpush1.msra.mxu0 %v3350
  %3492 = vmatprep.subr.mxu0 0.0
  %3493 = vmatpush1.msra.mxu0 %v3349
  %3494 = vmatprep.subr.mxu0 0.0
  %3495 = vmatpush2.msra.mxu0 0.0
  %3496 = vmatprep.subr.mxu0 0.0
  %3497 = vmatpush2.msra.mxu0 0.0
  %3498 = vmatprep.subr.mxu0 0.0
  %3499 = vmatpush2.msra.mxu0 0.0
  %3500 = vmatprep.subr.mxu0 0.0
  %3501 = vmatpush2.msra.mxu0 0.0
  %3502 = vmatprep.subr.mxu0 0.0
  %3503 = vmatpush2.msra.mxu0 0.0
  %3504 = vmatprep.subr.mxu0 0.0
  %3505 = vmatpush2.msra.mxu0 0.0
  %3506 = vmatprep.subr.mxu0 0.0
  %3507 = vmatpush2.msra.mxu0 0.0
  %3508 = vmatprep.subr.mxu0 0.0
  %3509 = vmatpush2.msra.mxu0 0.0
  %3510 = vmatprep.subr.mxu0 0.0
  %3511 = vmatpush2.msra.mxu0 0.0
  %3512 = vmatprep.subr.mxu0 0.0
  %3513 = vmatpush2.msra.mxu0 0.0
  %3514 = vmatprep.subr.mxu0 0.0
  %3515 = vmatpush2.msra.mxu0 0.0
  %3516 = vmatprep.subr.mxu0 0.0
  %3517 = vmatpush2.msra.mxu0 0.0
  %3518 = vmatprep.subr.mxu0 0.0
  %3519 = vmatpush2.msra.mxu0 0.0
  %3520 = vmatprep.subr.mxu0 0.0
  %3521 = vmatpush2.msra.mxu0 0.0
  %3522 = vmatprep.subr.mxu0 0.0
  %3523 = vmatpush2.msra.mxu0 0.0
  %3524 = vmatprep.subr.mxu0 0.0
  %3525 = vmatpush2.msra.mxu0 0.0
  %3526 = vmatprep.mubr.f32.mxu0 0.0
  %3527 = vmatmul.mubr.f32.gmra.mxu0 %v3454
  %v3528 = vpop.f32.mrf.mxu0
  %v3529 = vadd.f32 %v3461, %v3528
  %v3530 = vpop.f32.mrf.mxu0
  %3531 = vmatprep.mubr.f32.mxu0 0.0
  %3532 = vmatmul.mubr.f32.gmra.mxu0 %v3455
  %v3533 = vpop.f32.mrf.mxu0
  %v3534 = vadd.f32 %v3461, %v3533
  %v3535 = vpop.f32.mrf.mxu0
  %3536 = vmatprep.mubr.f32.mxu0 0.0
  %3537 = vmatmul.mubr.f32.gmra.mxu0 %v3456
  %v3538 = vpop.f32.mrf.mxu0
  %v3539 = vadd.f32 %v3461, %v3538
  %v3540 = vpop.f32.mrf.mxu0
  %3541 = vmatprep.mubr.f32.mxu0 0.0
  %3542 = vmatmul.mubr.f32.gmra.mxu0 %v3457
  %v3543 = vpop.f32.mrf.mxu0
  %v3544 = vadd.f32 %v3461, %v3543
  %v3545 = vpop.f32.mrf.mxu0
  %3546 = vdwg.mxu0
  %v3547 = vadd.f32 %v3329, %v3529
  %v3548 = vadd.f32 %v3330, %v3534
  %v3549 = vadd.f32 %v3331, %v3539
  %v3550 = vadd.f32 %v3332, %v3544
  %v3551 = vmul.f32 %v3547, %v44
  %v3552 = vmul.f32 %v3548, %v44
  %v3553 = vmul.f32 %v3549, %v44
  %v3554 = vmul.f32 %v3550, %v44
  %3555 = vadd.xlane.f32.xlu0 %v3551
  %v3556 = vpop.xlane.xlu0 %3555
  %3557 = vadd.xlane.f32.xlu0 %v3552
  %v3558 = vpop.xlane.xlu0 %3557
  %3559 = vadd.xlane.f32.xlu0 %v3553
  %v3560 = vpop.xlane.xlu0 %3559
  %3561 = vadd.xlane.f32.xlu0 %v3554
  %v3562 = vpop.xlane.xlu0 %3561
  %v3563 = vmul.f32 %v3556, %v1548
  %v3564 = vmul.f32 %v3558, %v1548
  %v3565 = vmul.f32 %v3560, %v1548
  %v3566 = vmul.f32 %v3562, %v1548
  %v3567 = vsub.f32 %v3551, %v3563
  %v3568 = vsub.f32 %v3552, %v3564
  %v3569 = vsub.f32 %v3553, %v3565
  %v3570 = vsub.f32 %v3554, %v3566
  %v3571 = vmul.f32 %v3567, %v44
  %v3572 = vmul.f32 %v3568, %v44
  %v3573 = vmul.f32 %v3569, %v44
  %v3574 = vmul.f32 %v3570, %v44
  %v3575 = vmul.f32 %v3571, %v3571
  %v3576 = vmul.f32 %v3572, %v3572
  %v3577 = vmul.f32 %v3573, %v3573
  %v3578 = vmul.f32 %v3574, %v3574
  %3579 = vadd.xlane.f32.xlu0 %v3575
  %v3580 = vpop.xlane.xlu0 %3579
  %3581 = vadd.xlane.f32.xlu0 %v3576
  %v3582 = vpop.xlane.xlu0 %3581
  %3583 = vadd.xlane.f32.xlu0 %v3577
  %v3584 = vpop.xlane.xlu0 %3583
  %3585 = vadd.xlane.f32.xlu0 %v3578
  %v3586 = vpop.xlane.xlu0 %3585
  %v3587 = vmul.f32 %v3580, %v1548
  %v3588 = vmul.f32 %v3582, %v1548
  %v3589 = vmul.f32 %v3584, %v1548
  %v3590 = vmul.f32 %v3586, %v1548
  %v3591 = vadd.f32 %v3587, 1e-05
  %v3592 = vadd.f32 %v3588, 1e-05
  %v3593 = vadd.f32 %v3589, 1e-05
  %v3594 = vadd.f32 %v3590, 1e-05
  %v3595 = vrsqrt.pop %v3591
  %v3596 = vrsqrt.pop %v3592
  %v3597 = vrsqrt.pop %v3593
  %v3598 = vrsqrt.pop %v3594
  %v3599 = vmul.f32 %v3571, %v3595
  %v3600 = vmul.f32 %v3572, %v3596
  %v3601 = vmul.f32 %v3573, %v3597
  %v3602 = vmul.f32 %v3574, %v3598
  %v3603 = vlaneseq
  %v3604 = vshrl.u32 %v3603, 7
  %v3605 = vsub.s32 3, %v3604
  %v3606 = vrot.slane %v26, %v3605
  %v3607 = vmul.f32 %v3599, %v3606
  %v3608 = vmul.f32 %v3600, %v3606
  %v3609 = vmul.f32 %v3601, %v3606
  %v3610 = vmul.f32 %v3602, %v3606
  %v3611 = vlaneseq
  %v3612 = vshrl.u32 %v3611, 7
  %v3613 = vsub.s32 4, %v3612
  %v3614 = vrot.slane %v26, %v3613
  %v3615 = vadd.f32 %v3607, %v3614
  %v3616 = vadd.f32 %v3608, %v3614
  %v3617 = vadd.f32 %v3609, %v3614
  %v3618 = vadd.f32 %v3610, %v3614
  %v3619 = vld [vmem:[%s3 + $0x300] sm:$0xff]
  %v3620 = vld [vmem:[%s3 + $0x308] sm:$0xff]
  %v3621 = vld [vmem:[%s3 + $0x310] sm:$0xff]
  %v3622 = vld [vmem:[%s3 + $0x318] sm:$0xff]
  %v3623 = vld [vmem:[%s3 + $0x320] sm:$0xff]
  %v3624 = vld [vmem:[%s3 + $0x328] sm:$0xff]
  %v3625 = vld [vmem:[%s3 + $0x330] sm:$0xff]
  %v3626 = vld [vmem:[%s3 + $0x338] sm:$0xff]
  %v3627 = vld [vmem:[%s3 + $0x340] sm:$0xff]
  %v3628 = vld [vmem:[%s3 + $0x348] sm:$0xff]
  %v3629 = vld [vmem:[%s3 + $0x350] sm:$0xff]
  %v3630 = vld [vmem:[%s3 + $0x358] sm:$0xff]
  %v3631 = vld [vmem:[%s3 + $0x360] sm:$0xff]
  %v3632 = vld [vmem:[%s3 + $0x368] sm:$0xff]
  %v3633 = vld [vmem:[%s3 + $0x370] sm:$0xff]
  %v3634 = vld [vmem:[%s3 + $0x378] sm:$0xff]
  %v3635 = vlaneseq
  %v3636 = vshrl.u32 %v3635, 7
  %v3637 = vsub.s32 5, %v3636
  %v3638 = vrot.slane %v26, %v3637
  %3639 = vmatprep.subr.mxu0 0.0
  %3640 = vmatpush1.msra.mxu0 %v3634
  %3641 = vmatprep.subr.mxu0 0.0
  %3642 = vmatpush1.msra.mxu0 %v3633
  %3643 = vmatprep.subr.mxu0 0.0
  %3644 = vmatpush1.msra.mxu0 %v3632
  %3645 = vmatprep.subr.mxu0 0.0
  %3646 = vmatpush1.msra.mxu0 %v3631
  %3647 = vmatprep.subr.mxu0 0.0
  %3648 = vmatpush1.msra.mxu0 %v3630
  %3649 = vmatprep.subr.mxu0 0.0
  %3650 = vmatpush1.msra.mxu0 %v3629
  %3651 = vmatprep.subr.mxu0 0.0
  %3652 = vmatpush1.msra.mxu0 %v3628
  %3653 = vmatprep.subr.mxu0 0.0
  %3654 = vmatpush1.msra.mxu0 %v3627
  %3655 = vmatprep.subr.mxu0 0.0
  %3656 = vmatpush1.msra.mxu0 %v3626
  %3657 = vmatprep.subr.mxu0 0.0
  %3658 = vmatpush1.msra.mxu0 %v3625
  %3659 = vmatprep.subr.mxu0 0.0
  %3660 = vmatpush1.msra.mxu0 %v3624
  %3661 = vmatprep.subr.mxu0 0.0
  %3662 = vmatpush1.msra.mxu0 %v3623
  %3663 = vmatprep.subr.mxu0 0.0
  %3664 = vmatpush1.msra.mxu0 %v3622
  %3665 = vmatprep.subr.mxu0 0.0
  %3666 = vmatpush1.msra.mxu0 %v3621
  %3667 = vmatprep.subr.mxu0 0.0
  %3668 = vmatpush1.msra.mxu0 %v3620
  %3669 = vmatprep.subr.mxu0 0.0
  %3670 = vmatpush1.msra.mxu0 %v3619
  %3671 = vmatprep.subr.mxu0 0.0
  %3672 = vmatpush2.msra.mxu0 0.0
  %3673 = vmatprep.subr.mxu0 0.0
  %3674 = vmatpush2.msra.mxu0 0.0
  %3675 = vmatprep.subr.mxu0 0.0
  %3676 = vmatpush2.msra.mxu0 0.0
  %3677 = vmatprep.subr.mxu0 0.0
  %3678 = vmatpush2.msra.mxu0 0.0
  %3679 = vmatprep.subr.mxu0 0.0
  %3680 = vmatpush2.msra.mxu0 0.0
  %3681 = vmatprep.subr.mxu0 0.0
  %3682 = vmatpush2.msra.mxu0 0.0
  %3683 = vmatprep.subr.mxu0 0.0
  %3684 = vmatpush2.msra.mxu0 0.0
  %3685 = vmatprep.subr.mxu0 0.0
  %3686 = vmatpush2.msra.mxu0 0.0
  %3687 = vmatprep.subr.mxu0 0.0
  %3688 = vmatpush2.msra.mxu0 0.0
  %3689 = vmatprep.subr.mxu0 0.0
  %3690 = vmatpush2.msra.mxu0 0.0
  %3691 = vmatprep.subr.mxu0 0.0
  %3692 = vmatpush2.msra.mxu0 0.0
  %3693 = vmatprep.subr.mxu0 0.0
  %3694 = vmatpush2.msra.mxu0 0.0
  %3695 = vmatprep.subr.mxu0 0.0
  %3696 = vmatpush2.msra.mxu0 0.0
  %3697 = vmatprep.subr.mxu0 0.0
  %3698 = vmatpush2.msra.mxu0 0.0
  %3699 = vmatprep.subr.mxu0 0.0
  %3700 = vmatpush2.msra.mxu0 0.0
  %3701 = vmatprep.subr.mxu0 0.0
  %3702 = vmatpush2.msra.mxu0 0.0
  %3703 = vmatprep.mubr.f32.mxu0 0.0
  %3704 = vmatmul.mubr.f32.gmra.mxu0 %v3615
  %v3705 = vpop.f32.mrf.mxu0
  %v3706 = vadd.f32 %v3638, %v3705
  %v3707 = vpop.f32.mrf.mxu0
  %3708 = vmatprep.mubr.f32.mxu0 0.0
  %3709 = vmatmul.mubr.f32.gmra.mxu0 %v3616
  %v3710 = vpop.f32.mrf.mxu0
  %v3711 = vadd.f32 %v3638, %v3710
  %v3712 = vpop.f32.mrf.mxu0
  %3713 = vmatprep.mubr.f32.mxu0 0.0
  %3714 = vmatmul.mubr.f32.gmra.mxu0 %v3617
  %v3715 = vpop.f32.mrf.mxu0
  %v3716 = vadd.f32 %v3638, %v3715
  %v3717 = vpop.f32.mrf.mxu0
  %3718 = vmatprep.mubr.f32.mxu0 0.0
  %3719 = vmatmul.mubr.f32.gmra.mxu0 %v3618
  %v3720 = vpop.f32.mrf.mxu0
  %v3721 = vadd.f32 %v3638, %v3720
  %v3722 = vpop.f32.mrf.mxu0
  %3723 = vdwg.mxu0
  %3724 = vmax.xlane.f32.xlu0 %v3706
  %v3725 = vpop.xlane.xlu0 %3724
  %3726 = vmax.xlane.f32.xlu0 %v3711
  %v3727 = vpop.xlane.xlu0 %3726
  %3728 = vmax.xlane.f32.xlu0 %v3716
  %v3729 = vpop.xlane.xlu0 %3728
  %3730 = vmax.xlane.f32.xlu0 %v3721
  %v3731 = vpop.xlane.xlu0 %3730
  %v3732 = vsub.f32 %v3706, %v3725
  %v3733 = vsub.f32 %v3711, %v3727
  %v3734 = vsub.f32 %v3716, %v3729
  %v3735 = vsub.f32 %v3721, %v3731
  %v3736 = vmul.f32 %v3732, 1.442695
  %v3737 = vpow.pop %v3736
  %v3738 = vmul.f32 %v3733, 1.442695
  %v3739 = vpow.pop %v3738
  %v3740 = vmul.f32 %v3734, 1.442695
  %v3741 = vpow.pop %v3740
  %v3742 = vmul.f32 %v3735, 1.442695
  %v3743 = vpow.pop %v3742
  %3744 = vadd.xlane.f32.xlu0 %v3737
  %v3745 = vpop.xlane.xlu0 %3744
  %3746 = vadd.xlane.f32.xlu0 %v3739
  %v3747 = vpop.xlane.xlu0 %3746
  %3748 = vadd.xlane.f32.xlu0 %v3741
  %v3749 = vpop.xlane.xlu0 %3748
  %3750 = vadd.xlane.f32.xlu0 %v3743
  %v3751 = vpop.xlane.xlu0 %3750
  %v3752 = vlog2.pop %v3745
  %v3753 = vmul.f32 %v3752, 0.6931472
  %v3754 = vlog2.pop %v3747
  %v3755 = vmul.f32 %v3754, 0.6931472
  %v3756 = vlog2.pop %v3749
  %v3757 = vmul.f32 %v3756, 0.6931472
  %v3758 = vlog2.pop %v3751
  %v3759 = vmul.f32 %v3758, 0.6931472
  %v3760 = vsub.f32 %v3732, %v3753
  %v3761 = vsub.f32 %v3733, %v3755
  %v3762 = vsub.f32 %v3734, %v3757
  %v3763 = vsub.f32 %v3735, %v3759
  %3764 = vst [vmem:[%s5] sm:$0xff] %v3760
  %3765 = vst [vmem:[%s5 + $0x8] sm:$0xff] %v3761
  %3766 = vst [vmem:[%s5 + $0x10] sm:$0xff] %v3762
  %3767 = vst [vmem:[%s5 + $0x18] sm:$0xff] %v3763
  // Predicated region
  $region22: #{forward.1} parent=0 // pred_check
    _
  $region23: #{forward.1} parent=0 // pred_check_branch
    %3769 = sbr.rel (0) target = $region25
  $region24: #{forward.1} parent=0 // pred_region
    _
  $region25: #{forward.1} parent=0 // pred_fallthru
    _
  // Predicated region
  $region26: #{forward.1} parent=0 // pred_check
    _
  $region27: #{forward.1} parent=0 // pred_check_branch
    %3771 = sbr.rel (0) target = $region29
  $region28: #{forward.1} parent=0 // pred_region
    _
  $region29: #{forward.1} parent=0 // pred_fallthru
    _

</llo_original>
